<compile_context>
chip_gen: v5e
topology: v5e:2x2
jax: 0.10.0
libtpu: 0.0.40
codegen_flags: <defaults>
</compile_context>

<pallas_src>
import functools
import numpy as np
import jax
import jax.numpy as jnp
from jax.experimental import pallas as pl
from jax.experimental.pallas import tpu as pltpu

S_RATIO = 0.125
BN_EPS = 1e-5
SQ = int(256 * S_RATIO)       # 32 squeeze planes
SQP = 128                     # squeeze planes zero-padded to a full 128-lane vreg
TB = 8                        # batch tile -> 72 rows per grid step (multiple of 8)


# ---------------------------------------------------------------------------
# Fused kernel: BN2d(512) + Depthwise_Fire(512,32,128,128) + ReLU + Flatten +
#               BN1d(2304) + Linear(2304,128) -> feat ;
#               classifier: ReLU + BN1d(128) + Linear(128, num_classes)
# (All BN affines / the flatten permutation are pre-folded into the weights.)
# ---------------------------------------------------------------------------
def _vgg_tail_kernel(x_ref, wsq_ref, bsq_ref, we1_ref, be1_ref,
                     wdw_ref, bdw_ref, wpw_ref, bpw_ref,
                     wl1_ref, bl1_ref, wl2_ref, bl2_ref,
                     logits_ref, feat_ref):
    f32, bf16 = jnp.float32, jnp.bfloat16

    # x: (TB*9, 512); rows ordered position-major inside the tile (row = p*TB + b).
    x = x_ref[...].astype(bf16)

    # Fire.squeeze 1x1 conv 512->32 (BN2d(512) folded, output padded to 128) + ReLU.
    sq = jnp.dot(x, wsq_ref[...], preferred_element_type=f32) + bsq_ref[...]
    sq = jnp.maximum(sq, 0.0)                                   # (TB*9, 128) f32

    we1, be1 = we1_ref[...], be1_ref[...]
    wpw, bpw = wpw_ref[...], bpw_ref[...]
    wdw, bdw = wdw_ref[...], bdw_ref[...]

    # Sublane-aligned static views: one (TB, 128) slab per spatial position / tap row.
    sq_pos = [sq[q * TB:(q + 1) * TB, :] for q in range(9)]
    wdw_tap = [wdw[t:t + 1, :] for t in range(9)]

    acc = jnp.zeros((TB, 128), f32)          # Linear(2304,128) accumulator (= feat)
    for p in range(9):                       # 3x3 spatial positions, unrolled
        h, w = p // 3, p % 3

        # Fire.expand1x1: 1x1 conv 32->128 (+bias) + ReLU
        e1 = jnp.dot(sq_pos[p].astype(bf16), we1, preferred_element_type=f32) + be1
        e1 = jnp.maximum(e1, 0.0)

        # conv_dw depthwise 3x3 (pad=1, groups=32): only in-bounds taps contribute;
        # invalid taps are skipped at trace time (no masks, pure VPU FMAs).
        dw = jnp.zeros((TB, SQP), f32)
        for dy in (-1, 0, 1):
            for dx in (-1, 0, 1):
                hh, ww = h + dy, w + dx
                if 0 <= hh < 3 and 0 <= ww < 3:
                    t = (dy + 1) * 3 + (dx + 1)
                    dw = dw + sq_pos[hh * 3 + ww] * wdw_tap[t]
        dw = jnp.maximum(dw + bdw, 0.0)      # BN(32) shift (scale folded) + ReLU

        # conv_dw pointwise 1x1 32->128 (BN(128) folded) + ReLU
        e3 = jnp.dot(dw.astype(bf16), wpw, preferred_element_type=f32) + bpw
        e3 = jnp.maximum(e3, 0.0)

        # Flatten(NCHW) + Dropout + BN1d(2304) + Linear(2304,128): the permutation and
        # BN scale are folded into wl1's rows, so the head accumulates per position.
        acc = acc + jnp.dot(e1.astype(bf16), wl1_ref[256 * p:256 * p + 128, :],
                            preferred_element_type=f32)
        acc = acc + jnp.dot(e3.astype(bf16), wl1_ref[256 * p + 128:256 * (p + 1), :],
                            preferred_element_type=f32)

    feat = acc + bl1_ref[...]                # output of nn.Linear(2304, 128)
    feat_ref[...] = feat

    # classifier: ReLU -> Dropout -> BN1d(128) (folded) -> Linear(128, nc padded to 128)
    z = jnp.maximum(feat, 0.0).astype(bf16)
    logits_ref[...] = jnp.dot(z, wl2_ref[...], preferred_element_type=f32) + bl2_ref[...]


# ---------------------------------------------------------------------------
# Parameters (same layout/init as the PyTorch module) and host-side folding.
# ---------------------------------------------------------------------------
def _bn_fold(gamma, beta, mean, var, eps=BN_EPS):
    scale = gamma / jnp.sqrt(var + eps)
    shift = beta - mean * scale
    return scale, shift


def _bn_init(c):
    # matches _initialize_weights: weight=1, bias=0; default running stats 0/1
    return (jnp.ones((c,), jnp.float32), jnp.zeros((c,), jnp.float32),
            jnp.zeros((c,), jnp.float32), jnp.ones((c,), jnp.float32))


def _pad_to(a, shape):
    return jnp.pad(a, [(0, s - d) for d, s in zip(a.shape, shape)])


def init_params(key, num_classes=10):
    ks = jax.random.split(key, 6)

    def kaiming(k, shape, fan_out):   # kaiming_normal_, mode='fan_out', relu
        return jax.random.normal(k, shape, jnp.float32) * np.sqrt(2.0 / fan_out)

    p = {}
    p['bn0'] = _bn_init(512)                                      # BatchNorm2d(512)
    # Fire.squeeze: Conv2d(512, 32, 1), bias=True -> weight stored as (512, 32)
    p['w_sq'] = kaiming(ks[0], (512, SQ), fan_out=SQ * 1 * 1)
    p['b_sq'] = jnp.zeros((SQ,), jnp.float32)
    # Fire.expand1x1: Conv2d(32, 128, 1), bias=True -> (32, 128)
    p['w_e1'] = kaiming(ks[1], (SQ, 128), fan_out=128 * 1 * 1)
    p['b_e1'] = jnp.zeros((128,), jnp.float32)
    # conv_dw depthwise Conv2d(32,32,3,1,1,groups=32,bias=False): (32,1,3,3) -> (9,32)
    p['w_dw'] = kaiming(ks[2], (9, SQ), fan_out=SQ * 3 * 3)
    p['bn1'] = _bn_init(SQ)
    # conv_dw pointwise Conv2d(32,128,1,bias=False) -> (32, 128)
    p['w_pw'] = kaiming(ks[3], (SQ, 128), fan_out=128 * 1 * 1)
    p['bn2'] = _bn_init(128)
    # BatchNorm1d(256*3*3)
    p['bn3'] = _bn_init(256 * 9)
    # Linear(2304, 128): normal(0, 0.01), bias=0; stored transposed (2304, 128)
    p['w_l1'] = jax.random.normal(ks[4], (256 * 9, 128), jnp.float32) * 0.01
    p['b_l1'] = jnp.zeros((128,), jnp.float32)
    # classifier: BatchNorm1d(128), Linear(128, num_classes)
    p['bn4'] = _bn_init(128)
    p['w_l2'] = jax.random.normal(ks[5], (128, num_classes), jnp.float32) * 0.01
    p['b_l2'] = jnp.zeros((num_classes,), jnp.float32)
    return p


def _fold_params(p, num_classes):
    """Fold eval-mode BN affines + the NCHW-flatten permutation into the weights,
    zero-pad narrow dims to 128 lanes, cast MXU weights to bf16 (biases stay f32)."""
    bf16 = jnp.bfloat16
    nc_pad = max(128, ((num_classes + 127) // 128) * 128)
    s0, t0 = _bn_fold(*p['bn0'])
    s1, t1 = _bn_fold(*p['bn1'])
    s2, t2 = _bn_fold(*p['bn2'])
    s3, t3 = _bn_fold(*p['bn3'])
    s4, t4 = _bn_fold(*p['bn4'])

    # squeeze: BN2d(512) folded into rows; output channels padded 32 -> 128
    wsq = _pad_to(s0[:, None] * p['w_sq'], (512, SQP)).astype(bf16)
    bsq = _pad_to(p['b_sq'] + t0 @ p['w_sq'], (SQP,))[None, :]

    we1 = _pad_to(p['w_e1'], (SQP, 128)).astype(bf16)
    be1 = p['b_e1'][None, :]

    # depthwise taps: BN(32) scale folded per channel (kept f32 — used on the VPU)
    wdw = _pad_to(p['w_dw'] * s1[None, :], (9, SQP))
    bdw = _pad_to(t1, (SQP,))[None, :]

    # pointwise: BN(128) scale folded; input rows padded 32 -> 128
    wpw = _pad_to(p['w_pw'] * s2[None, :], (SQP, 128)).astype(bf16)
    bpw = t2[None, :]

    # Linear(2304,128): BN1d(2304) scale folded into rows, rows permuted from the
    # PyTorch NCHW-flatten order (c*9 + p) to the kernel-natural order (p*256 + c).
    wl1_scaled = s3[:, None] * p['w_l1']
    gidx = (jnp.arange(256)[None, :] * 9 + jnp.arange(9)[:, None]).reshape(-1)
    wl1 = wl1_scaled[gidx].astype(bf16)
    bl1 = (p['b_l1'] + t3 @ p['w_l1'])[None, :]

    # classifier Linear(128, nc): BN1d(128) folded; output dim zero-padded to 128
    wl2 = _pad_to(s4[:, None] * p['w_l2'], (128, nc_pad)).astype(bf16)
    bl2 = _pad_to(p['b_l2'] + t4 @ p['w_l2'], (nc_pad,))[None, :]

    return (wsq, bsq, we1, be1, wdw, bdw, wpw, bpw, wl1, bl1, wl2, bl2), nc_pad


def _const_spec(a):
    nd = a.ndim
    return pl.BlockSpec(a.shape, lambda i, _nd=nd: (0,) * _nd)


def vgg_forward(params, x_nchw, num_classes):
    """x_nchw: (B, 512, 3, 3) float32 (output of the external backbone).
    Returns (logits, feat) exactly as VGG.forward (inference semantics)."""
    B = x_nchw.shape[0]
    B_pad = ((B + TB - 1) // TB) * TB
    n_tiles = B_pad // TB

    # NCHW -> per-batch (9, 512) rows (p = h*3 + w), then position-major inside each
    # batch tile: global row = tile*72 + p*TB + b_local.
    xt = jnp.transpose(x_nchw, (0, 2, 3, 1)).reshape(B, 9, 512)
    xt = jnp.pad(xt, ((0, B_pad - B), (0, 0), (0, 0)))
    x2d = xt.reshape(n_tiles, TB, 9, 512).transpose(0, 2, 1, 3).reshape(B_pad * 9, 512)

    ops, nc_pad = _fold_params(params, num_classes)

    logits_pad, feat_pad = pl.pallas_call(
        _vgg_tail_kernel,
        out_shape=(jax.ShapeDtypeStruct((B_pad, nc_pad), jnp.float32),
                   jax.ShapeDtypeStruct((B_pad, 128), jnp.float32)),
        grid=(n_tiles,),
        in_specs=[pl.BlockSpec((TB * 9, 512), lambda i: (i, 0))]
                 + [_const_spec(w) for w in ops],
        out_specs=(pl.BlockSpec((TB, nc_pad), lambda i: (i, 0)),
                   pl.BlockSpec((TB, 128), lambda i: (i, 0))),
        compiler_params=pltpu.CompilerParams(
            dimension_semantics=("parallel",)),
    )(x2d, *ops)

    return logits_pad[:B, :num_classes], feat_pad[:B]


if __name__ == "__main__":
    key = jax.random.PRNGKey(0)
    kx, kp = jax.random.split(key)
    num_classes = 10
    B = 2
    # Input to the tail (external `features` backbone treated as identity):
    # NCHW (B, 512, 3, 3), as required by BatchNorm2d(512) / BatchNorm1d(2304).
    x = jax.random.normal(kx, (B, 512, 3, 3), jnp.float32)
    params = init_params(kp, num_classes)

    fwd = jax.jit(functools.partial(vgg_forward, num_classes=num_classes))
    logits, feat = fwd(params, x)
    jax.block_until_ready((logits, feat))

    assert logits.shape == (B, num_classes)
    assert feat.shape == (B, 128)
    assert bool(jnp.all(jnp.isfinite(logits))) and bool(jnp.all(jnp.isfinite(feat)))
    print("KERNEL_OK")
</pallas_src>

<mosaic_0001>
module attributes {stable_mosaic.version = 11 : i64} {
  func.func @_vgg_tail_kernel(%arg0: i32, %arg1: memref<72x512xf32, #tpu.memory_space<vmem>>, %arg2: memref<512x128xbf16, #tpu.memory_space<vmem>>, %arg3: memref<1x128xf32, #tpu.memory_space<vmem>>, %arg4: memref<128x128xbf16, #tpu.memory_space<vmem>>, %arg5: memref<1x128xf32, #tpu.memory_space<vmem>>, %arg6: memref<9x128xf32, #tpu.memory_space<vmem>>, %arg7: memref<1x128xf32, #tpu.memory_space<vmem>>, %arg8: memref<128x128xbf16, #tpu.memory_space<vmem>>, %arg9: memref<1x128xf32, #tpu.memory_space<vmem>>, %arg10: memref<2304x128xbf16, #tpu.memory_space<vmem>>, %arg11: memref<1x128xf32, #tpu.memory_space<vmem>>, %arg12: memref<128x128xbf16, #tpu.memory_space<vmem>>, %arg13: memref<1x128xf32, #tpu.memory_space<vmem>>, %arg14: memref<8x128xf32, #tpu.memory_space<vmem>>, %arg15: memref<8x128xf32, #tpu.memory_space<vmem>>) attributes {dimension_semantics = [#tpu.dimension_semantics<parallel>], iteration_bounds = array<i64: 1>, scalar_prefetch = 0 : i64, scratch_operands = 0 : i64, tpu.core_type = #tpu.core_type<tc>, window_params = [{transform_indices = @transform_0, window_bounds = array<i64: 72, 512>}, {pipeline_mode = #tpu.pipeline_mode<synchronous>, transform_indices = @transform_1, window_bounds = array<i64: 512, 128>}, {pipeline_mode = #tpu.pipeline_mode<synchronous>, transform_indices = @transform_2, window_bounds = array<i64: 1, 128>}, {pipeline_mode = #tpu.pipeline_mode<synchronous>, transform_indices = @transform_3, window_bounds = array<i64: 128, 128>}, {pipeline_mode = #tpu.pipeline_mode<synchronous>, transform_indices = @transform_4, window_bounds = array<i64: 1, 128>}, {pipeline_mode = #tpu.pipeline_mode<synchronous>, transform_indices = @transform_5, window_bounds = array<i64: 9, 128>}, {pipeline_mode = #tpu.pipeline_mode<synchronous>, transform_indices = @transform_6, window_bounds = array<i64: 1, 128>}, {pipeline_mode = #tpu.pipeline_mode<synchronous>, transform_indices = @transform_7, window_bounds = array<i64: 128, 128>}, {pipeline_mode = #tpu.pipeline_mode<synchronous>, transform_indices = @transform_8, window_bounds = array<i64: 1, 128>}, {pipeline_mode = #tpu.pipeline_mode<synchronous>, transform_indices = @transform_9, window_bounds = array<i64: 2304, 128>}, {pipeline_mode = #tpu.pipeline_mode<synchronous>, transform_indices = @transform_10, window_bounds = array<i64: 1, 128>}, {pipeline_mode = #tpu.pipeline_mode<synchronous>, transform_indices = @transform_11, window_bounds = array<i64: 128, 128>}, {pipeline_mode = #tpu.pipeline_mode<synchronous>, transform_indices = @transform_12, window_bounds = array<i64: 1, 128>}, {transform_indices = @transform_13, window_bounds = array<i64: 8, 128>}, {transform_indices = @transform_14, window_bounds = array<i64: 8, 128>}]} {
    %c0 = arith.constant 0 : index
    %c0_0 = arith.constant 0 : index
    %0 = vector.load %arg1[%c0, %c0_0] : memref<72x512xf32, #tpu.memory_space<vmem>>, vector<72x512xf32>
    %1 = arith.truncf %0 : vector<72x512xf32> to vector<72x512xbf16>
    %c0_1 = arith.constant 0 : index
    %c0_2 = arith.constant 0 : index
    %2 = vector.load %arg2[%c0_1, %c0_2] : memref<512x128xbf16, #tpu.memory_space<vmem>>, vector<512x128xbf16>
    %cst = arith.constant dense<0.000000e+00> : vector<72x128xf32>
    %3 = tpu.matmul %1, %2, %cst {dimension_numbers = #tpu.dot_dimension_numbers<[1], [0], [0], [1], [0, 0, 1, 1], [], []>} : vector<72x512xbf16>, vector<512x128xbf16>, vector<72x128xf32> -> vector<72x128xf32>
    %c0_3 = arith.constant 0 : index
    %c0_4 = arith.constant 0 : index
    %4 = vector.load %arg3[%c0_3, %c0_4] : memref<1x128xf32, #tpu.memory_space<vmem>>, vector<1x128xf32>
    %5 = vector.broadcast %4 : vector<1x128xf32> to vector<72x128xf32>
    %6 = arith.addf %3, %5 : vector<72x128xf32>
    %cst_5 = arith.constant 0.000000e+00 : f32
    %7 = vector.broadcast %cst_5 : f32 to vector<72x128xf32>
    %8 = arith.maximumf %6, %7 : vector<72x128xf32>
    %c0_6 = arith.constant 0 : index
    %c0_7 = arith.constant 0 : index
    %9 = vector.load %arg4[%c0_6, %c0_7] : memref<128x128xbf16, #tpu.memory_space<vmem>>, vector<128x128xbf16>
    %c0_8 = arith.constant 0 : index
    %c0_9 = arith.constant 0 : index
    %10 = vector.load %arg5[%c0_8, %c0_9] : memref<1x128xf32, #tpu.memory_space<vmem>>, vector<1x128xf32>
    %c0_10 = arith.constant 0 : index
    %c0_11 = arith.constant 0 : index
    %11 = vector.load %arg8[%c0_10, %c0_11] : memref<128x128xbf16, #tpu.memory_space<vmem>>, vector<128x128xbf16>
    %c0_12 = arith.constant 0 : index
    %c0_13 = arith.constant 0 : index
    %12 = vector.load %arg9[%c0_12, %c0_13] : memref<1x128xf32, #tpu.memory_space<vmem>>, vector<1x128xf32>
    %c0_14 = arith.constant 0 : index
    %c0_15 = arith.constant 0 : index
    %13 = vector.load %arg6[%c0_14, %c0_15] : memref<9x128xf32, #tpu.memory_space<vmem>>, vector<9x128xf32>
    %c0_16 = arith.constant 0 : index
    %c0_17 = arith.constant 0 : index
    %14 = vector.load %arg7[%c0_16, %c0_17] : memref<1x128xf32, #tpu.memory_space<vmem>>, vector<1x128xf32>
    %15 = vector.extract_strided_slice %8 {offsets = [0, 0], sizes = [8, 128], strides = [1, 1]} : vector<72x128xf32> to vector<8x128xf32>
    %16 = vector.extract_strided_slice %8 {offsets = [8, 0], sizes = [8, 128], strides = [1, 1]} : vector<72x128xf32> to vector<8x128xf32>
    %17 = vector.extract_strided_slice %8 {offsets = [16, 0], sizes = [8, 128], strides = [1, 1]} : vector<72x128xf32> to vector<8x128xf32>
    %18 = vector.extract_strided_slice %8 {offsets = [24, 0], sizes = [8, 128], strides = [1, 1]} : vector<72x128xf32> to vector<8x128xf32>
    %19 = vector.extract_strided_slice %8 {offsets = [32, 0], sizes = [8, 128], strides = [1, 1]} : vector<72x128xf32> to vector<8x128xf32>
    %20 = vector.extract_strided_slice %8 {offsets = [40, 0], sizes = [8, 128], strides = [1, 1]} : vector<72x128xf32> to vector<8x128xf32>
    %21 = vector.extract_strided_slice %8 {offsets = [48, 0], sizes = [8, 128], strides = [1, 1]} : vector<72x128xf32> to vector<8x128xf32>
    %22 = vector.extract_strided_slice %8 {offsets = [56, 0], sizes = [8, 128], strides = [1, 1]} : vector<72x128xf32> to vector<8x128xf32>
    %23 = vector.extract_strided_slice %8 {offsets = [64, 0], sizes = [8, 128], strides = [1, 1]} : vector<72x128xf32> to vector<8x128xf32>
    %24 = vector.extract_strided_slice %13 {offsets = [0, 0], sizes = [1, 128], strides = [1, 1]} : vector<9x128xf32> to vector<1x128xf32>
    %25 = vector.extract_strided_slice %13 {offsets = [1, 0], sizes = [1, 128], strides = [1, 1]} : vector<9x128xf32> to vector<1x128xf32>
    %26 = vector.extract_strided_slice %13 {offsets = [2, 0], sizes = [1, 128], strides = [1, 1]} : vector<9x128xf32> to vector<1x128xf32>
    %27 = vector.extract_strided_slice %13 {offsets = [3, 0], sizes = [1, 128], strides = [1, 1]} : vector<9x128xf32> to vector<1x128xf32>
    %28 = vector.extract_strided_slice %13 {offsets = [4, 0], sizes = [1, 128], strides = [1, 1]} : vector<9x128xf32> to vector<1x128xf32>
    %29 = vector.extract_strided_slice %13 {offsets = [5, 0], sizes = [1, 128], strides = [1, 1]} : vector<9x128xf32> to vector<1x128xf32>
    %30 = vector.extract_strided_slice %13 {offsets = [6, 0], sizes = [1, 128], strides = [1, 1]} : vector<9x128xf32> to vector<1x128xf32>
    %31 = vector.extract_strided_slice %13 {offsets = [7, 0], sizes = [1, 128], strides = [1, 1]} : vector<9x128xf32> to vector<1x128xf32>
    %32 = vector.extract_strided_slice %13 {offsets = [8, 0], sizes = [1, 128], strides = [1, 1]} : vector<9x128xf32> to vector<1x128xf32>
    %cst_18 = arith.constant 0.000000e+00 : f32
    %33 = vector.broadcast %cst_18 : f32 to vector<8x128xf32>
    %34 = arith.truncf %15 : vector<8x128xf32> to vector<8x128xbf16>
    %cst_19 = arith.constant dense<0.000000e+00> : vector<8x128xf32>
    %35 = tpu.matmul %34, %9, %cst_19 {dimension_numbers = #tpu.dot_dimension_numbers<[1], [0], [0], [1], [0, 0, 1, 1], [], []>} : vector<8x128xbf16>, vector<128x128xbf16>, vector<8x128xf32> -> vector<8x128xf32>
    %36 = vector.broadcast %10 : vector<1x128xf32> to vector<8x128xf32>
    %37 = arith.addf %35, %36 : vector<8x128xf32>
    %cst_20 = arith.constant 0.000000e+00 : f32
    %38 = vector.broadcast %cst_20 : f32 to vector<8x128xf32>
    %39 = arith.maximumf %37, %38 : vector<8x128xf32>
    %cst_21 = arith.constant 0.000000e+00 : f32
    %40 = vector.broadcast %cst_21 : f32 to vector<8x128xf32>
    %41 = vector.broadcast %28 : vector<1x128xf32> to vector<8x128xf32>
    %42 = arith.mulf %15, %41 : vector<8x128xf32>
    %43 = arith.addf %40, %42 : vector<8x128xf32>
    %44 = vector.broadcast %29 : vector<1x128xf32> to vector<8x128xf32>
    %45 = arith.mulf %16, %44 : vector<8x128xf32>
    %46 = arith.addf %43, %45 : vector<8x128xf32>
    %47 = vector.broadcast %31 : vector<1x128xf32> to vector<8x128xf32>
    %48 = arith.mulf %18, %47 : vector<8x128xf32>
    %49 = arith.addf %46, %48 : vector<8x128xf32>
    %50 = vector.broadcast %32 : vector<1x128xf32> to vector<8x128xf32>
    %51 = arith.mulf %19, %50 : vector<8x128xf32>
    %52 = arith.addf %49, %51 : vector<8x128xf32>
    %53 = vector.broadcast %14 : vector<1x128xf32> to vector<8x128xf32>
    %54 = arith.addf %52, %53 : vector<8x128xf32>
    %cst_22 = arith.constant 0.000000e+00 : f32
    %55 = vector.broadcast %cst_22 : f32 to vector<8x128xf32>
    %56 = arith.maximumf %54, %55 : vector<8x128xf32>
    %57 = arith.truncf %56 : vector<8x128xf32> to vector<8x128xbf16>
    %cst_23 = arith.constant dense<0.000000e+00> : vector<8x128xf32>
    %58 = tpu.matmul %57, %11, %cst_23 {dimension_numbers = #tpu.dot_dimension_numbers<[1], [0], [0], [1], [0, 0, 1, 1], [], []>} : vector<8x128xbf16>, vector<128x128xbf16>, vector<8x128xf32> -> vector<8x128xf32>
    %59 = vector.broadcast %12 : vector<1x128xf32> to vector<8x128xf32>
    %60 = arith.addf %58, %59 : vector<8x128xf32>
    %cst_24 = arith.constant 0.000000e+00 : f32
    %61 = vector.broadcast %cst_24 : f32 to vector<8x128xf32>
    %62 = arith.maximumf %60, %61 : vector<8x128xf32>
    %63 = arith.truncf %39 : vector<8x128xf32> to vector<8x128xbf16>
    %c0_25 = arith.constant 0 : index
    %c0_26 = arith.constant 0 : index
    %64 = vector.load %arg10[%c0_25, %c0_26] : memref<2304x128xbf16, #tpu.memory_space<vmem>>, vector<128x128xbf16>
    %cst_27 = arith.constant dense<0.000000e+00> : vector<8x128xf32>
    %65 = tpu.matmul %63, %64, %cst_27 {dimension_numbers = #tpu.dot_dimension_numbers<[1], [0], [0], [1], [0, 0, 1, 1], [], []>} : vector<8x128xbf16>, vector<128x128xbf16>, vector<8x128xf32> -> vector<8x128xf32>
    %66 = arith.addf %33, %65 : vector<8x128xf32>
    %67 = arith.truncf %62 : vector<8x128xf32> to vector<8x128xbf16>
    %c128 = arith.constant 128 : index
    %c0_28 = arith.constant 0 : index
    %68 = vector.load %arg10[%c128, %c0_28] : memref<2304x128xbf16, #tpu.memory_space<vmem>>, vector<128x128xbf16>
    %cst_29 = arith.constant dense<0.000000e+00> : vector<8x128xf32>
    %69 = tpu.matmul %67, %68, %cst_29 {dimension_numbers = #tpu.dot_dimension_numbers<[1], [0], [0], [1], [0, 0, 1, 1], [], []>} : vector<8x128xbf16>, vector<128x128xbf16>, vector<8x128xf32> -> vector<8x128xf32>
    %70 = arith.addf %66, %69 : vector<8x128xf32>
    %71 = arith.truncf %16 : vector<8x128xf32> to vector<8x128xbf16>
    %cst_30 = arith.constant dense<0.000000e+00> : vector<8x128xf32>
    %72 = tpu.matmul %71, %9, %cst_30 {dimension_numbers = #tpu.dot_dimension_numbers<[1], [0], [0], [1], [0, 0, 1, 1], [], []>} : vector<8x128xbf16>, vector<128x128xbf16>, vector<8x128xf32> -> vector<8x128xf32>
    %73 = vector.broadcast %10 : vector<1x128xf32> to vector<8x128xf32>
    %74 = arith.addf %72, %73 : vector<8x128xf32>
    %cst_31 = arith.constant 0.000000e+00 : f32
    %75 = vector.broadcast %cst_31 : f32 to vector<8x128xf32>
    %76 = arith.maximumf %74, %75 : vector<8x128xf32>
    %cst_32 = arith.constant 0.000000e+00 : f32
    %77 = vector.broadcast %cst_32 : f32 to vector<8x128xf32>
    %78 = vector.broadcast %27 : vector<1x128xf32> to vector<8x128xf32>
    %79 = arith.mulf %15, %78 : vector<8x128xf32>
    %80 = arith.addf %77, %79 : vector<8x128xf32>
    %81 = vector.broadcast %28 : vector<1x128xf32> to vector<8x128xf32>
    %82 = arith.mulf %16, %81 : vector<8x128xf32>
    %83 = arith.addf %80, %82 : vector<8x128xf32>
    %84 = vector.broadcast %29 : vector<1x128xf32> to vector<8x128xf32>
    %85 = arith.mulf %17, %84 : vector<8x128xf32>
    %86 = arith.addf %83, %85 : vector<8x128xf32>
    %87 = vector.broadcast %30 : vector<1x128xf32> to vector<8x128xf32>
    %88 = arith.mulf %18, %87 : vector<8x128xf32>
    %89 = arith.addf %86, %88 : vector<8x128xf32>
    %90 = vector.broadcast %31 : vector<1x128xf32> to vector<8x128xf32>
    %91 = arith.mulf %19, %90 : vector<8x128xf32>
    %92 = arith.addf %89, %91 : vector<8x128xf32>
    %93 = vector.broadcast %32 : vector<1x128xf32> to vector<8x128xf32>
    %94 = arith.mulf %20, %93 : vector<8x128xf32>
    %95 = arith.addf %92, %94 : vector<8x128xf32>
    %96 = vector.broadcast %14 : vector<1x128xf32> to vector<8x128xf32>
    %97 = arith.addf %95, %96 : vector<8x128xf32>
    %cst_33 = arith.constant 0.000000e+00 : f32
    %98 = vector.broadcast %cst_33 : f32 to vector<8x128xf32>
    %99 = arith.maximumf %97, %98 : vector<8x128xf32>
    %100 = arith.truncf %99 : vector<8x128xf32> to vector<8x128xbf16>
    %cst_34 = arith.constant dense<0.000000e+00> : vector<8x128xf32>
    %101 = tpu.matmul %100, %11, %cst_34 {dimension_numbers = #tpu.dot_dimension_numbers<[1], [0], [0], [1], [0, 0, 1, 1], [], []>} : vector<8x128xbf16>, vector<128x128xbf16>, vector<8x128xf32> -> vector<8x128xf32>
    %102 = vector.broadcast %12 : vector<1x128xf32> to vector<8x128xf32>
    %103 = arith.addf %101, %102 : vector<8x128xf32>
    %cst_35 = arith.constant 0.000000e+00 : f32
    %104 = vector.broadcast %cst_35 : f32 to vector<8x128xf32>
    %105 = arith.maximumf %103, %104 : vector<8x128xf32>
    %106 = arith.truncf %76 : vector<8x128xf32> to vector<8x128xbf16>
    %c256 = arith.constant 256 : index
    %c0_36 = arith.constant 0 : index
    %107 = vector.load %arg10[%c256, %c0_36] : memref<2304x128xbf16, #tpu.memory_space<vmem>>, vector<128x128xbf16>
    %cst_37 = arith.constant dense<0.000000e+00> : vector<8x128xf32>
    %108 = tpu.matmul %106, %107, %cst_37 {dimension_numbers = #tpu.dot_dimension_numbers<[1], [0], [0], [1], [0, 0, 1, 1], [], []>} : vector<8x128xbf16>, vector<128x128xbf16>, vector<8x128xf32> -> vector<8x128xf32>
    %109 = arith.addf %70, %108 : vector<8x128xf32>
    %110 = arith.truncf %105 : vector<8x128xf32> to vector<8x128xbf16>
    %c384 = arith.constant 384 : index
    %c0_38 = arith.constant 0 : index
    %111 = vector.load %arg10[%c384, %c0_38] : memref<2304x128xbf16, #tpu.memory_space<vmem>>, vector<128x128xbf16>
    %cst_39 = arith.constant dense<0.000000e+00> : vector<8x128xf32>
    %112 = tpu.matmul %110, %111, %cst_39 {dimension_numbers = #tpu.dot_dimension_numbers<[1], [0], [0], [1], [0, 0, 1, 1], [], []>} : vector<8x128xbf16>, vector<128x128xbf16>, vector<8x128xf32> -> vector<8x128xf32>
    %113 = arith.addf %109, %112 : vector<8x128xf32>
    %114 = arith.truncf %17 : vector<8x128xf32> to vector<8x128xbf16>
    %cst_40 = arith.constant dense<0.000000e+00> : vector<8x128xf32>
    %115 = tpu.matmul %114, %9, %cst_40 {dimension_numbers = #tpu.dot_dimension_numbers<[1], [0], [0], [1], [0, 0, 1, 1], [], []>} : vector<8x128xbf16>, vector<128x128xbf16>, vector<8x128xf32> -> vector<8x128xf32>
    %116 = vector.broadcast %10 : vector<1x128xf32> to vector<8x128xf32>
    %117 = arith.addf %115, %116 : vector<8x128xf32>
    %cst_41 = arith.constant 0.000000e+00 : f32
    %118 = vector.broadcast %cst_41 : f32 to vector<8x128xf32>
    %119 = arith.maximumf %117, %118 : vector<8x128xf32>
    %cst_42 = arith.constant 0.000000e+00 : f32
    %120 = vector.broadcast %cst_42 : f32 to vector<8x128xf32>
    %121 = vector.broadcast %27 : vector<1x128xf32> to vector<8x128xf32>
    %122 = arith.mulf %16, %121 : vector<8x128xf32>
    %123 = arith.addf %120, %122 : vector<8x128xf32>
    %124 = vector.broadcast %28 : vector<1x128xf32> to vector<8x128xf32>
    %125 = arith.mulf %17, %124 : vector<8x128xf32>
    %126 = arith.addf %123, %125 : vector<8x128xf32>
    %127 = vector.broadcast %30 : vector<1x128xf32> to vector<8x128xf32>
    %128 = arith.mulf %19, %127 : vector<8x128xf32>
    %129 = arith.addf %126, %128 : vector<8x128xf32>
    %130 = vector.broadcast %31 : vector<1x128xf32> to vector<8x128xf32>
    %131 = arith.mulf %20, %130 : vector<8x128xf32>
    %132 = arith.addf %129, %131 : vector<8x128xf32>
    %133 = vector.broadcast %14 : vector<1x128xf32> to vector<8x128xf32>
    %134 = arith.addf %132, %133 : vector<8x128xf32>
    %cst_43 = arith.constant 0.000000e+00 : f32
    %135 = vector.broadcast %cst_43 : f32 to vector<8x128xf32>
    %136 = arith.maximumf %134, %135 : vector<8x128xf32>
    %137 = arith.truncf %136 : vector<8x128xf32> to vector<8x128xbf16>
    %cst_44 = arith.constant dense<0.000000e+00> : vector<8x128xf32>
    %138 = tpu.matmul %137, %11, %cst_44 {dimension_numbers = #tpu.dot_dimension_numbers<[1], [0], [0], [1], [0, 0, 1, 1], [], []>} : vector<8x128xbf16>, vector<128x128xbf16>, vector<8x128xf32> -> vector<8x128xf32>
    %139 = vector.broadcast %12 : vector<1x128xf32> to vector<8x128xf32>
    %140 = arith.addf %138, %139 : vector<8x128xf32>
    %cst_45 = arith.constant 0.000000e+00 : f32
    %141 = vector.broadcast %cst_45 : f32 to vector<8x128xf32>
    %142 = arith.maximumf %140, %141 : vector<8x128xf32>
    %143 = arith.truncf %119 : vector<8x128xf32> to vector<8x128xbf16>
    %c512 = arith.constant 512 : index
    %c0_46 = arith.constant 0 : index
    %144 = vector.load %arg10[%c512, %c0_46] : memref<2304x128xbf16, #tpu.memory_space<vmem>>, vector<128x128xbf16>
    %cst_47 = arith.constant dense<0.000000e+00> : vector<8x128xf32>
    %145 = tpu.matmul %143, %144, %cst_47 {dimension_numbers = #tpu.dot_dimension_numbers<[1], [0], [0], [1], [0, 0, 1, 1], [], []>} : vector<8x128xbf16>, vector<128x128xbf16>, vector<8x128xf32> -> vector<8x128xf32>
    %146 = arith.addf %113, %145 : vector<8x128xf32>
    %147 = arith.truncf %142 : vector<8x128xf32> to vector<8x128xbf16>
    %c640 = arith.constant 640 : index
    %c0_48 = arith.constant 0 : index
    %148 = vector.load %arg10[%c640, %c0_48] : memref<2304x128xbf16, #tpu.memory_space<vmem>>, vector<128x128xbf16>
    %cst_49 = arith.constant dense<0.000000e+00> : vector<8x128xf32>
    %149 = tpu.matmul %147, %148, %cst_49 {dimension_numbers = #tpu.dot_dimension_numbers<[1], [0], [0], [1], [0, 0, 1, 1], [], []>} : vector<8x128xbf16>, vector<128x128xbf16>, vector<8x128xf32> -> vector<8x128xf32>
    %150 = arith.addf %146, %149 : vector<8x128xf32>
    %151 = arith.truncf %18 : vector<8x128xf32> to vector<8x128xbf16>
    %cst_50 = arith.constant dense<0.000000e+00> : vector<8x128xf32>
    %152 = tpu.matmul %151, %9, %cst_50 {dimension_numbers = #tpu.dot_dimension_numbers<[1], [0], [0], [1], [0, 0, 1, 1], [], []>} : vector<8x128xbf16>, vector<128x128xbf16>, vector<8x128xf32> -> vector<8x128xf32>
    %153 = vector.broadcast %10 : vector<1x128xf32> to vector<8x128xf32>
    %154 = arith.addf %152, %153 : vector<8x128xf32>
    %cst_51 = arith.constant 0.000000e+00 : f32
    %155 = vector.broadcast %cst_51 : f32 to vector<8x128xf32>
    %156 = arith.maximumf %154, %155 : vector<8x128xf32>
    %cst_52 = arith.constant 0.000000e+00 : f32
    %157 = vector.broadcast %cst_52 : f32 to vector<8x128xf32>
    %158 = vector.broadcast %25 : vector<1x128xf32> to vector<8x128xf32>
    %159 = arith.mulf %15, %158 : vector<8x128xf32>
    %160 = arith.addf %157, %159 : vector<8x128xf32>
    %161 = vector.broadcast %26 : vector<1x128xf32> to vector<8x128xf32>
    %162 = arith.mulf %16, %161 : vector<8x128xf32>
    %163 = arith.addf %160, %162 : vector<8x128xf32>
    %164 = vector.broadcast %28 : vector<1x128xf32> to vector<8x128xf32>
    %165 = arith.mulf %18, %164 : vector<8x128xf32>
    %166 = arith.addf %163, %165 : vector<8x128xf32>
    %167 = vector.broadcast %29 : vector<1x128xf32> to vector<8x128xf32>
    %168 = arith.mulf %19, %167 : vector<8x128xf32>
    %169 = arith.addf %166, %168 : vector<8x128xf32>
    %170 = vector.broadcast %31 : vector<1x128xf32> to vector<8x128xf32>
    %171 = arith.mulf %21, %170 : vector<8x128xf32>
    %172 = arith.addf %169, %171 : vector<8x128xf32>
    %173 = vector.broadcast %32 : vector<1x128xf32> to vector<8x128xf32>
    %174 = arith.mulf %22, %173 : vector<8x128xf32>
    %175 = arith.addf %172, %174 : vector<8x128xf32>
    %176 = vector.broadcast %14 : vector<1x128xf32> to vector<8x128xf32>
    %177 = arith.addf %175, %176 : vector<8x128xf32>
    %cst_53 = arith.constant 0.000000e+00 : f32
    %178 = vector.broadcast %cst_53 : f32 to vector<8x128xf32>
    %179 = arith.maximumf %177, %178 : vector<8x128xf32>
    %180 = arith.truncf %179 : vector<8x128xf32> to vector<8x128xbf16>
    %cst_54 = arith.constant dense<0.000000e+00> : vector<8x128xf32>
    %181 = tpu.matmul %180, %11, %cst_54 {dimension_numbers = #tpu.dot_dimension_numbers<[1], [0], [0], [1], [0, 0, 1, 1], [], []>} : vector<8x128xbf16>, vector<128x128xbf16>, vector<8x128xf32> -> vector<8x128xf32>
    %182 = vector.broadcast %12 : vector<1x128xf32> to vector<8x128xf32>
    %183 = arith.addf %181, %182 : vector<8x128xf32>
    %cst_55 = arith.constant 0.000000e+00 : f32
    %184 = vector.broadcast %cst_55 : f32 to vector<8x128xf32>
    %185 = arith.maximumf %183, %184 : vector<8x128xf32>
    %186 = arith.truncf %156 : vector<8x128xf32> to vector<8x128xbf16>
    %c768 = arith.constant 768 : index
    %c0_56 = arith.constant 0 : index
    %187 = vector.load %arg10[%c768, %c0_56] : memref<2304x128xbf16, #tpu.memory_space<vmem>>, vector<128x128xbf16>
    %cst_57 = arith.constant dense<0.000000e+00> : vector<8x128xf32>
    %188 = tpu.matmul %186, %187, %cst_57 {dimension_numbers = #tpu.dot_dimension_numbers<[1], [0], [0], [1], [0, 0, 1, 1], [], []>} : vector<8x128xbf16>, vector<128x128xbf16>, vector<8x128xf32> -> vector<8x128xf32>
    %189 = arith.addf %150, %188 : vector<8x128xf32>
    %190 = arith.truncf %185 : vector<8x128xf32> to vector<8x128xbf16>
    %c896 = arith.constant 896 : index
    %c0_58 = arith.constant 0 : index
    %191 = vector.load %arg10[%c896, %c0_58] : memref<2304x128xbf16, #tpu.memory_space<vmem>>, vector<128x128xbf16>
    %cst_59 = arith.constant dense<0.000000e+00> : vector<8x128xf32>
    %192 = tpu.matmul %190, %191, %cst_59 {dimension_numbers = #tpu.dot_dimension_numbers<[1], [0], [0], [1], [0, 0, 1, 1], [], []>} : vector<8x128xbf16>, vector<128x128xbf16>, vector<8x128xf32> -> vector<8x128xf32>
    %193 = arith.addf %189, %192 : vector<8x128xf32>
    %194 = arith.truncf %19 : vector<8x128xf32> to vector<8x128xbf16>
    %cst_60 = arith.constant dense<0.000000e+00> : vector<8x128xf32>
    %195 = tpu.matmul %194, %9, %cst_60 {dimension_numbers = #tpu.dot_dimension_numbers<[1], [0], [0], [1], [0, 0, 1, 1], [], []>} : vector<8x128xbf16>, vector<128x128xbf16>, vector<8x128xf32> -> vector<8x128xf32>
    %196 = vector.broadcast %10 : vector<1x128xf32> to vector<8x128xf32>
    %197 = arith.addf %195, %196 : vector<8x128xf32>
    %cst_61 = arith.constant 0.000000e+00 : f32
    %198 = vector.broadcast %cst_61 : f32 to vector<8x128xf32>
    %199 = arith.maximumf %197, %198 : vector<8x128xf32>
    %cst_62 = arith.constant 0.000000e+00 : f32
    %200 = vector.broadcast %cst_62 : f32 to vector<8x128xf32>
    %201 = vector.broadcast %24 : vector<1x128xf32> to vector<8x128xf32>
    %202 = arith.mulf %15, %201 : vector<8x128xf32>
    %203 = arith.addf %200, %202 : vector<8x128xf32>
    %204 = vector.broadcast %25 : vector<1x128xf32> to vector<8x128xf32>
    %205 = arith.mulf %16, %204 : vector<8x128xf32>
    %206 = arith.addf %203, %205 : vector<8x128xf32>
    %207 = vector.broadcast %26 : vector<1x128xf32> to vector<8x128xf32>
    %208 = arith.mulf %17, %207 : vector<8x128xf32>
    %209 = arith.addf %206, %208 : vector<8x128xf32>
    %210 = vector.broadcast %27 : vector<1x128xf32> to vector<8x128xf32>
    %211 = arith.mulf %18, %210 : vector<8x128xf32>
    %212 = arith.addf %209, %211 : vector<8x128xf32>
    %213 = vector.broadcast %28 : vector<1x128xf32> to vector<8x128xf32>
    %214 = arith.mulf %19, %213 : vector<8x128xf32>
    %215 = arith.addf %212, %214 : vector<8x128xf32>
    %216 = vector.broadcast %29 : vector<1x128xf32> to vector<8x128xf32>
    %217 = arith.mulf %20, %216 : vector<8x128xf32>
    %218 = arith.addf %215, %217 : vector<8x128xf32>
    %219 = vector.broadcast %30 : vector<1x128xf32> to vector<8x128xf32>
    %220 = arith.mulf %21, %219 : vector<8x128xf32>
    %221 = arith.addf %218, %220 : vector<8x128xf32>
    %222 = vector.broadcast %31 : vector<1x128xf32> to vector<8x128xf32>
    %223 = arith.mulf %22, %222 : vector<8x128xf32>
    %224 = arith.addf %221, %223 : vector<8x128xf32>
    %225 = vector.broadcast %32 : vector<1x128xf32> to vector<8x128xf32>
    %226 = arith.mulf %23, %225 : vector<8x128xf32>
    %227 = arith.addf %224, %226 : vector<8x128xf32>
    %228 = vector.broadcast %14 : vector<1x128xf32> to vector<8x128xf32>
    %229 = arith.addf %227, %228 : vector<8x128xf32>
    %cst_63 = arith.constant 0.000000e+00 : f32
    %230 = vector.broadcast %cst_63 : f32 to vector<8x128xf32>
    %231 = arith.maximumf %229, %230 : vector<8x128xf32>
    %232 = arith.truncf %231 : vector<8x128xf32> to vector<8x128xbf16>
    %cst_64 = arith.constant dense<0.000000e+00> : vector<8x128xf32>
    %233 = tpu.matmul %232, %11, %cst_64 {dimension_numbers = #tpu.dot_dimension_numbers<[1], [0], [0], [1], [0, 0, 1, 1], [], []>} : vector<8x128xbf16>, vector<128x128xbf16>, vector<8x128xf32> -> vector<8x128xf32>
    %234 = vector.broadcast %12 : vector<1x128xf32> to vector<8x128xf32>
    %235 = arith.addf %233, %234 : vector<8x128xf32>
    %cst_65 = arith.constant 0.000000e+00 : f32
    %236 = vector.broadcast %cst_65 : f32 to vector<8x128xf32>
    %237 = arith.maximumf %235, %236 : vector<8x128xf32>
    %238 = arith.truncf %199 : vector<8x128xf32> to vector<8x128xbf16>
    %c1024 = arith.constant 1024 : index
    %c0_66 = arith.constant 0 : index
    %239 = vector.load %arg10[%c1024, %c0_66] : memref<2304x128xbf16, #tpu.memory_space<vmem>>, vector<128x128xbf16>
    %cst_67 = arith.constant dense<0.000000e+00> : vector<8x128xf32>
    %240 = tpu.matmul %238, %239, %cst_67 {dimension_numbers = #tpu.dot_dimension_numbers<[1], [0], [0], [1], [0, 0, 1, 1], [], []>} : vector<8x128xbf16>, vector<128x128xbf16>, vector<8x128xf32> -> vector<8x128xf32>
    %241 = arith.addf %193, %240 : vector<8x128xf32>
    %242 = arith.truncf %237 : vector<8x128xf32> to vector<8x128xbf16>
    %c1152 = arith.constant 1152 : index
    %c0_68 = arith.constant 0 : index
    %243 = vector.load %arg10[%c1152, %c0_68] : memref<2304x128xbf16, #tpu.memory_space<vmem>>, vector<128x128xbf16>
    %cst_69 = arith.constant dense<0.000000e+00> : vector<8x128xf32>
    %244 = tpu.matmul %242, %243, %cst_69 {dimension_numbers = #tpu.dot_dimension_numbers<[1], [0], [0], [1], [0, 0, 1, 1], [], []>} : vector<8x128xbf16>, vector<128x128xbf16>, vector<8x128xf32> -> vector<8x128xf32>
    %245 = arith.addf %241, %244 : vector<8x128xf32>
    %246 = arith.truncf %20 : vector<8x128xf32> to vector<8x128xbf16>
    %cst_70 = arith.constant dense<0.000000e+00> : vector<8x128xf32>
    %247 = tpu.matmul %246, %9, %cst_70 {dimension_numbers = #tpu.dot_dimension_numbers<[1], [0], [0], [1], [0, 0, 1, 1], [], []>} : vector<8x128xbf16>, vector<128x128xbf16>, vector<8x128xf32> -> vector<8x128xf32>
    %248 = vector.broadcast %10 : vector<1x128xf32> to vector<8x128xf32>
    %249 = arith.addf %247, %248 : vector<8x128xf32>
    %cst_71 = arith.constant 0.000000e+00 : f32
    %250 = vector.broadcast %cst_71 : f32 to vector<8x128xf32>
    %251 = arith.maximumf %249, %250 : vector<8x128xf32>
    %cst_72 = arith.constant 0.000000e+00 : f32
    %252 = vector.broadcast %cst_72 : f32 to vector<8x128xf32>
    %253 = vector.broadcast %24 : vector<1x128xf32> to vector<8x128xf32>
    %254 = arith.mulf %16, %253 : vector<8x128xf32>
    %255 = arith.addf %252, %254 : vector<8x128xf32>
    %256 = vector.broadcast %25 : vector<1x128xf32> to vector<8x128xf32>
    %257 = arith.mulf %17, %256 : vector<8x128xf32>
    %258 = arith.addf %255, %257 : vector<8x128xf32>
    %259 = vector.broadcast %27 : vector<1x128xf32> to vector<8x128xf32>
    %260 = arith.mulf %19, %259 : vector<8x128xf32>
    %261 = arith.addf %258, %260 : vector<8x128xf32>
    %262 = vector.broadcast %28 : vector<1x128xf32> to vector<8x128xf32>
    %263 = arith.mulf %20, %262 : vector<8x128xf32>
    %264 = arith.addf %261, %263 : vector<8x128xf32>
    %265 = vector.broadcast %30 : vector<1x128xf32> to vector<8x128xf32>
    %266 = arith.mulf %22, %265 : vector<8x128xf32>
    %267 = arith.addf %264, %266 : vector<8x128xf32>
    %268 = vector.broadcast %31 : vector<1x128xf32> to vector<8x128xf32>
    %269 = arith.mulf %23, %268 : vector<8x128xf32>
    %270 = arith.addf %267, %269 : vector<8x128xf32>
    %271 = vector.broadcast %14 : vector<1x128xf32> to vector<8x128xf32>
    %272 = arith.addf %270, %271 : vector<8x128xf32>
    %cst_73 = arith.constant 0.000000e+00 : f32
    %273 = vector.broadcast %cst_73 : f32 to vector<8x128xf32>
    %274 = arith.maximumf %272, %273 : vector<8x128xf32>
    %275 = arith.truncf %274 : vector<8x128xf32> to vector<8x128xbf16>
    %cst_74 = arith.constant dense<0.000000e+00> : vector<8x128xf32>
    %276 = tpu.matmul %275, %11, %cst_74 {dimension_numbers = #tpu.dot_dimension_numbers<[1], [0], [0], [1], [0, 0, 1, 1], [], []>} : vector<8x128xbf16>, vector<128x128xbf16>, vector<8x128xf32> -> vector<8x128xf32>
    %277 = vector.broadcast %12 : vector<1x128xf32> to vector<8x128xf32>
    %278 = arith.addf %276, %277 : vector<8x128xf32>
    %cst_75 = arith.constant 0.000000e+00 : f32
    %279 = vector.broadcast %cst_75 : f32 to vector<8x128xf32>
    %280 = arith.maximumf %278, %279 : vector<8x128xf32>
    %281 = arith.truncf %251 : vector<8x128xf32> to vector<8x128xbf16>
    %c1280 = arith.constant 1280 : index
    %c0_76 = arith.constant 0 : index
    %282 = vector.load %arg10[%c1280, %c0_76] : memref<2304x128xbf16, #tpu.memory_space<vmem>>, vector<128x128xbf16>
    %cst_77 = arith.constant dense<0.000000e+00> : vector<8x128xf32>
    %283 = tpu.matmul %281, %282, %cst_77 {dimension_numbers = #tpu.dot_dimension_numbers<[1], [0], [0], [1], [0, 0, 1, 1], [], []>} : vector<8x128xbf16>, vector<128x128xbf16>, vector<8x128xf32> -> vector<8x128xf32>
    %284 = arith.addf %245, %283 : vector<8x128xf32>
    %285 = arith.truncf %280 : vector<8x128xf32> to vector<8x128xbf16>
    %c1408 = arith.constant 1408 : index
    %c0_78 = arith.constant 0 : index
    %286 = vector.load %arg10[%c1408, %c0_78] : memref<2304x128xbf16, #tpu.memory_space<vmem>>, vector<128x128xbf16>
    %cst_79 = arith.constant dense<0.000000e+00> : vector<8x128xf32>
    %287 = tpu.matmul %285, %286, %cst_79 {dimension_numbers = #tpu.dot_dimension_numbers<[1], [0], [0], [1], [0, 0, 1, 1], [], []>} : vector<8x128xbf16>, vector<128x128xbf16>, vector<8x128xf32> -> vector<8x128xf32>
    %288 = arith.addf %284, %287 : vector<8x128xf32>
    %289 = arith.truncf %21 : vector<8x128xf32> to vector<8x128xbf16>
    %cst_80 = arith.constant dense<0.000000e+00> : vector<8x128xf32>
    %290 = tpu.matmul %289, %9, %cst_80 {dimension_numbers = #tpu.dot_dimension_numbers<[1], [0], [0], [1], [0, 0, 1, 1], [], []>} : vector<8x128xbf16>, vector<128x128xbf16>, vector<8x128xf32> -> vector<8x128xf32>
    %291 = vector.broadcast %10 : vector<1x128xf32> to vector<8x128xf32>
    %292 = arith.addf %290, %291 : vector<8x128xf32>
    %cst_81 = arith.constant 0.000000e+00 : f32
    %293 = vector.broadcast %cst_81 : f32 to vector<8x128xf32>
    %294 = arith.maximumf %292, %293 : vector<8x128xf32>
    %cst_82 = arith.constant 0.000000e+00 : f32
    %295 = vector.broadcast %cst_82 : f32 to vector<8x128xf32>
    %296 = vector.broadcast %25 : vector<1x128xf32> to vector<8x128xf32>
    %297 = arith.mulf %18, %296 : vector<8x128xf32>
    %298 = arith.addf %295, %297 : vector<8x128xf32>
    %299 = vector.broadcast %26 : vector<1x128xf32> to vector<8x128xf32>
    %300 = arith.mulf %19, %299 : vector<8x128xf32>
    %301 = arith.addf %298, %300 : vector<8x128xf32>
    %302 = vector.broadcast %28 : vector<1x128xf32> to vector<8x128xf32>
    %303 = arith.mulf %21, %302 : vector<8x128xf32>
    %304 = arith.addf %301, %303 : vector<8x128xf32>
    %305 = vector.broadcast %29 : vector<1x128xf32> to vector<8x128xf32>
    %306 = arith.mulf %22, %305 : vector<8x128xf32>
    %307 = arith.addf %304, %306 : vector<8x128xf32>
    %308 = vector.broadcast %14 : vector<1x128xf32> to vector<8x128xf32>
    %309 = arith.addf %307, %308 : vector<8x128xf32>
    %cst_83 = arith.constant 0.000000e+00 : f32
    %310 = vector.broadcast %cst_83 : f32 to vector<8x128xf32>
    %311 = arith.maximumf %309, %310 : vector<8x128xf32>
    %312 = arith.truncf %311 : vector<8x128xf32> to vector<8x128xbf16>
    %cst_84 = arith.constant dense<0.000000e+00> : vector<8x128xf32>
    %313 = tpu.matmul %312, %11, %cst_84 {dimension_numbers = #tpu.dot_dimension_numbers<[1], [0], [0], [1], [0, 0, 1, 1], [], []>} : vector<8x128xbf16>, vector<128x128xbf16>, vector<8x128xf32> -> vector<8x128xf32>
    %314 = vector.broadcast %12 : vector<1x128xf32> to vector<8x128xf32>
    %315 = arith.addf %313, %314 : vector<8x128xf32>
    %cst_85 = arith.constant 0.000000e+00 : f32
    %316 = vector.broadcast %cst_85 : f32 to vector<8x128xf32>
    %317 = arith.maximumf %315, %316 : vector<8x128xf32>
    %318 = arith.truncf %294 : vector<8x128xf32> to vector<8x128xbf16>
    %c1536 = arith.constant 1536 : index
    %c0_86 = arith.constant 0 : index
    %319 = vector.load %arg10[%c1536, %c0_86] : memref<2304x128xbf16, #tpu.memory_space<vmem>>, vector<128x128xbf16>
    %cst_87 = arith.constant dense<0.000000e+00> : vector<8x128xf32>
    %320 = tpu.matmul %318, %319, %cst_87 {dimension_numbers = #tpu.dot_dimension_numbers<[1], [0], [0], [1], [0, 0, 1, 1], [], []>} : vector<8x128xbf16>, vector<128x128xbf16>, vector<8x128xf32> -> vector<8x128xf32>
    %321 = arith.addf %288, %320 : vector<8x128xf32>
    %322 = arith.truncf %317 : vector<8x128xf32> to vector<8x128xbf16>
    %c1664 = arith.constant 1664 : index
    %c0_88 = arith.constant 0 : index
    %323 = vector.load %arg10[%c1664, %c0_88] : memref<2304x128xbf16, #tpu.memory_space<vmem>>, vector<128x128xbf16>
    %cst_89 = arith.constant dense<0.000000e+00> : vector<8x128xf32>
    %324 = tpu.matmul %322, %323, %cst_89 {dimension_numbers = #tpu.dot_dimension_numbers<[1], [0], [0], [1], [0, 0, 1, 1], [], []>} : vector<8x128xbf16>, vector<128x128xbf16>, vector<8x128xf32> -> vector<8x128xf32>
    %325 = arith.addf %321, %324 : vector<8x128xf32>
    %326 = arith.truncf %22 : vector<8x128xf32> to vector<8x128xbf16>
    %cst_90 = arith.constant dense<0.000000e+00> : vector<8x128xf32>
    %327 = tpu.matmul %326, %9, %cst_90 {dimension_numbers = #tpu.dot_dimension_numbers<[1], [0], [0], [1], [0, 0, 1, 1], [], []>} : vector<8x128xbf16>, vector<128x128xbf16>, vector<8x128xf32> -> vector<8x128xf32>
    %328 = vector.broadcast %10 : vector<1x128xf32> to vector<8x128xf32>
    %329 = arith.addf %327, %328 : vector<8x128xf32>
    %cst_91 = arith.constant 0.000000e+00 : f32
    %330 = vector.broadcast %cst_91 : f32 to vector<8x128xf32>
    %331 = arith.maximumf %329, %330 : vector<8x128xf32>
    %cst_92 = arith.constant 0.000000e+00 : f32
    %332 = vector.broadcast %cst_92 : f32 to vector<8x128xf32>
    %333 = vector.broadcast %24 : vector<1x128xf32> to vector<8x128xf32>
    %334 = arith.mulf %18, %333 : vector<8x128xf32>
    %335 = arith.addf %332, %334 : vector<8x128xf32>
    %336 = vector.broadcast %25 : vector<1x128xf32> to vector<8x128xf32>
    %337 = arith.mulf %19, %336 : vector<8x128xf32>
    %338 = arith.addf %335, %337 : vector<8x128xf32>
    %339 = vector.broadcast %26 : vector<1x128xf32> to vector<8x128xf32>
    %340 = arith.mulf %20, %339 : vector<8x128xf32>
    %341 = arith.addf %338, %340 : vector<8x128xf32>
    %342 = vector.broadcast %27 : vector<1x128xf32> to vector<8x128xf32>
    %343 = arith.mulf %21, %342 : vector<8x128xf32>
    %344 = arith.addf %341, %343 : vector<8x128xf32>
    %345 = vector.broadcast %28 : vector<1x128xf32> to vector<8x128xf32>
    %346 = arith.mulf %22, %345 : vector<8x128xf32>
    %347 = arith.addf %344, %346 : vector<8x128xf32>
    %348 = vector.broadcast %29 : vector<1x128xf32> to vector<8x128xf32>
    %349 = arith.mulf %23, %348 : vector<8x128xf32>
    %350 = arith.addf %347, %349 : vector<8x128xf32>
    %351 = vector.broadcast %14 : vector<1x128xf32> to vector<8x128xf32>
    %352 = arith.addf %350, %351 : vector<8x128xf32>
    %cst_93 = arith.constant 0.000000e+00 : f32
    %353 = vector.broadcast %cst_93 : f32 to vector<8x128xf32>
    %354 = arith.maximumf %352, %353 : vector<8x128xf32>
    %355 = arith.truncf %354 : vector<8x128xf32> to vector<8x128xbf16>
    %cst_94 = arith.constant dense<0.000000e+00> : vector<8x128xf32>
    %356 = tpu.matmul %355, %11, %cst_94 {dimension_numbers = #tpu.dot_dimension_numbers<[1], [0], [0], [1], [0, 0, 1, 1], [], []>} : vector<8x128xbf16>, vector<128x128xbf16>, vector<8x128xf32> -> vector<8x128xf32>
    %357 = vector.broadcast %12 : vector<1x128xf32> to vector<8x128xf32>
    %358 = arith.addf %356, %357 : vector<8x128xf32>
    %cst_95 = arith.constant 0.000000e+00 : f32
    %359 = vector.broadcast %cst_95 : f32 to vector<8x128xf32>
    %360 = arith.maximumf %358, %359 : vector<8x128xf32>
    %361 = arith.truncf %331 : vector<8x128xf32> to vector<8x128xbf16>
    %c1792 = arith.constant 1792 : index
    %c0_96 = arith.constant 0 : index
    %362 = vector.load %arg10[%c1792, %c0_96] : memref<2304x128xbf16, #tpu.memory_space<vmem>>, vector<128x128xbf16>
    %cst_97 = arith.constant dense<0.000000e+00> : vector<8x128xf32>
    %363 = tpu.matmul %361, %362, %cst_97 {dimension_numbers = #tpu.dot_dimension_numbers<[1], [0], [0], [1], [0, 0, 1, 1], [], []>} : vector<8x128xbf16>, vector<128x128xbf16>, vector<8x128xf32> -> vector<8x128xf32>
    %364 = arith.addf %325, %363 : vector<8x128xf32>
    %365 = arith.truncf %360 : vector<8x128xf32> to vector<8x128xbf16>
    %c1920 = arith.constant 1920 : index
    %c0_98 = arith.constant 0 : index
    %366 = vector.load %arg10[%c1920, %c0_98] : memref<2304x128xbf16, #tpu.memory_space<vmem>>, vector<128x128xbf16>
    %cst_99 = arith.constant dense<0.000000e+00> : vector<8x128xf32>
    %367 = tpu.matmul %365, %366, %cst_99 {dimension_numbers = #tpu.dot_dimension_numbers<[1], [0], [0], [1], [0, 0, 1, 1], [], []>} : vector<8x128xbf16>, vector<128x128xbf16>, vector<8x128xf32> -> vector<8x128xf32>
    %368 = arith.addf %364, %367 : vector<8x128xf32>
    %369 = arith.truncf %23 : vector<8x128xf32> to vector<8x128xbf16>
    %cst_100 = arith.constant dense<0.000000e+00> : vector<8x128xf32>
    %370 = tpu.matmul %369, %9, %cst_100 {dimension_numbers = #tpu.dot_dimension_numbers<[1], [0], [0], [1], [0, 0, 1, 1], [], []>} : vector<8x128xbf16>, vector<128x128xbf16>, vector<8x128xf32> -> vector<8x128xf32>
    %371 = vector.broadcast %10 : vector<1x128xf32> to vector<8x128xf32>
    %372 = arith.addf %370, %371 : vector<8x128xf32>
    %cst_101 = arith.constant 0.000000e+00 : f32
    %373 = vector.broadcast %cst_101 : f32 to vector<8x128xf32>
    %374 = arith.maximumf %372, %373 : vector<8x128xf32>
    %cst_102 = arith.constant 0.000000e+00 : f32
    %375 = vector.broadcast %cst_102 : f32 to vector<8x128xf32>
    %376 = vector.broadcast %24 : vector<1x128xf32> to vector<8x128xf32>
    %377 = arith.mulf %19, %376 : vector<8x128xf32>
    %378 = arith.addf %375, %377 : vector<8x128xf32>
    %379 = vector.broadcast %25 : vector<1x128xf32> to vector<8x128xf32>
    %380 = arith.mulf %20, %379 : vector<8x128xf32>
    %381 = arith.addf %378, %380 : vector<8x128xf32>
    %382 = vector.broadcast %27 : vector<1x128xf32> to vector<8x128xf32>
    %383 = arith.mulf %22, %382 : vector<8x128xf32>
    %384 = arith.addf %381, %383 : vector<8x128xf32>
    %385 = vector.broadcast %28 : vector<1x128xf32> to vector<8x128xf32>
    %386 = arith.mulf %23, %385 : vector<8x128xf32>
    %387 = arith.addf %384, %386 : vector<8x128xf32>
    %388 = vector.broadcast %14 : vector<1x128xf32> to vector<8x128xf32>
    %389 = arith.addf %387, %388 : vector<8x128xf32>
    %cst_103 = arith.constant 0.000000e+00 : f32
    %390 = vector.broadcast %cst_103 : f32 to vector<8x128xf32>
    %391 = arith.maximumf %389, %390 : vector<8x128xf32>
    %392 = arith.truncf %391 : vector<8x128xf32> to vector<8x128xbf16>
    %cst_104 = arith.constant dense<0.000000e+00> : vector<8x128xf32>
    %393 = tpu.matmul %392, %11, %cst_104 {dimension_numbers = #tpu.dot_dimension_numbers<[1], [0], [0], [1], [0, 0, 1, 1], [], []>} : vector<8x128xbf16>, vector<128x128xbf16>, vector<8x128xf32> -> vector<8x128xf32>
    %394 = vector.broadcast %12 : vector<1x128xf32> to vector<8x128xf32>
    %395 = arith.addf %393, %394 : vector<8x128xf32>
    %cst_105 = arith.constant 0.000000e+00 : f32
    %396 = vector.broadcast %cst_105 : f32 to vector<8x128xf32>
    %397 = arith.maximumf %395, %396 : vector<8x128xf32>
    %398 = arith.truncf %374 : vector<8x128xf32> to vector<8x128xbf16>
    %c2048 = arith.constant 2048 : index
    %c0_106 = arith.constant 0 : index
    %399 = vector.load %arg10[%c2048, %c0_106] : memref<2304x128xbf16, #tpu.memory_space<vmem>>, vector<128x128xbf16>
    %cst_107 = arith.constant dense<0.000000e+00> : vector<8x128xf32>
    %400 = tpu.matmul %398, %399, %cst_107 {dimension_numbers = #tpu.dot_dimension_numbers<[1], [0], [0], [1], [0, 0, 1, 1], [], []>} : vector<8x128xbf16>, vector<128x128xbf16>, vector<8x128xf32> -> vector<8x128xf32>
    %401 = arith.addf %368, %400 : vector<8x128xf32>
    %402 = arith.truncf %397 : vector<8x128xf32> to vector<8x128xbf16>
    %c2176 = arith.constant 2176 : index
    %c0_108 = arith.constant 0 : index
    %403 = vector.load %arg10[%c2176, %c0_108] : memref<2304x128xbf16, #tpu.memory_space<vmem>>, vector<128x128xbf16>
    %cst_109 = arith.constant dense<0.000000e+00> : vector<8x128xf32>
    %404 = tpu.matmul %402, %403, %cst_109 {dimension_numbers = #tpu.dot_dimension_numbers<[1], [0], [0], [1], [0, 0, 1, 1], [], []>} : vector<8x128xbf16>, vector<128x128xbf16>, vector<8x128xf32> -> vector<8x128xf32>
    %405 = arith.addf %401, %404 : vector<8x128xf32>
    %c0_110 = arith.constant 0 : index
    %c0_111 = arith.constant 0 : index
    %406 = vector.load %arg11[%c0_110, %c0_111] : memref<1x128xf32, #tpu.memory_space<vmem>>, vector<1x128xf32>
    %407 = vector.broadcast %406 : vector<1x128xf32> to vector<8x128xf32>
    %408 = arith.addf %405, %407 : vector<8x128xf32>
    %c0_112 = arith.constant 0 : index
    %c0_113 = arith.constant 0 : index
    %409 = vector.load %arg15[%c0_112, %c0_113] : memref<8x128xf32, #tpu.memory_space<vmem>>, vector<8x128xf32>
    tpu.vector_store %arg15[%c0_112, %c0_113], %408 {strides = array<i32>} : memref<8x128xf32, #tpu.memory_space<vmem>>, vector<8x128xf32>,
    %cst_114 = arith.constant 0.000000e+00 : f32
    %410 = vector.broadcast %cst_114 : f32 to vector<8x128xf32>
    %411 = arith.maximumf %408, %410 : vector<8x128xf32>
    %412 = arith.truncf %411 : vector<8x128xf32> to vector<8x128xbf16>
    %c0_115 = arith.constant 0 : index
    %c0_116 = arith.constant 0 : index
    %413 = vector.load %arg12[%c0_115, %c0_116] : memref<128x128xbf16, #tpu.memory_space<vmem>>, vector<128x128xbf16>
    %cst_117 = arith.constant dense<0.000000e+00> : vector<8x128xf32>
    %414 = tpu.matmul %412, %413, %cst_117 {dimension_numbers = #tpu.dot_dimension_numbers<[1], [0], [0], [1], [0, 0, 1, 1], [], []>} : vector<8x128xbf16>, vector<128x128xbf16>, vector<8x128xf32> -> vector<8x128xf32>
    %c0_118 = arith.constant 0 : index
    %c0_119 = arith.constant 0 : index
    %415 = vector.load %arg13[%c0_118, %c0_119] : memref<1x128xf32, #tpu.memory_space<vmem>>, vector<1x128xf32>
    %416 = vector.broadcast %415 : vector<1x128xf32> to vector<8x128xf32>
    %417 = arith.addf %414, %416 : vector<8x128xf32>
    %c0_120 = arith.constant 0 : index
    %c0_121 = arith.constant 0 : index
    %418 = vector.load %arg14[%c0_120, %c0_121] : memref<8x128xf32, #tpu.memory_space<vmem>>, vector<8x128xf32>
    tpu.vector_store %arg14[%c0_120, %c0_121], %417 {strides = array<i32>} : memref<8x128xf32, #tpu.memory_space<vmem>>, vector<8x128xf32>,
    return
  }
  func.func @transform_0(%arg0: i32) -> (i32, i32) {
    %c0_i32 = arith.constant 0 : i32
    %c0_i32_0 = arith.constant 0 : i32
    return %arg0, %c0_i32 : i32, i32
  }
  func.func @transform_1(%arg0: i32) -> (i32, i32) {
    %c0_i32 = arith.constant 0 : i32
    %c0_i32_0 = arith.constant 0 : i32
    %c0_i32_1 = arith.constant 0 : i32
    return %c0_i32, %c0_i32_0 : i32, i32
  }
  func.func @transform_2(%arg0: i32) -> (i32, i32) {
    %c0_i32 = arith.constant 0 : i32
    %c0_i32_0 = arith.constant 0 : i32
    %c0_i32_1 = arith.constant 0 : i32
    return %c0_i32, %c0_i32_0 : i32, i32
  }
  func.func @transform_3(%arg0: i32) -> (i32, i32) {
    %c0_i32 = arith.constant 0 : i32
    %c0_i32_0 = arith.constant 0 : i32
    %c0_i32_1 = arith.constant 0 : i32
    return %c0_i32, %c0_i32_0 : i32, i32
  }
  func.func @transform_4(%arg0: i32) -> (i32, i32) {
    %c0_i32 = arith.constant 0 : i32
    %c0_i32_0 = arith.constant 0 : i32
    %c0_i32_1 = arith.constant 0 : i32
    return %c0_i32, %c0_i32_0 : i32, i32
  }
  func.func @transform_5(%arg0: i32) -> (i32, i32) {
    %c0_i32 = arith.constant 0 : i32
    %c0_i32_0 = arith.constant 0 : i32
    %c0_i32_1 = arith.constant 0 : i32
    return %c0_i32, %c0_i32_0 : i32, i32
  }
  func.func @transform_6(%arg0: i32) -> (i32, i32) {
    %c0_i32 = arith.constant 0 : i32
    %c0_i32_0 = arith.constant 0 : i32
    %c0_i32_1 = arith.constant 0 : i32
    return %c0_i32, %c0_i32_0 : i32, i32
  }
  func.func @transform_7(%arg0: i32) -> (i32, i32) {
    %c0_i32 = arith.constant 0 : i32
    %c0_i32_0 = arith.constant 0 : i32
    %c0_i32_1 = arith.constant 0 : i32
    return %c0_i32, %c0_i32_0 : i32, i32
  }
  func.func @transform_8(%arg0: i32) -> (i32, i32) {
    %c0_i32 = arith.constant 0 : i32
    %c0_i32_0 = arith.constant 0 : i32
    %c0_i32_1 = arith.constant 0 : i32
    return %c0_i32, %c0_i32_0 : i32, i32
  }
  func.func @transform_9(%arg0: i32) -> (i32, i32) {
    %c0_i32 = arith.constant 0 : i32
    %c0_i32_0 = arith.constant 0 : i32
    %c0_i32_1 = arith.constant 0 : i32
    return %c0_i32, %c0_i32_0 : i32, i32
  }
  func.func @transform_10(%arg0: i32) -> (i32, i32) {
    %c0_i32 = arith.constant 0 : i32
    %c0_i32_0 = arith.constant 0 : i32
    %c0_i32_1 = arith.constant 0 : i32
    return %c0_i32, %c0_i32_0 : i32, i32
  }
  func.func @transform_11(%arg0: i32) -> (i32, i32) {
    %c0_i32 = arith.constant 0 : i32
    %c0_i32_0 = arith.constant 0 : i32
    %c0_i32_1 = arith.constant 0 : i32
    return %c0_i32, %c0_i32_0 : i32, i32
  }
  func.func @transform_12(%arg0: i32) -> (i32, i32) {
    %c0_i32 = arith.constant 0 : i32
    %c0_i32_0 = arith.constant 0 : i32
    %c0_i32_1 = arith.constant 0 : i32
    return %c0_i32, %c0_i32_0 : i32, i32
  }
  func.func @transform_13(%arg0: i32) -> (i32, i32) {
    %c0_i32 = arith.constant 0 : i32
    %c0_i32_0 = arith.constant 0 : i32
    return %arg0, %c0_i32 : i32, i32
  }
  func.func @transform_14(%arg0: i32) -> (i32, i32) {
    %c0_i32 = arith.constant 0 : i32
    %c0_i32_0 = arith.constant 0 : i32
    return %arg0, %c0_i32 : i32, i32
  }
}

</mosaic_0001>

<llo_original>
// kernel: vgg_forward.1
$region0: #{vgg_forward.1}
  #allocation0 [shape = 'u32[]', space=smem, size = 0x4, offset = 0x4, fixed_abs, tag = 'smem constant byte address 0x4 - core index']
  #allocation1 [shape = 'u32[72,128]{1,0:T(1,128)}', space=vmem, size = 0x9000, scoped, tag = 'internal scratch']
  %s0 = inlined_call_operand.vmem [shape: f32[72,512], index: 0, kind: input, shape index: {}]
  %s1 = inlined_call_operand.vmem [shape: bf16[512,128], index: 1, kind: input, shape index: {}]
  %s2 = inlined_call_operand.vmem [shape: f32[1,128], index: 2, kind: input, shape index: {}]
  %s3 = inlined_call_operand.vmem [shape: bf16[128,128], index: 3, kind: input, shape index: {}]
  %s4 = inlined_call_operand.vmem [shape: f32[1,128], index: 4, kind: input, shape index: {}]
  %s5 = inlined_call_operand.vmem [shape: f32[9,128], index: 5, kind: input, shape index: {}]
  %s6 = inlined_call_operand.vmem [shape: f32[1,128], index: 6, kind: input, shape index: {}]
  %s7 = inlined_call_operand.vmem [shape: bf16[128,128], index: 7, kind: input, shape index: {}]
  %s8 = inlined_call_operand.vmem [shape: f32[1,128], index: 8, kind: input, shape index: {}]
  %s9 = inlined_call_operand.vmem [shape: bf16[2304,128], index: 9, kind: input, shape index: {}]
  %s10 = inlined_call_operand.vmem [shape: f32[1,128], index: 10, kind: input, shape index: {}]
  %s11 = inlined_call_operand.vmem [shape: bf16[128,128], index: 11, kind: input, shape index: {}]
  %s12 = inlined_call_operand.vmem [shape: f32[1,128], index: 12, kind: input, shape index: {}]
  %s13 = inlined_call_operand.vmem [shape: f32[8,128], index: 13, kind: output, shape index: {0}]
  %s14 = inlined_call_operand.vmem [shape: f32[8,128], index: 14, kind: output, shape index: {1}]
  %15 = xla_tuple %s13, %s14
  %s16 = sld [smem:[#allocation0]]
  $region70: #{vgg_forward.1} parent=0
    _
  %s18 = ssub.s32 1, %s16
  %s19 = scalar_select 0, %s18, %s16
  // Predicated region
  $region2: #{vgg_forward.1} parent=0 // pred_check
    _
  $region3: #{vgg_forward.1} parent=0 // pred_check_branch
    %21 = sbr.rel (0) target = $region5
  $region4: #{vgg_forward.1} parent=0 // pred_region
    _
  $region5: #{vgg_forward.1} parent=0 // pred_fallthru
    _
  // Predicated region
  $region6: #{vgg_forward.1} parent=0 // pred_check
    _
  $region7: #{vgg_forward.1} parent=0 // pred_check_branch
    %23 = sbr.rel (0) target = $region9
  $region8: #{vgg_forward.1} parent=0 // pred_region
    _
  $region9: #{vgg_forward.1} parent=0 // pred_fallthru
    _
  // Predicated region
  $region10: #{vgg_forward.1} parent=0 // pred_check
    _
  $region11: #{vgg_forward.1} parent=0 // pred_check_branch
    %25 = sbr.rel (0) target = $region13
  $region12: #{vgg_forward.1} parent=0 // pred_region
    _
  $region13: #{vgg_forward.1} parent=0 // pred_fallthru
    _
  // Predicated region
  $region14: #{vgg_forward.1} parent=0 // pred_check
    _
  $region15: #{vgg_forward.1} parent=0 // pred_check_branch
    %27 = sbr.rel (0) target = $region17
  $region16: #{vgg_forward.1} parent=0 // pred_region
    _
  $region17: #{vgg_forward.1} parent=0 // pred_fallthru
    _
  // Predicated region
  $region18: #{vgg_forward.1} parent=0 // pred_check
    _
  $region19: #{vgg_forward.1} parent=0 // pred_check_branch
    %29 = sbr.rel (0) target = $region21
  $region20: #{vgg_forward.1} parent=0 // pred_region
    _
  $region21: #{vgg_forward.1} parent=0 // pred_fallthru
    _
  // Predicated region
  $region22: #{vgg_forward.1} parent=0 // pred_check
    _
  $region23: #{vgg_forward.1} parent=0 // pred_check_branch
    %31 = sbr.rel (0) target = $region25
  $region24: #{vgg_forward.1} parent=0 // pred_region
    _
  $region25: #{vgg_forward.1} parent=0 // pred_fallthru
    _
  // Predicated region
  $region26: #{vgg_forward.1} parent=0 // pred_check
    _
  $region27: #{vgg_forward.1} parent=0 // pred_check_branch
    %33 = sbr.rel (0) target = $region29
  $region28: #{vgg_forward.1} parent=0 // pred_region
    _
  $region29: #{vgg_forward.1} parent=0 // pred_fallthru
    _
  // Predicated region
  $region30: #{vgg_forward.1} parent=0 // pred_check
    _
  $region31: #{vgg_forward.1} parent=0 // pred_check_branch
    %35 = sbr.rel (0) target = $region33
  $region32: #{vgg_forward.1} parent=0 // pred_region
    _
  $region33: #{vgg_forward.1} parent=0 // pred_fallthru
    _
  // Predicated region
  $region34: #{vgg_forward.1} parent=0 // pred_check
    _
  $region35: #{vgg_forward.1} parent=0 // pred_check_branch
    %37 = sbr.rel (0) target = $region37
  $region36: #{vgg_forward.1} parent=0 // pred_region
    _
  $region37: #{vgg_forward.1} parent=0 // pred_fallthru
    _
  // Predicated region
  $region38: #{vgg_forward.1} parent=0 // pred_check
    _
  $region39: #{vgg_forward.1} parent=0 // pred_check_branch
    %39 = sbr.rel (0) target = $region41
  $region40: #{vgg_forward.1} parent=0 // pred_region
    _
  $region41: #{vgg_forward.1} parent=0 // pred_fallthru
    _
  // Predicated region
  $region42: #{vgg_forward.1} parent=0 // pred_check
    _
  $region43: #{vgg_forward.1} parent=0 // pred_check_branch
    %41 = sbr.rel (0) target = $region45
  $region44: #{vgg_forward.1} parent=0 // pred_region
    _
  $region45: #{vgg_forward.1} parent=0 // pred_fallthru
    _
  // Predicated region
  $region46: #{vgg_forward.1} parent=0 // pred_check
    _
  $region47: #{vgg_forward.1} parent=0 // pred_check_branch
    %43 = sbr.rel (0) target = $region49
  $region48: #{vgg_forward.1} parent=0 // pred_region
    _
  $region49: #{vgg_forward.1} parent=0 // pred_fallthru
    _
  // Predicated region
  $region50: #{vgg_forward.1} parent=0 // pred_check
    _
  $region51: #{vgg_forward.1} parent=0 // pred_check_branch
    %45 = sbr.rel (0) target = $region53
  $region52: #{vgg_forward.1} parent=0 // pred_region
    _
  $region53: #{vgg_forward.1} parent=0 // pred_fallthru
    _
  %v46 = vld [vmem:[%s0] sm:$0xff]
  %v47 = vld [vmem:[%s0 + $0x8] sm:$0xff]
  %v48 = vld [vmem:[%s0 + $0x10] sm:$0xff]
  %v49 = vld [vmem:[%s0 + $0x18] sm:$0xff]
  %v50 = vld [vmem:[%s0 + $0x20] sm:$0xff]
  %v51 = vld [vmem:[%s0 + $0x28] sm:$0xff]
  %v52 = vld [vmem:[%s0 + $0x30] sm:$0xff]
  %v53 = vld [vmem:[%s0 + $0x38] sm:$0xff]
  %v54 = vld [vmem:[%s0 + $0x40] sm:$0xff]
  %v55 = vld [vmem:[%s0 + $0x48] sm:$0xff]
  %v56 = vld [vmem:[%s0 + $0x50] sm:$0xff]
  %v57 = vld [vmem:[%s0 + $0x58] sm:$0xff]
  %v58 = vld [vmem:[%s0 + $0x60] sm:$0xff]
  %v59 = vld [vmem:[%s0 + $0x68] sm:$0xff]
  %v60 = vld [vmem:[%s0 + $0x70] sm:$0xff]
  %v61 = vld [vmem:[%s0 + $0x78] sm:$0xff]
  %v62 = vld [vmem:[%s0 + $0x80] sm:$0xff]
  %v63 = vld [vmem:[%s0 + $0x88] sm:$0xff]
  %v64 = vld [vmem:[%s0 + $0x90] sm:$0xff]
  %v65 = vld [vmem:[%s0 + $0x98] sm:$0xff]
  %v66 = vld [vmem:[%s0 + $0xa0] sm:$0xff]
  %v67 = vld [vmem:[%s0 + $0xa8] sm:$0xff]
  %v68 = vld [vmem:[%s0 + $0xb0] sm:$0xff]
  %v69 = vld [vmem:[%s0 + $0xb8] sm:$0xff]
  %v70 = vld [vmem:[%s0 + $0xc0] sm:$0xff]
  %v71 = vld [vmem:[%s0 + $0xc8] sm:$0xff]
  %v72 = vld [vmem:[%s0 + $0xd0] sm:$0xff]
  %v73 = vld [vmem:[%s0 + $0xd8] sm:$0xff]
  %v74 = vld [vmem:[%s0 + $0xe0] sm:$0xff]
  %v75 = vld [vmem:[%s0 + $0xe8] sm:$0xff]
  %v76 = vld [vmem:[%s0 + $0xf0] sm:$0xff]
  %v77 = vld [vmem:[%s0 + $0xf8] sm:$0xff]
  %v78 = vld [vmem:[%s0 + $0x100] sm:$0xff]
  %v79 = vld [vmem:[%s0 + $0x108] sm:$0xff]
  %v80 = vld [vmem:[%s0 + $0x110] sm:$0xff]
  %v81 = vld [vmem:[%s0 + $0x118] sm:$0xff]
  %v82 = vpack.c.bf16 %v50, %v46
  %v83 = vpack.c.bf16 %v51, %v47
  %v84 = vpack.c.bf16 %v52, %v48
  %v85 = vpack.c.bf16 %v53, %v49
  %v86 = vpack.c.bf16 %v58, %v54
  %v87 = vpack.c.bf16 %v59, %v55
  %v88 = vpack.c.bf16 %v60, %v56
  %v89 = vpack.c.bf16 %v61, %v57
  %v90 = vpack.c.bf16 %v66, %v62
  %v91 = vpack.c.bf16 %v67, %v63
  %v92 = vpack.c.bf16 %v68, %v64
  %v93 = vpack.c.bf16 %v69, %v65
  %v94 = vpack.c.bf16 %v74, %v70
  %v95 = vpack.c.bf16 %v75, %v71
  %v96 = vpack.c.bf16 %v76, %v72
  %v97 = vpack.c.bf16 %v77, %v73
  %v98 = vpack.c.bf16 %v78, %v78
  %v99 = vpack.c.bf16 %v79, %v79
  %v100 = vpack.c.bf16 %v80, %v80
  %v101 = vpack.c.bf16 %v81, %v81
  %v102 = vld [vmem:[%s1] sm:$0xf]
  %v103 = vld [vmem:[%s1 + $0x4] sm:$0xf]
  %v104 = vld [vmem:[%s1 + $0x8] sm:$0xf]
  %v105 = vld [vmem:[%s1 + $0xc] sm:$0xf]
  %v106 = vld [vmem:[%s1 + $0x10] sm:$0xf]
  %v107 = vld [vmem:[%s1 + $0x14] sm:$0xf]
  %v108 = vld [vmem:[%s1 + $0x18] sm:$0xf]
  %v109 = vld [vmem:[%s1 + $0x1c] sm:$0xf]
  %v110 = vld [vmem:[%s1 + $0x20] sm:$0xf]
  %v111 = vld [vmem:[%s1 + $0x24] sm:$0xf]
  %v112 = vld [vmem:[%s1 + $0x28] sm:$0xf]
  %v113 = vld [vmem:[%s1 + $0x2c] sm:$0xf]
  %v114 = vld [vmem:[%s1 + $0x30] sm:$0xf]
  %v115 = vld [vmem:[%s1 + $0x34] sm:$0xf]
  %v116 = vld [vmem:[%s1 + $0x38] sm:$0xf]
  %v117 = vld [vmem:[%s1 + $0x3c] sm:$0xf]
  %v118 = vld [vmem:[%s1 + $0x40] sm:$0xf]
  %v119 = vld [vmem:[%s1 + $0x44] sm:$0xf]
  %v120 = vld [vmem:[%s1 + $0x48] sm:$0xf]
  %v121 = vld [vmem:[%s1 + $0x4c] sm:$0xf]
  %v122 = vld [vmem:[%s1 + $0x50] sm:$0xf]
  %v123 = vld [vmem:[%s1 + $0x54] sm:$0xf]
  %v124 = vld [vmem:[%s1 + $0x58] sm:$0xf]
  %v125 = vld [vmem:[%s1 + $0x5c] sm:$0xf]
  %v126 = vld [vmem:[%s1 + $0x60] sm:$0xf]
  %v127 = vld [vmem:[%s1 + $0x64] sm:$0xf]
  %v128 = vld [vmem:[%s1 + $0x68] sm:$0xf]
  %v129 = vld [vmem:[%s1 + $0x6c] sm:$0xf]
  %v130 = vld [vmem:[%s1 + $0x70] sm:$0xf]
  %v131 = vld [vmem:[%s1 + $0x74] sm:$0xf]
  %v132 = vld [vmem:[%s1 + $0x78] sm:$0xf]
  %v133 = vld [vmem:[%s1 + $0x7c] sm:$0xf]
  %v134 = vld [vmem:[%s1 + $0x80] sm:$0xf]
  %v135 = vld [vmem:[%s1 + $0x84] sm:$0xf]
  %v136 = vld [vmem:[%s1 + $0x88] sm:$0xf]
  %v137 = vld [vmem:[%s1 + $0x8c] sm:$0xf]
  %v138 = vld [vmem:[%s1 + $0x90] sm:$0xf]
  %v139 = vld [vmem:[%s1 + $0x94] sm:$0xf]
  %v140 = vld [vmem:[%s1 + $0x98] sm:$0xf]
  %v141 = vld [vmem:[%s1 + $0x9c] sm:$0xf]
  %v142 = vld [vmem:[%s1 + $0xa0] sm:$0xf]
  %v143 = vld [vmem:[%s1 + $0xa4] sm:$0xf]
  %v144 = vld [vmem:[%s1 + $0xa8] sm:$0xf]
  %v145 = vld [vmem:[%s1 + $0xac] sm:$0xf]
  %v146 = vld [vmem:[%s1 + $0xb0] sm:$0xf]
  %v147 = vld [vmem:[%s1 + $0xb4] sm:$0xf]
  %v148 = vld [vmem:[%s1 + $0xb8] sm:$0xf]
  %v149 = vld [vmem:[%s1 + $0xbc] sm:$0xf]
  %v150 = vld [vmem:[%s1 + $0xc0] sm:$0xf]
  %v151 = vld [vmem:[%s1 + $0xc4] sm:$0xf]
  %v152 = vld [vmem:[%s1 + $0xc8] sm:$0xf]
  %v153 = vld [vmem:[%s1 + $0xcc] sm:$0xf]
  %v154 = vld [vmem:[%s1 + $0xd0] sm:$0xf]
  %v155 = vld [vmem:[%s1 + $0xd4] sm:$0xf]
  %v156 = vld [vmem:[%s1 + $0xd8] sm:$0xf]
  %v157 = vld [vmem:[%s1 + $0xdc] sm:$0xf]
  %v158 = vld [vmem:[%s1 + $0xe0] sm:$0xf]
  %v159 = vld [vmem:[%s1 + $0xe4] sm:$0xf]
  %v160 = vld [vmem:[%s1 + $0xe8] sm:$0xf]
  %v161 = vld [vmem:[%s1 + $0xec] sm:$0xf]
  %v162 = vld [vmem:[%s1 + $0xf0] sm:$0xf]
  %v163 = vld [vmem:[%s1 + $0xf4] sm:$0xf]
  %v164 = vld [vmem:[%s1 + $0xf8] sm:$0xf]
  %v165 = vld [vmem:[%s1 + $0xfc] sm:$0xf]
  %v166 = vld [vmem:[%s2] sm:$0x1]
  %v168 = vperm.slane %v166, 0
  %v234 = vunpack.c.l.b16 %v102
  %v235 = vunpack.c.l.b16 %v103
  %v236 = vunpack.c.l.b16 %v104
  %v237 = vunpack.c.l.b16 %v105
  %v238 = vunpack.c.l.b16 %v106
  %v239 = vunpack.c.l.b16 %v107
  %v240 = vunpack.c.l.b16 %v108
  %v241 = vunpack.c.l.b16 %v109
  %v242 = vunpack.c.l.b16 %v110
  %v243 = vunpack.c.l.b16 %v111
  %v244 = vunpack.c.l.b16 %v112
  %v245 = vunpack.c.l.b16 %v113
  %v246 = vunpack.c.l.b16 %v114
  %v247 = vunpack.c.l.b16 %v115
  %v248 = vunpack.c.l.b16 %v116
  %v249 = vunpack.c.l.b16 %v117
  %v250 = vunpack.c.l.b16 %v118
  %v251 = vunpack.c.l.b16 %v119
  %v252 = vunpack.c.l.b16 %v120
  %v253 = vunpack.c.l.b16 %v121
  %v254 = vunpack.c.l.b16 %v122
  %v255 = vunpack.c.l.b16 %v123
  %v256 = vunpack.c.l.b16 %v124
  %v257 = vunpack.c.l.b16 %v125
  %v258 = vunpack.c.l.b16 %v126
  %v259 = vunpack.c.l.b16 %v127
  %v260 = vunpack.c.l.b16 %v128
  %v261 = vunpack.c.l.b16 %v129
  %v262 = vunpack.c.l.b16 %v130
  %v263 = vunpack.c.l.b16 %v131
  %v264 = vunpack.c.l.b16 %v132
  %v265 = vunpack.c.l.b16 %v133
  %v266 = vunpack.c.l.b16 %v134
  %v267 = vunpack.c.l.b16 %v135
  %v268 = vunpack.c.l.b16 %v136
  %v269 = vunpack.c.l.b16 %v137
  %v270 = vunpack.c.l.b16 %v138
  %v271 = vunpack.c.l.b16 %v139
  %v272 = vunpack.c.l.b16 %v140
  %v273 = vunpack.c.l.b16 %v141
  %v274 = vunpack.c.l.b16 %v142
  %v275 = vunpack.c.l.b16 %v143
  %v276 = vunpack.c.l.b16 %v144
  %v277 = vunpack.c.l.b16 %v145
  %v278 = vunpack.c.l.b16 %v146
  %v279 = vunpack.c.l.b16 %v147
  %v280 = vunpack.c.l.b16 %v148
  %v281 = vunpack.c.l.b16 %v149
  %v282 = vunpack.c.l.b16 %v150
  %v283 = vunpack.c.l.b16 %v151
  %v284 = vunpack.c.l.b16 %v152
  %v285 = vunpack.c.l.b16 %v153
  %v286 = vunpack.c.l.b16 %v154
  %v287 = vunpack.c.l.b16 %v155
  %v288 = vunpack.c.l.b16 %v156
  %v289 = vunpack.c.l.b16 %v157
  %v290 = vunpack.c.l.b16 %v158
  %v291 = vunpack.c.l.b16 %v159
  %v292 = vunpack.c.l.b16 %v160
  %v293 = vunpack.c.l.b16 %v161
  %v294 = vunpack.c.l.b16 %v162
  %v295 = vunpack.c.l.b16 %v163
  %v296 = vunpack.c.l.b16 %v164
  %v297 = vunpack.c.l.b16 %v165
  %v298 = vpack.c.b16 %v235, %v234
  %v299 = vpack.c.b16 %v237, %v236
  %v300 = vpack.c.b16 %v239, %v238
  %v301 = vpack.c.b16 %v241, %v240
  %v302 = vpack.c.b16 %v243, %v242
  %v303 = vpack.c.b16 %v245, %v244
  %v304 = vpack.c.b16 %v247, %v246
  %v305 = vpack.c.b16 %v249, %v248
  %v306 = vpack.c.b16 %v251, %v250
  %v307 = vpack.c.b16 %v253, %v252
  %v308 = vpack.c.b16 %v255, %v254
  %v309 = vpack.c.b16 %v257, %v256
  %v310 = vpack.c.b16 %v259, %v258
  %v311 = vpack.c.b16 %v261, %v260
  %v312 = vpack.c.b16 %v263, %v262
  %v313 = vpack.c.b16 %v265, %v264
  %v314 = vpack.c.b16 %v267, %v266
  %v315 = vpack.c.b16 %v269, %v268
  %v316 = vpack.c.b16 %v271, %v270
  %v317 = vpack.c.b16 %v273, %v272
  %v318 = vpack.c.b16 %v275, %v274
  %v319 = vpack.c.b16 %v277, %v276
  %v320 = vpack.c.b16 %v279, %v278
  %v321 = vpack.c.b16 %v281, %v280
  %v322 = vpack.c.b16 %v283, %v282
  %v323 = vpack.c.b16 %v285, %v284
  %v324 = vpack.c.b16 %v287, %v286
  %v325 = vpack.c.b16 %v289, %v288
  %v326 = vpack.c.b16 %v291, %v290
  %v327 = vpack.c.b16 %v293, %v292
  %v328 = vpack.c.b16 %v295, %v294
  %v329 = vpack.c.b16 %v297, %v296
  %362 = vmatpush.bf16.msra.mxu0 %v305
  %363 = vmatpush.bf16.msra.mxu0 %v304
  %364 = vmatpush.bf16.msra.mxu0 %v303
  %365 = vmatpush.bf16.msra.mxu0 %v302
  %366 = vmatpush.bf16.msra.mxu0 %v301
  %367 = vmatpush.bf16.msra.mxu0 %v300
  %368 = vmatpush.bf16.msra.mxu0 %v299
  %369 = vmatpush.bf16.msra.mxu0 %v298
  %370 = vmatmul.bf16.gmra.mxu0 %v82
  %v371 = vpop.f32.mrf.mxu0
  %v372 = vadd.f32 %v168, %v371
  %v373 = vpop.f32.mrf.mxu0
  %v374 = vadd.f32 %v168, %v373
  %375 = vmatmul.bf16.gmra.mxu0 %v86
  %v376 = vpop.f32.mrf.mxu0
  %v377 = vadd.f32 %v168, %v376
  %v378 = vpop.f32.mrf.mxu0
  %v379 = vadd.f32 %v168, %v378
  %380 = vmatmul.bf16.gmra.mxu0 %v90
  %v381 = vpop.f32.mrf.mxu0
  %v382 = vadd.f32 %v168, %v381
  %v383 = vpop.f32.mrf.mxu0
  %v384 = vadd.f32 %v168, %v383
  %385 = vmatmul.bf16.gmra.mxu0 %v94
  %v386 = vpop.f32.mrf.mxu0
  %v387 = vadd.f32 %v168, %v386
  %v388 = vpop.f32.mrf.mxu0
  %v389 = vadd.f32 %v168, %v388
  %390 = vmatmul.bf16.gmra.mxu0 %v98
  %v391 = vpop.f32.mrf.mxu0
  %v392 = vadd.f32 %v168, %v391
  %v393 = vpop.f32.mrf.mxu0
  %394 = vdwg.mxu0
  %395 = vmatpush.bf16.msra.mxu0 %v313
  %396 = vmatpush.bf16.msra.mxu0 %v312
  %397 = vmatpush.bf16.msra.mxu0 %v311
  %398 = vmatpush.bf16.msra.mxu0 %v310
  %399 = vmatpush.bf16.msra.mxu0 %v309
  %400 = vmatpush.bf16.msra.mxu0 %v308
  %401 = vmatpush.bf16.msra.mxu0 %v307
  %402 = vmatpush.bf16.msra.mxu0 %v306
  %403 = vmatmul.bf16.gmra.mxu0 %v83
  %v404 = vpop.f32.mrf.mxu0
  %v405 = vadd.f32 %v372, %v404
  %v406 = vpop.f32.mrf.mxu0
  %v407 = vadd.f32 %v374, %v406
  %408 = vmatmul.bf16.gmra.mxu0 %v87
  %v409 = vpop.f32.mrf.mxu0
  %v410 = vadd.f32 %v377, %v409
  %v411 = vpop.f32.mrf.mxu0
  %v412 = vadd.f32 %v379, %v411
  %413 = vmatmul.bf16.gmra.mxu0 %v91
  %v414 = vpop.f32.mrf.mxu0
  %v415 = vadd.f32 %v382, %v414
  %v416 = vpop.f32.mrf.mxu0
  %v417 = vadd.f32 %v384, %v416
  %418 = vmatmul.bf16.gmra.mxu0 %v95
  %v419 = vpop.f32.mrf.mxu0
  %v420 = vadd.f32 %v387, %v419
  %v421 = vpop.f32.mrf.mxu0
  %v422 = vadd.f32 %v389, %v421
  %423 = vmatmul.bf16.gmra.mxu0 %v99
  %v424 = vpop.f32.mrf.mxu0
  %v425 = vadd.f32 %v392, %v424
  %v426 = vpop.f32.mrf.mxu0
  %427 = vdwg.mxu0
  %428 = vmatpush.bf16.msra.mxu0 %v321
  %429 = vmatpush.bf16.msra.mxu0 %v320
  %430 = vmatpush.bf16.msra.mxu0 %v319
  %431 = vmatpush.bf16.msra.mxu0 %v318
  %432 = vmatpush.bf16.msra.mxu0 %v317
  %433 = vmatpush.bf16.msra.mxu0 %v316
  %434 = vmatpush.bf16.msra.mxu0 %v315
  %435 = vmatpush.bf16.msra.mxu0 %v314
  %436 = vmatmul.bf16.gmra.mxu0 %v84
  %v437 = vpop.f32.mrf.mxu0
  %v438 = vadd.f32 %v405, %v437
  %v439 = vpop.f32.mrf.mxu0
  %v440 = vadd.f32 %v407, %v439
  %441 = vmatmul.bf16.gmra.mxu0 %v88
  %v442 = vpop.f32.mrf.mxu0
  %v443 = vadd.f32 %v410, %v442
  %v444 = vpop.f32.mrf.mxu0
  %v445 = vadd.f32 %v412, %v444
  %446 = vmatmul.bf16.gmra.mxu0 %v92
  %v447 = vpop.f32.mrf.mxu0
  %v448 = vadd.f32 %v415, %v447
  %v449 = vpop.f32.mrf.mxu0
  %v450 = vadd.f32 %v417, %v449
  %451 = vmatmul.bf16.gmra.mxu0 %v96
  %v452 = vpop.f32.mrf.mxu0
  %v453 = vadd.f32 %v420, %v452
  %v454 = vpop.f32.mrf.mxu0
  %v455 = vadd.f32 %v422, %v454
  %456 = vmatmul.bf16.gmra.mxu0 %v100
  %v457 = vpop.f32.mrf.mxu0
  %v458 = vadd.f32 %v425, %v457
  %v459 = vpop.f32.mrf.mxu0
  %460 = vdwg.mxu0
  %461 = vmatpush.bf16.msra.mxu0 %v329
  %462 = vmatpush.bf16.msra.mxu0 %v328
  %463 = vmatpush.bf16.msra.mxu0 %v327
  %464 = vmatpush.bf16.msra.mxu0 %v326
  %465 = vmatpush.bf16.msra.mxu0 %v325
  %466 = vmatpush.bf16.msra.mxu0 %v324
  %467 = vmatpush.bf16.msra.mxu0 %v323
  %468 = vmatpush.bf16.msra.mxu0 %v322
  %469 = vmatmul.bf16.gmra.mxu0 %v85
  %v470 = vpop.f32.mrf.mxu0
  %v471 = vadd.f32 %v438, %v470
  %v472 = vpop.f32.mrf.mxu0
  %v473 = vadd.f32 %v440, %v472
  %474 = vmatmul.bf16.gmra.mxu0 %v89
  %v475 = vpop.f32.mrf.mxu0
  %v476 = vadd.f32 %v443, %v475
  %v477 = vpop.f32.mrf.mxu0
  %v478 = vadd.f32 %v445, %v477
  %479 = vmatmul.bf16.gmra.mxu0 %v93
  %v480 = vpop.f32.mrf.mxu0
  %v481 = vadd.f32 %v448, %v480
  %v482 = vpop.f32.mrf.mxu0
  %v483 = vadd.f32 %v450, %v482
  %484 = vmatmul.bf16.gmra.mxu0 %v97
  %v485 = vpop.f32.mrf.mxu0
  %v486 = vadd.f32 %v453, %v485
  %v487 = vpop.f32.mrf.mxu0
  %v488 = vadd.f32 %v455, %v487
  %489 = vmatmul.bf16.gmra.mxu0 %v101
  %v490 = vpop.f32.mrf.mxu0
  %v491 = vadd.f32 %v458, %v490
  %v492 = vpop.f32.mrf.mxu0
  %493 = vdwg.mxu0
  %v494 = vmax.f32 %v471, 0.0
  %v495 = vmax.f32 %v473, 0.0
  %v496 = vmax.f32 %v476, 0.0
  %v497 = vmax.f32 %v478, 0.0
  %v498 = vmax.f32 %v481, 0.0
  %v499 = vmax.f32 %v483, 0.0
  %v500 = vmax.f32 %v486, 0.0
  %v501 = vmax.f32 %v488, 0.0
  %v502 = vmax.f32 %v491, 0.0
  %v503 = vld [vmem:[%s3] sm:$0xf]
  %v504 = vld [vmem:[%s3 + $0x4] sm:$0xf]
  %v505 = vld [vmem:[%s3 + $0x8] sm:$0xf]
  %v506 = vld [vmem:[%s3 + $0xc] sm:$0xf]
  %v507 = vld [vmem:[%s3 + $0x10] sm:$0xf]
  %v508 = vld [vmem:[%s3 + $0x14] sm:$0xf]
  %v509 = vld [vmem:[%s3 + $0x18] sm:$0xf]
  %v510 = vld [vmem:[%s3 + $0x1c] sm:$0xf]
  %v511 = vld [vmem:[%s3 + $0x20] sm:$0xf]
  %v512 = vld [vmem:[%s3 + $0x24] sm:$0xf]
  %v513 = vld [vmem:[%s3 + $0x28] sm:$0xf]
  %v514 = vld [vmem:[%s3 + $0x2c] sm:$0xf]
  %v515 = vld [vmem:[%s3 + $0x30] sm:$0xf]
  %v516 = vld [vmem:[%s3 + $0x34] sm:$0xf]
  %v517 = vld [vmem:[%s3 + $0x38] sm:$0xf]
  %v518 = vld [vmem:[%s3 + $0x3c] sm:$0xf]
  %v519 = vld [vmem:[%s4] sm:$0x1]
  %v520 = vld [vmem:[%s7] sm:$0xf]
  %v521 = vld [vmem:[%s7 + $0x4] sm:$0xf]
  %v522 = vld [vmem:[%s7 + $0x8] sm:$0xf]
  %v523 = vld [vmem:[%s7 + $0xc] sm:$0xf]
  %v524 = vld [vmem:[%s7 + $0x10] sm:$0xf]
  %v525 = vld [vmem:[%s7 + $0x14] sm:$0xf]
  %v526 = vld [vmem:[%s7 + $0x18] sm:$0xf]
  %v527 = vld [vmem:[%s7 + $0x1c] sm:$0xf]
  %v528 = vld [vmem:[%s7 + $0x20] sm:$0xf]
  %v529 = vld [vmem:[%s7 + $0x24] sm:$0xf]
  %v530 = vld [vmem:[%s7 + $0x28] sm:$0xf]
  %v531 = vld [vmem:[%s7 + $0x2c] sm:$0xf]
  %v532 = vld [vmem:[%s7 + $0x30] sm:$0xf]
  %v533 = vld [vmem:[%s7 + $0x34] sm:$0xf]
  %v534 = vld [vmem:[%s7 + $0x38] sm:$0xf]
  %v535 = vld [vmem:[%s7 + $0x3c] sm:$0xf]
  %v536 = vld [vmem:[%s8] sm:$0x1]
  %v537 = vld [vmem:[%s5] sm:$0xff]
  %v538 = vld [vmem:[%s5 + $0x8] sm:$0x1]
  %v539 = vld [vmem:[%s6] sm:$0x1]
  %v540 = vpack.c.bf16 %v494, %v494
  %v542 = vperm.slane %v519, 0
  %v560 = vunpack.c.l.b16 %v503
  %v561 = vunpack.c.l.b16 %v504
  %v562 = vunpack.c.l.b16 %v505
  %v563 = vunpack.c.l.b16 %v506
  %v564 = vunpack.c.l.b16 %v507
  %v565 = vunpack.c.l.b16 %v508
  %v566 = vunpack.c.l.b16 %v509
  %v567 = vunpack.c.l.b16 %v510
  %v568 = vunpack.c.l.b16 %v511
  %v569 = vunpack.c.l.b16 %v512
  %v570 = vunpack.c.l.b16 %v513
  %v571 = vunpack.c.l.b16 %v514
  %v572 = vunpack.c.l.b16 %v515
  %v573 = vunpack.c.l.b16 %v516
  %v574 = vunpack.c.l.b16 %v517
  %v575 = vunpack.c.l.b16 %v518
  %v576 = vpack.c.b16 %v561, %v560
  %v577 = vpack.c.b16 %v563, %v562
  %v578 = vpack.c.b16 %v565, %v564
  %v579 = vpack.c.b16 %v567, %v566
  %v580 = vpack.c.b16 %v569, %v568
  %v581 = vpack.c.b16 %v571, %v570
  %v582 = vpack.c.b16 %v573, %v572
  %v583 = vpack.c.b16 %v575, %v574
  %592 = vmatpush.bf16.msra.mxu0 %v583
  %593 = vmatpush.bf16.msra.mxu0 %v582
  %594 = vmatpush.bf16.msra.mxu0 %v581
  %595 = vmatpush.bf16.msra.mxu0 %v580
  %596 = vmatpush.bf16.msra.mxu0 %v579
  %597 = vmatpush.bf16.msra.mxu0 %v578
  %598 = vmatpush.bf16.msra.mxu0 %v577
  %599 = vmatpush.bf16.msra.mxu0 %v576
  %600 = vmatmul.bf16.gmra.mxu0 %v540
  %v601 = vpop.f32.mrf.mxu0
  %v602 = vadd.f32 %v542, %v601
  %v603 = vpop.f32.mrf.mxu0
  %604 = vdwg.mxu0
  %v605 = vmax.f32 %v602, 0.0
  %v606 = vperm.slane %v537, 4
  %v607 = vmul.f32 %v494, %v606
  %v608 = vadd.f32 %v607, 0.0
  %v609 = vperm.slane %v537, 5
  %v610 = vmul.f32 %v495, %v609
  %v611 = vadd.f32 %v608, %v610
  %v612 = vperm.slane %v537, 7
  %v613 = vmul.f32 %v497, %v612
  %v614 = vadd.f32 %v611, %v613
  %v615 = vperm.slane %v538, 0
  %v616 = vmul.f32 %v498, %v615
  %v617 = vadd.f32 %v614, %v616
  %v619 = vperm.slane %v539, 0
  %v621 = vadd.f32 %v617, %v619
  %v622 = vmax.f32 %v621, 0.0
  %v623 = vpack.c.bf16 %v622, %v622
  %v625 = vperm.slane %v536, 0
  %v643 = vunpack.c.l.b16 %v520
  %v644 = vunpack.c.l.b16 %v521
  %v645 = vunpack.c.l.b16 %v522
  %v646 = vunpack.c.l.b16 %v523
  %v647 = vunpack.c.l.b16 %v524
  %v648 = vunpack.c.l.b16 %v525
  %v649 = vunpack.c.l.b16 %v526
  %v650 = vunpack.c.l.b16 %v527
  %v651 = vunpack.c.l.b16 %v528
  %v652 = vunpack.c.l.b16 %v529
  %v653 = vunpack.c.l.b16 %v530
  %v654 = vunpack.c.l.b16 %v531
  %v655 = vunpack.c.l.b16 %v532
  %v656 = vunpack.c.l.b16 %v533
  %v657 = vunpack.c.l.b16 %v534
  %v658 = vunpack.c.l.b16 %v535
  %v659 = vpack.c.b16 %v644, %v643
  %v660 = vpack.c.b16 %v646, %v645
  %v661 = vpack.c.b16 %v648, %v647
  %v662 = vpack.c.b16 %v650, %v649
  %v663 = vpack.c.b16 %v652, %v651
  %v664 = vpack.c.b16 %v654, %v653
  %v665 = vpack.c.b16 %v656, %v655
  %v666 = vpack.c.b16 %v658, %v657
  %675 = vmatpush.bf16.msra.mxu0 %v666
  %676 = vmatpush.bf16.msra.mxu0 %v665
  %677 = vmatpush.bf16.msra.mxu0 %v664
  %678 = vmatpush.bf16.msra.mxu0 %v663
  %679 = vmatpush.bf16.msra.mxu0 %v662
  %680 = vmatpush.bf16.msra.mxu0 %v661
  %681 = vmatpush.bf16.msra.mxu0 %v660
  %682 = vmatpush.bf16.msra.mxu0 %v659
  %683 = vmatmul.bf16.gmra.mxu0 %v623
  %v684 = vpop.f32.mrf.mxu0
  %v685 = vadd.f32 %v625, %v684
  %v686 = vpop.f32.mrf.mxu0
  %687 = vdwg.mxu0
  %v688 = vmax.f32 %v685, 0.0
  %v689 = vpack.c.bf16 %v605, %v605
  %v690 = vld [vmem:[%s9] sm:$0xf]
  %v691 = vld [vmem:[%s9 + $0x4] sm:$0xf]
  %v692 = vld [vmem:[%s9 + $0x8] sm:$0xf]
  %v693 = vld [vmem:[%s9 + $0xc] sm:$0xf]
  %v694 = vld [vmem:[%s9 + $0x10] sm:$0xf]
  %v695 = vld [vmem:[%s9 + $0x14] sm:$0xf]
  %v696 = vld [vmem:[%s9 + $0x18] sm:$0xf]
  %v697 = vld [vmem:[%s9 + $0x1c] sm:$0xf]
  %v698 = vld [vmem:[%s9 + $0x20] sm:$0xf]
  %v699 = vld [vmem:[%s9 + $0x24] sm:$0xf]
  %v700 = vld [vmem:[%s9 + $0x28] sm:$0xf]
  %v701 = vld [vmem:[%s9 + $0x2c] sm:$0xf]
  %v702 = vld [vmem:[%s9 + $0x30] sm:$0xf]
  %v703 = vld [vmem:[%s9 + $0x34] sm:$0xf]
  %v704 = vld [vmem:[%s9 + $0x38] sm:$0xf]
  %v705 = vld [vmem:[%s9 + $0x3c] sm:$0xf]
  %v706 = vpack.c.bf16 %v688, %v688
  %v707 = vld [vmem:[%s9 + $0x40] sm:$0xf]
  %v708 = vld [vmem:[%s9 + $0x44] sm:$0xf]
  %v709 = vld [vmem:[%s9 + $0x48] sm:$0xf]
  %v710 = vld [vmem:[%s9 + $0x4c] sm:$0xf]
  %v711 = vld [vmem:[%s9 + $0x50] sm:$0xf]
  %v712 = vld [vmem:[%s9 + $0x54] sm:$0xf]
  %v713 = vld [vmem:[%s9 + $0x58] sm:$0xf]
  %v714 = vld [vmem:[%s9 + $0x5c] sm:$0xf]
  %v715 = vld [vmem:[%s9 + $0x60] sm:$0xf]
  %v716 = vld [vmem:[%s9 + $0x64] sm:$0xf]
  %v717 = vld [vmem:[%s9 + $0x68] sm:$0xf]
  %v718 = vld [vmem:[%s9 + $0x6c] sm:$0xf]
  %v719 = vld [vmem:[%s9 + $0x70] sm:$0xf]
  %v720 = vld [vmem:[%s9 + $0x74] sm:$0xf]
  %v721 = vld [vmem:[%s9 + $0x78] sm:$0xf]
  %v722 = vld [vmem:[%s9 + $0x7c] sm:$0xf]
  %v739 = vunpack.c.l.b16 %v707
  %v740 = vunpack.c.l.b16 %v708
  %v741 = vunpack.c.l.b16 %v709
  %v742 = vunpack.c.l.b16 %v710
  %v743 = vunpack.c.l.b16 %v711
  %v744 = vunpack.c.l.b16 %v712
  %v745 = vunpack.c.l.b16 %v713
  %v746 = vunpack.c.l.b16 %v714
  %v747 = vunpack.c.l.b16 %v715
  %v748 = vunpack.c.l.b16 %v716
  %v749 = vunpack.c.l.b16 %v717
  %v750 = vunpack.c.l.b16 %v718
  %v751 = vunpack.c.l.b16 %v719
  %v752 = vunpack.c.l.b16 %v720
  %v753 = vunpack.c.l.b16 %v721
  %v754 = vunpack.c.l.b16 %v722
  %v755 = vpack.c.b16 %v740, %v739
  %v756 = vpack.c.b16 %v742, %v741
  %v757 = vpack.c.b16 %v744, %v743
  %v758 = vpack.c.b16 %v746, %v745
  %v759 = vpack.c.b16 %v748, %v747
  %v760 = vpack.c.b16 %v750, %v749
  %v761 = vpack.c.b16 %v752, %v751
  %v762 = vpack.c.b16 %v754, %v753
  %771 = vmatpush.bf16.msra.mxu0 %v762
  %772 = vmatpush.bf16.msra.mxu0 %v761
  %773 = vmatpush.bf16.msra.mxu0 %v760
  %774 = vmatpush.bf16.msra.mxu0 %v759
  %775 = vmatpush.bf16.msra.mxu0 %v758
  %776 = vmatpush.bf16.msra.mxu0 %v757
  %777 = vmatpush.bf16.msra.mxu0 %v756
  %778 = vmatpush.bf16.msra.mxu0 %v755
  %779 = vmatmul.bf16.gmra.mxu0 %v706
  %v780 = vpop.f32.mrf.mxu0
  %v781 = vadd.f32 0.0, %v780
  %v782 = vpop.f32.mrf.mxu0
  %783 = vdwg.mxu0
  %v800 = vunpack.c.l.b16 %v690
  %v801 = vunpack.c.l.b16 %v691
  %v802 = vunpack.c.l.b16 %v692
  %v803 = vunpack.c.l.b16 %v693
  %v804 = vunpack.c.l.b16 %v694
  %v805 = vunpack.c.l.b16 %v695
  %v806 = vunpack.c.l.b16 %v696
  %v807 = vunpack.c.l.b16 %v697
  %v808 = vunpack.c.l.b16 %v698
  %v809 = vunpack.c.l.b16 %v699
  %v810 = vunpack.c.l.b16 %v700
  %v811 = vunpack.c.l.b16 %v701
  %v812 = vunpack.c.l.b16 %v702
  %v813 = vunpack.c.l.b16 %v703
  %v814 = vunpack.c.l.b16 %v704
  %v815 = vunpack.c.l.b16 %v705
  %v816 = vpack.c.b16 %v801, %v800
  %v817 = vpack.c.b16 %v803, %v802
  %v818 = vpack.c.b16 %v805, %v804
  %v819 = vpack.c.b16 %v807, %v806
  %v820 = vpack.c.b16 %v809, %v808
  %v821 = vpack.c.b16 %v811, %v810
  %v822 = vpack.c.b16 %v813, %v812
  %v823 = vpack.c.b16 %v815, %v814
  %832 = vmatpush.bf16.msra.mxu0 %v823
  %833 = vmatpush.bf16.msra.mxu0 %v822
  %834 = vmatpush.bf16.msra.mxu0 %v821
  %835 = vmatpush.bf16.msra.mxu0 %v820
  %836 = vmatpush.bf16.msra.mxu0 %v819
  %837 = vmatpush.bf16.msra.mxu0 %v818
  %838 = vmatpush.bf16.msra.mxu0 %v817
  %839 = vmatpush.bf16.msra.mxu0 %v816
  %840 = vmatmul.bf16.gmra.mxu0 %v689
  %v841 = vpop.f32.mrf.mxu0
  %v842 = vadd.f32 %v781, %v841
  %v843 = vpop.f32.mrf.mxu0
  %844 = vdwg.mxu0
  %v845 = vpack.c.bf16 %v495, %v495
  %846 = vmatpush.bf16.msra.mxu0 %v583
  %847 = vmatpush.bf16.msra.mxu0 %v582
  %848 = vmatpush.bf16.msra.mxu0 %v581
  %849 = vmatpush.bf16.msra.mxu0 %v580
  %850 = vmatpush.bf16.msra.mxu0 %v579
  %851 = vmatpush.bf16.msra.mxu0 %v578
  %852 = vmatpush.bf16.msra.mxu0 %v577
  %853 = vmatpush.bf16.msra.mxu0 %v576
  %854 = vmatmul.bf16.gmra.mxu0 %v845
  %v855 = vpop.f32.mrf.mxu0
  %v856 = vadd.f32 %v542, %v855
  %v857 = vpop.f32.mrf.mxu0
  %858 = vdwg.mxu0
  %v859 = vmax.f32 %v856, 0.0
  %v860 = vperm.slane %v537, 3
  %v861 = vmul.f32 %v494, %v860
  %v862 = vadd.f32 %v861, 0.0
  %v863 = vmul.f32 %v495, %v606
  %v864 = vadd.f32 %v862, %v863
  %v865 = vmul.f32 %v496, %v609
  %v866 = vadd.f32 %v864, %v865
  %v867 = vperm.slane %v537, 6
  %v868 = vmul.f32 %v497, %v867
  %v869 = vadd.f32 %v866, %v868
  %v870 = vmul.f32 %v498, %v612
  %v871 = vadd.f32 %v869, %v870
  %v872 = vmul.f32 %v499, %v615
  %v873 = vadd.f32 %v871, %v872
  %v874 = vadd.f32 %v873, %v619
  %v875 = vmax.f32 %v874, 0.0
  %v876 = vpack.c.bf16 %v875, %v875
  %877 = vmatpush.bf16.msra.mxu0 %v666
  %878 = vmatpush.bf16.msra.mxu0 %v665
  %879 = vmatpush.bf16.msra.mxu0 %v664
  %880 = vmatpush.bf16.msra.mxu0 %v663
  %881 = vmatpush.bf16.msra.mxu0 %v662
  %882 = vmatpush.bf16.msra.mxu0 %v661
  %883 = vmatpush.bf16.msra.mxu0 %v660
  %884 = vmatpush.bf16.msra.mxu0 %v659
  %885 = vmatmul.bf16.gmra.mxu0 %v876
  %v886 = vpop.f32.mrf.mxu0
  %v887 = vadd.f32 %v625, %v886
  %v888 = vpop.f32.mrf.mxu0
  %889 = vdwg.mxu0
  %v890 = vmax.f32 %v887, 0.0
  %v891 = vpack.c.bf16 %v859, %v859
  %v892 = vld [vmem:[%s9 + $0x80] sm:$0xf]
  %v893 = vld [vmem:[%s9 + $0x84] sm:$0xf]
  %v894 = vld [vmem:[%s9 + $0x88] sm:$0xf]
  %v895 = vld [vmem:[%s9 + $0x8c] sm:$0xf]
  %v896 = vld [vmem:[%s9 + $0x90] sm:$0xf]
  %v897 = vld [vmem:[%s9 + $0x94] sm:$0xf]
  %v898 = vld [vmem:[%s9 + $0x98] sm:$0xf]
  %v899 = vld [vmem:[%s9 + $0x9c] sm:$0xf]
  %v900 = vld [vmem:[%s9 + $0xa0] sm:$0xf]
  %v901 = vld [vmem:[%s9 + $0xa4] sm:$0xf]
  %v902 = vld [vmem:[%s9 + $0xa8] sm:$0xf]
  %v903 = vld [vmem:[%s9 + $0xac] sm:$0xf]
  %v904 = vld [vmem:[%s9 + $0xb0] sm:$0xf]
  %v905 = vld [vmem:[%s9 + $0xb4] sm:$0xf]
  %v906 = vld [vmem:[%s9 + $0xb8] sm:$0xf]
  %v907 = vld [vmem:[%s9 + $0xbc] sm:$0xf]
  %v924 = vunpack.c.l.b16 %v892
  %v925 = vunpack.c.l.b16 %v893
  %v926 = vunpack.c.l.b16 %v894
  %v927 = vunpack.c.l.b16 %v895
  %v928 = vunpack.c.l.b16 %v896
  %v929 = vunpack.c.l.b16 %v897
  %v930 = vunpack.c.l.b16 %v898
  %v931 = vunpack.c.l.b16 %v899
  %v932 = vunpack.c.l.b16 %v900
  %v933 = vunpack.c.l.b16 %v901
  %v934 = vunpack.c.l.b16 %v902
  %v935 = vunpack.c.l.b16 %v903
  %v936 = vunpack.c.l.b16 %v904
  %v937 = vunpack.c.l.b16 %v905
  %v938 = vunpack.c.l.b16 %v906
  %v939 = vunpack.c.l.b16 %v907
  %v940 = vpack.c.b16 %v925, %v924
  %v941 = vpack.c.b16 %v927, %v926
  %v942 = vpack.c.b16 %v929, %v928
  %v943 = vpack.c.b16 %v931, %v930
  %v944 = vpack.c.b16 %v933, %v932
  %v945 = vpack.c.b16 %v935, %v934
  %v946 = vpack.c.b16 %v937, %v936
  %v947 = vpack.c.b16 %v939, %v938
  %956 = vmatpush.bf16.msra.mxu0 %v947
  %957 = vmatpush.bf16.msra.mxu0 %v946
  %958 = vmatpush.bf16.msra.mxu0 %v945
  %959 = vmatpush.bf16.msra.mxu0 %v944
  %960 = vmatpush.bf16.msra.mxu0 %v943
  %961 = vmatpush.bf16.msra.mxu0 %v942
  %962 = vmatpush.bf16.msra.mxu0 %v941
  %963 = vmatpush.bf16.msra.mxu0 %v940
  %964 = vmatmul.bf16.gmra.mxu0 %v891
  %v965 = vpop.f32.mrf.mxu0
  %v966 = vadd.f32 0.0, %v965
  %v967 = vpop.f32.mrf.mxu0
  %968 = vdwg.mxu0
  %v969 = vadd.f32 %v842, %v966
  %v970 = vpack.c.bf16 %v890, %v890
  %v971 = vld [vmem:[%s9 + $0xc0] sm:$0xf]
  %v972 = vld [vmem:[%s9 + $0xc4] sm:$0xf]
  %v973 = vld [vmem:[%s9 + $0xc8] sm:$0xf]
  %v974 = vld [vmem:[%s9 + $0xcc] sm:$0xf]
  %v975 = vld [vmem:[%s9 + $0xd0] sm:$0xf]
  %v976 = vld [vmem:[%s9 + $0xd4] sm:$0xf]
  %v977 = vld [vmem:[%s9 + $0xd8] sm:$0xf]
  %v978 = vld [vmem:[%s9 + $0xdc] sm:$0xf]
  %v979 = vld [vmem:[%s9 + $0xe0] sm:$0xf]
  %v980 = vld [vmem:[%s9 + $0xe4] sm:$0xf]
  %v981 = vld [vmem:[%s9 + $0xe8] sm:$0xf]
  %v982 = vld [vmem:[%s9 + $0xec] sm:$0xf]
  %v983 = vld [vmem:[%s9 + $0xf0] sm:$0xf]
  %v984 = vld [vmem:[%s9 + $0xf4] sm:$0xf]
  %v985 = vld [vmem:[%s9 + $0xf8] sm:$0xf]
  %v986 = vld [vmem:[%s9 + $0xfc] sm:$0xf]
  %v1003 = vunpack.c.l.b16 %v971
  %v1004 = vunpack.c.l.b16 %v972
  %v1005 = vunpack.c.l.b16 %v973
  %v1006 = vunpack.c.l.b16 %v974
  %v1007 = vunpack.c.l.b16 %v975
  %v1008 = vunpack.c.l.b16 %v976
  %v1009 = vunpack.c.l.b16 %v977
  %v1010 = vunpack.c.l.b16 %v978
  %v1011 = vunpack.c.l.b16 %v979
  %v1012 = vunpack.c.l.b16 %v980
  %v1013 = vunpack.c.l.b16 %v981
  %v1014 = vunpack.c.l.b16 %v982
  %v1015 = vunpack.c.l.b16 %v983
  %v1016 = vunpack.c.l.b16 %v984
  %v1017 = vunpack.c.l.b16 %v985
  %v1018 = vunpack.c.l.b16 %v986
  %v1019 = vpack.c.b16 %v1004, %v1003
  %v1020 = vpack.c.b16 %v1006, %v1005
  %v1021 = vpack.c.b16 %v1008, %v1007
  %v1022 = vpack.c.b16 %v1010, %v1009
  %v1023 = vpack.c.b16 %v1012, %v1011
  %v1024 = vpack.c.b16 %v1014, %v1013
  %v1025 = vpack.c.b16 %v1016, %v1015
  %v1026 = vpack.c.b16 %v1018, %v1017
  %1035 = vmatpush.bf16.msra.mxu0 %v1026
  %1036 = vmatpush.bf16.msra.mxu0 %v1025
  %1037 = vmatpush.bf16.msra.mxu0 %v1024
  %1038 = vmatpush.bf16.msra.mxu0 %v1023
  %1039 = vmatpush.bf16.msra.mxu0 %v1022
  %1040 = vmatpush.bf16.msra.mxu0 %v1021
  %1041 = vmatpush.bf16.msra.mxu0 %v1020
  %1042 = vmatpush.bf16.msra.mxu0 %v1019
  %1043 = vmatmul.bf16.gmra.mxu0 %v970
  %v1044 = vpop.f32.mrf.mxu0
  %v1045 = vadd.f32 0.0, %v1044
  %v1046 = vpop.f32.mrf.mxu0
  %1047 = vdwg.mxu0
  %v1048 = vadd.f32 %v969, %v1045
  %v1049 = vpack.c.bf16 %v496, %v496
  %1050 = vmatpush.bf16.msra.mxu0 %v583
  %1051 = vmatpush.bf16.msra.mxu0 %v582
  %1052 = vmatpush.bf16.msra.mxu0 %v581
  %1053 = vmatpush.bf16.msra.mxu0 %v580
  %1054 = vmatpush.bf16.msra.mxu0 %v579
  %1055 = vmatpush.bf16.msra.mxu0 %v578
  %1056 = vmatpush.bf16.msra.mxu0 %v577
  %1057 = vmatpush.bf16.msra.mxu0 %v576
  %1058 = vmatmul.bf16.gmra.mxu0 %v1049
  %v1059 = vpop.f32.mrf.mxu0
  %v1060 = vadd.f32 %v542, %v1059
  %v1061 = vpop.f32.mrf.mxu0
  %1062 = vdwg.mxu0
  %v1063 = vmax.f32 %v1060, 0.0
  %v1064 = vmul.f32 %v495, %v860
  %v1065 = vadd.f32 %v1064, 0.0
  %v1066 = vmul.f32 %v496, %v606
  %v1067 = vadd.f32 %v1065, %v1066
  %v1068 = vmul.f32 %v498, %v867
  %v1069 = vadd.f32 %v1067, %v1068
  %v1070 = vmul.f32 %v499, %v612
  %v1071 = vadd.f32 %v1069, %v1070
  %v1072 = vadd.f32 %v1071, %v619
  %v1073 = vmax.f32 %v1072, 0.0
  %v1074 = vpack.c.bf16 %v1073, %v1073
  %1075 = vmatpush.bf16.msra.mxu0 %v666
  %1076 = vmatpush.bf16.msra.mxu0 %v665
  %1077 = vmatpush.bf16.msra.mxu0 %v664
  %1078 = vmatpush.bf16.msra.mxu0 %v663
  %1079 = vmatpush.bf16.msra.mxu0 %v662
  %1080 = vmatpush.bf16.msra.mxu0 %v661
  %1081 = vmatpush.bf16.msra.mxu0 %v660
  %1082 = vmatpush.bf16.msra.mxu0 %v659
  %1083 = vmatmul.bf16.gmra.mxu0 %v1074
  %v1084 = vpop.f32.mrf.mxu0
  %v1085 = vadd.f32 %v625, %v1084
  %v1086 = vpop.f32.mrf.mxu0
  %1087 = vdwg.mxu0
  %v1088 = vmax.f32 %v1085, 0.0
  %v1089 = vpack.c.bf16 %v1063, %v1063
  %v1090 = vld [vmem:[%s9 + $0x100] sm:$0xf]
  %v1091 = vld [vmem:[%s9 + $0x104] sm:$0xf]
  %v1092 = vld [vmem:[%s9 + $0x108] sm:$0xf]
  %v1093 = vld [vmem:[%s9 + $0x10c] sm:$0xf]
  %v1094 = vld [vmem:[%s9 + $0x110] sm:$0xf]
  %v1095 = vld [vmem:[%s9 + $0x114] sm:$0xf]
  %v1096 = vld [vmem:[%s9 + $0x118] sm:$0xf]
  %v1097 = vld [vmem:[%s9 + $0x11c] sm:$0xf]
  %v1098 = vld [vmem:[%s9 + $0x120] sm:$0xf]
  %v1099 = vld [vmem:[%s9 + $0x124] sm:$0xf]
  %v1100 = vld [vmem:[%s9 + $0x128] sm:$0xf]
  %v1101 = vld [vmem:[%s9 + $0x12c] sm:$0xf]
  %v1102 = vld [vmem:[%s9 + $0x130] sm:$0xf]
  %v1103 = vld [vmem:[%s9 + $0x134] sm:$0xf]
  %v1104 = vld [vmem:[%s9 + $0x138] sm:$0xf]
  %v1105 = vld [vmem:[%s9 + $0x13c] sm:$0xf]
  %v1122 = vunpack.c.l.b16 %v1090
  %v1123 = vunpack.c.l.b16 %v1091
  %v1124 = vunpack.c.l.b16 %v1092
  %v1125 = vunpack.c.l.b16 %v1093
  %v1126 = vunpack.c.l.b16 %v1094
  %v1127 = vunpack.c.l.b16 %v1095
  %v1128 = vunpack.c.l.b16 %v1096
  %v1129 = vunpack.c.l.b16 %v1097
  %v1130 = vunpack.c.l.b16 %v1098
  %v1131 = vunpack.c.l.b16 %v1099
  %v1132 = vunpack.c.l.b16 %v1100
  %v1133 = vunpack.c.l.b16 %v1101
  %v1134 = vunpack.c.l.b16 %v1102
  %v1135 = vunpack.c.l.b16 %v1103
  %v1136 = vunpack.c.l.b16 %v1104
  %v1137 = vunpack.c.l.b16 %v1105
  %v1138 = vpack.c.b16 %v1123, %v1122
  %v1139 = vpack.c.b16 %v1125, %v1124
  %v1140 = vpack.c.b16 %v1127, %v1126
  %v1141 = vpack.c.b16 %v1129, %v1128
  %v1142 = vpack.c.b16 %v1131, %v1130
  %v1143 = vpack.c.b16 %v1133, %v1132
  %v1144 = vpack.c.b16 %v1135, %v1134
  %v1145 = vpack.c.b16 %v1137, %v1136
  %1154 = vmatpush.bf16.msra.mxu0 %v1145
  %1155 = vmatpush.bf16.msra.mxu0 %v1144
  %1156 = vmatpush.bf16.msra.mxu0 %v1143
  %1157 = vmatpush.bf16.msra.mxu0 %v1142
  %1158 = vmatpush.bf16.msra.mxu0 %v1141
  %1159 = vmatpush.bf16.msra.mxu0 %v1140
  %1160 = vmatpush.bf16.msra.mxu0 %v1139
  %1161 = vmatpush.bf16.msra.mxu0 %v1138
  %1162 = vmatmul.bf16.gmra.mxu0 %v1089
  %v1163 = vpop.f32.mrf.mxu0
  %v1164 = vadd.f32 0.0, %v1163
  %v1165 = vpop.f32.mrf.mxu0
  %1166 = vdwg.mxu0
  %v1167 = vadd.f32 %v1048, %v1164
  %v1168 = vpack.c.bf16 %v1088, %v1088
  %v1169 = vld [vmem:[%s9 + $0x140] sm:$0xf]
  %v1170 = vld [vmem:[%s9 + $0x144] sm:$0xf]
  %v1171 = vld [vmem:[%s9 + $0x148] sm:$0xf]
  %v1172 = vld [vmem:[%s9 + $0x14c] sm:$0xf]
  %v1173 = vld [vmem:[%s9 + $0x150] sm:$0xf]
  %v1174 = vld [vmem:[%s9 + $0x154] sm:$0xf]
  %v1175 = vld [vmem:[%s9 + $0x158] sm:$0xf]
  %v1176 = vld [vmem:[%s9 + $0x15c] sm:$0xf]
  %v1177 = vld [vmem:[%s9 + $0x160] sm:$0xf]
  %v1178 = vld [vmem:[%s9 + $0x164] sm:$0xf]
  %v1179 = vld [vmem:[%s9 + $0x168] sm:$0xf]
  %v1180 = vld [vmem:[%s9 + $0x16c] sm:$0xf]
  %v1181 = vld [vmem:[%s9 + $0x170] sm:$0xf]
  %v1182 = vld [vmem:[%s9 + $0x174] sm:$0xf]
  %v1183 = vld [vmem:[%s9 + $0x178] sm:$0xf]
  %v1184 = vld [vmem:[%s9 + $0x17c] sm:$0xf]
  %v1201 = vunpack.c.l.b16 %v1169
  %v1202 = vunpack.c.l.b16 %v1170
  %v1203 = vunpack.c.l.b16 %v1171
  %v1204 = vunpack.c.l.b16 %v1172
  %v1205 = vunpack.c.l.b16 %v1173
  %v1206 = vunpack.c.l.b16 %v1174
  %v1207 = vunpack.c.l.b16 %v1175
  %v1208 = vunpack.c.l.b16 %v1176
  %v1209 = vunpack.c.l.b16 %v1177
  %v1210 = vunpack.c.l.b16 %v1178
  %v1211 = vunpack.c.l.b16 %v1179
  %v1212 = vunpack.c.l.b16 %v1180
  %v1213 = vunpack.c.l.b16 %v1181
  %v1214 = vunpack.c.l.b16 %v1182
  %v1215 = vunpack.c.l.b16 %v1183
  %v1216 = vunpack.c.l.b16 %v1184
  %v1217 = vpack.c.b16 %v1202, %v1201
  %v1218 = vpack.c.b16 %v1204, %v1203
  %v1219 = vpack.c.b16 %v1206, %v1205
  %v1220 = vpack.c.b16 %v1208, %v1207
  %v1221 = vpack.c.b16 %v1210, %v1209
  %v1222 = vpack.c.b16 %v1212, %v1211
  %v1223 = vpack.c.b16 %v1214, %v1213
  %v1224 = vpack.c.b16 %v1216, %v1215
  %1233 = vmatpush.bf16.msra.mxu0 %v1224
  %1234 = vmatpush.bf16.msra.mxu0 %v1223
  %1235 = vmatpush.bf16.msra.mxu0 %v1222
  %1236 = vmatpush.bf16.msra.mxu0 %v1221
  %1237 = vmatpush.bf16.msra.mxu0 %v1220
  %1238 = vmatpush.bf16.msra.mxu0 %v1219
  %1239 = vmatpush.bf16.msra.mxu0 %v1218
  %1240 = vmatpush.bf16.msra.mxu0 %v1217
  %1241 = vmatmul.bf16.gmra.mxu0 %v1168
  %v1242 = vpop.f32.mrf.mxu0
  %v1243 = vadd.f32 0.0, %v1242
  %v1244 = vpop.f32.mrf.mxu0
  %1245 = vdwg.mxu0
  %v1246 = vadd.f32 %v1167, %v1243
  %v1247 = vpack.c.bf16 %v497, %v497
  %1248 = vmatpush.bf16.msra.mxu0 %v583
  %1249 = vmatpush.bf16.msra.mxu0 %v582
  %1250 = vmatpush.bf16.msra.mxu0 %v581
  %1251 = vmatpush.bf16.msra.mxu0 %v580
  %1252 = vmatpush.bf16.msra.mxu0 %v579
  %1253 = vmatpush.bf16.msra.mxu0 %v578
  %1254 = vmatpush.bf16.msra.mxu0 %v577
  %1255 = vmatpush.bf16.msra.mxu0 %v576
  %1256 = vmatmul.bf16.gmra.mxu0 %v1247
  %v1257 = vpop.f32.mrf.mxu0
  %v1258 = vadd.f32 %v542, %v1257
  %v1259 = vpop.f32.mrf.mxu0
  %1260 = vdwg.mxu0
  %v1261 = vmax.f32 %v1258, 0.0
  %v1262 = vperm.slane %v537, 1
  %v1263 = vmul.f32 %v494, %v1262
  %v1264 = vadd.f32 %v1263, 0.0
  %v1265 = vperm.slane %v537, 2
  %v1266 = vmul.f32 %v495, %v1265
  %v1267 = vadd.f32 %v1264, %v1266
  %v1268 = vmul.f32 %v497, %v606
  %v1269 = vadd.f32 %v1267, %v1268
  %v1270 = vmul.f32 %v498, %v609
  %v1271 = vadd.f32 %v1269, %v1270
  %v1272 = vmul.f32 %v500, %v612
  %v1273 = vadd.f32 %v1271, %v1272
  %v1274 = vmul.f32 %v501, %v615
  %v1275 = vadd.f32 %v1273, %v1274
  %v1276 = vadd.f32 %v1275, %v619
  %v1277 = vmax.f32 %v1276, 0.0
  %v1278 = vpack.c.bf16 %v1277, %v1277
  %1279 = vmatpush.bf16.msra.mxu0 %v666
  %1280 = vmatpush.bf16.msra.mxu0 %v665
  %1281 = vmatpush.bf16.msra.mxu0 %v664
  %1282 = vmatpush.bf16.msra.mxu0 %v663
  %1283 = vmatpush.bf16.msra.mxu0 %v662
  %1284 = vmatpush.bf16.msra.mxu0 %v661
  %1285 = vmatpush.bf16.msra.mxu0 %v660
  %1286 = vmatpush.bf16.msra.mxu0 %v659
  %1287 = vmatmul.bf16.gmra.mxu0 %v1278
  %v1288 = vpop.f32.mrf.mxu0
  %v1289 = vadd.f32 %v625, %v1288
  %v1290 = vpop.f32.mrf.mxu0
  %1291 = vdwg.mxu0
  %v1292 = vmax.f32 %v1289, 0.0
  %v1293 = vpack.c.bf16 %v1261, %v1261
  %v1294 = vld [vmem:[%s9 + $0x180] sm:$0xf]
  %v1295 = vld [vmem:[%s9 + $0x184] sm:$0xf]
  %v1296 = vld [vmem:[%s9 + $0x188] sm:$0xf]
  %v1297 = vld [vmem:[%s9 + $0x18c] sm:$0xf]
  %v1298 = vld [vmem:[%s9 + $0x190] sm:$0xf]
  %v1299 = vld [vmem:[%s9 + $0x194] sm:$0xf]
  %v1300 = vld [vmem:[%s9 + $0x198] sm:$0xf]
  %v1301 = vld [vmem:[%s9 + $0x19c] sm:$0xf]
  %v1302 = vld [vmem:[%s9 + $0x1a0] sm:$0xf]
  %v1303 = vld [vmem:[%s9 + $0x1a4] sm:$0xf]
  %v1304 = vld [vmem:[%s9 + $0x1a8] sm:$0xf]
  %v1305 = vld [vmem:[%s9 + $0x1ac] sm:$0xf]
  %v1306 = vld [vmem:[%s9 + $0x1b0] sm:$0xf]
  %v1307 = vld [vmem:[%s9 + $0x1b4] sm:$0xf]
  %v1308 = vld [vmem:[%s9 + $0x1b8] sm:$0xf]
  %v1309 = vld [vmem:[%s9 + $0x1bc] sm:$0xf]
  %v1326 = vunpack.c.l.b16 %v1294
  %v1327 = vunpack.c.l.b16 %v1295
  %v1328 = vunpack.c.l.b16 %v1296
  %v1329 = vunpack.c.l.b16 %v1297
  %v1330 = vunpack.c.l.b16 %v1298
  %v1331 = vunpack.c.l.b16 %v1299
  %v1332 = vunpack.c.l.b16 %v1300
  %v1333 = vunpack.c.l.b16 %v1301
  %v1334 = vunpack.c.l.b16 %v1302
  %v1335 = vunpack.c.l.b16 %v1303
  %v1336 = vunpack.c.l.b16 %v1304
  %v1337 = vunpack.c.l.b16 %v1305
  %v1338 = vunpack.c.l.b16 %v1306
  %v1339 = vunpack.c.l.b16 %v1307
  %v1340 = vunpack.c.l.b16 %v1308
  %v1341 = vunpack.c.l.b16 %v1309
  %v1342 = vpack.c.b16 %v1327, %v1326
  %v1343 = vpack.c.b16 %v1329, %v1328
  %v1344 = vpack.c.b16 %v1331, %v1330
  %v1345 = vpack.c.b16 %v1333, %v1332
  %v1346 = vpack.c.b16 %v1335, %v1334
  %v1347 = vpack.c.b16 %v1337, %v1336
  %v1348 = vpack.c.b16 %v1339, %v1338
  %v1349 = vpack.c.b16 %v1341, %v1340
  %1358 = vmatpush.bf16.msra.mxu0 %v1349
  %1359 = vmatpush.bf16.msra.mxu0 %v1348
  %1360 = vmatpush.bf16.msra.mxu0 %v1347
  %1361 = vmatpush.bf16.msra.mxu0 %v1346
  %1362 = vmatpush.bf16.msra.mxu0 %v1345
  %1363 = vmatpush.bf16.msra.mxu0 %v1344
  %1364 = vmatpush.bf16.msra.mxu0 %v1343
  %1365 = vmatpush.bf16.msra.mxu0 %v1342
  %1366 = vmatmul.bf16.gmra.mxu0 %v1293
  %v1367 = vpop.f32.mrf.mxu0
  %v1368 = vadd.f32 0.0, %v1367
  %v1369 = vpop.f32.mrf.mxu0
  %1370 = vdwg.mxu0
  %v1371 = vadd.f32 %v1246, %v1368
  %v1372 = vpack.c.bf16 %v1292, %v1292
  %v1373 = vld [vmem:[%s9 + $0x1c0] sm:$0xf]
  %v1374 = vld [vmem:[%s9 + $0x1c4] sm:$0xf]
  %v1375 = vld [vmem:[%s9 + $0x1c8] sm:$0xf]
  %v1376 = vld [vmem:[%s9 + $0x1cc] sm:$0xf]
  %v1377 = vld [vmem:[%s9 + $0x1d0] sm:$0xf]
  %v1378 = vld [vmem:[%s9 + $0x1d4] sm:$0xf]
  %v1379 = vld [vmem:[%s9 + $0x1d8] sm:$0xf]
  %v1380 = vld [vmem:[%s9 + $0x1dc] sm:$0xf]
  %v1381 = vld [vmem:[%s9 + $0x1e0] sm:$0xf]
  %v1382 = vld [vmem:[%s9 + $0x1e4] sm:$0xf]
  %v1383 = vld [vmem:[%s9 + $0x1e8] sm:$0xf]
  %v1384 = vld [vmem:[%s9 + $0x1ec] sm:$0xf]
  %v1385 = vld [vmem:[%s9 + $0x1f0] sm:$0xf]
  %v1386 = vld [vmem:[%s9 + $0x1f4] sm:$0xf]
  %v1387 = vld [vmem:[%s9 + $0x1f8] sm:$0xf]
  %v1388 = vld [vmem:[%s9 + $0x1fc] sm:$0xf]
  %v1405 = vunpack.c.l.b16 %v1373
  %v1406 = vunpack.c.l.b16 %v1374
  %v1407 = vunpack.c.l.b16 %v1375
  %v1408 = vunpack.c.l.b16 %v1376
  %v1409 = vunpack.c.l.b16 %v1377
  %v1410 = vunpack.c.l.b16 %v1378
  %v1411 = vunpack.c.l.b16 %v1379
  %v1412 = vunpack.c.l.b16 %v1380
  %v1413 = vunpack.c.l.b16 %v1381
  %v1414 = vunpack.c.l.b16 %v1382
  %v1415 = vunpack.c.l.b16 %v1383
  %v1416 = vunpack.c.l.b16 %v1384
  %v1417 = vunpack.c.l.b16 %v1385
  %v1418 = vunpack.c.l.b16 %v1386
  %v1419 = vunpack.c.l.b16 %v1387
  %v1420 = vunpack.c.l.b16 %v1388
  %v1421 = vpack.c.b16 %v1406, %v1405
  %v1422 = vpack.c.b16 %v1408, %v1407
  %v1423 = vpack.c.b16 %v1410, %v1409
  %v1424 = vpack.c.b16 %v1412, %v1411
  %v1425 = vpack.c.b16 %v1414, %v1413
  %v1426 = vpack.c.b16 %v1416, %v1415
  %v1427 = vpack.c.b16 %v1418, %v1417
  %v1428 = vpack.c.b16 %v1420, %v1419
  %1437 = vmatpush.bf16.msra.mxu0 %v1428
  %1438 = vmatpush.bf16.msra.mxu0 %v1427
  %1439 = vmatpush.bf16.msra.mxu0 %v1426
  %1440 = vmatpush.bf16.msra.mxu0 %v1425
  %1441 = vmatpush.bf16.msra.mxu0 %v1424
  %1442 = vmatpush.bf16.msra.mxu0 %v1423
  %1443 = vmatpush.bf16.msra.mxu0 %v1422
  %1444 = vmatpush.bf16.msra.mxu0 %v1421
  %1445 = vmatmul.bf16.gmra.mxu0 %v1372
  %v1446 = vpop.f32.mrf.mxu0
  %v1447 = vadd.f32 0.0, %v1446
  %v1448 = vpop.f32.mrf.mxu0
  %1449 = vdwg.mxu0
  %v1450 = vadd.f32 %v1371, %v1447
  %v1451 = vpack.c.bf16 %v498, %v498
  %1452 = vmatpush.bf16.msra.mxu0 %v583
  %1453 = vmatpush.bf16.msra.mxu0 %v582
  %1454 = vmatpush.bf16.msra.mxu0 %v581
  %1455 = vmatpush.bf16.msra.mxu0 %v580
  %1456 = vmatpush.bf16.msra.mxu0 %v579
  %1457 = vmatpush.bf16.msra.mxu0 %v578
  %1458 = vmatpush.bf16.msra.mxu0 %v577
  %1459 = vmatpush.bf16.msra.mxu0 %v576
  %1460 = vmatmul.bf16.gmra.mxu0 %v1451
  %v1461 = vpop.f32.mrf.mxu0
  %v1462 = vadd.f32 %v542, %v1461
  %v1463 = vpop.f32.mrf.mxu0
  %1464 = vdwg.mxu0
  %v1465 = vmax.f32 %v1462, 0.0
  %v1466 = vperm.slane %v537, 0
  %v1467 = vmul.f32 %v494, %v1466
  %v1468 = vadd.f32 %v1467, 0.0
  %v1469 = vmul.f32 %v495, %v1262
  %v1470 = vadd.f32 %v1468, %v1469
  %v1471 = vmul.f32 %v496, %v1265
  %v1472 = vadd.f32 %v1470, %v1471
  %v1473 = vmul.f32 %v497, %v860
  %v1474 = vadd.f32 %v1472, %v1473
  %v1475 = vmul.f32 %v498, %v606
  %v1476 = vadd.f32 %v1474, %v1475
  %v1477 = vmul.f32 %v499, %v609
  %v1478 = vadd.f32 %v1476, %v1477
  %v1479 = vmul.f32 %v500, %v867
  %v1480 = vadd.f32 %v1478, %v1479
  %v1481 = vmul.f32 %v501, %v612
  %v1482 = vadd.f32 %v1480, %v1481
  %v1483 = vmul.f32 %v502, %v615
  %v1484 = vadd.f32 %v1482, %v1483
  %v1485 = vadd.f32 %v1484, %v619
  %v1486 = vmax.f32 %v1485, 0.0
  %v1487 = vpack.c.bf16 %v1486, %v1486
  %1488 = vmatpush.bf16.msra.mxu0 %v666
  %1489 = vmatpush.bf16.msra.mxu0 %v665
  %1490 = vmatpush.bf16.msra.mxu0 %v664
  %1491 = vmatpush.bf16.msra.mxu0 %v663
  %1492 = vmatpush.bf16.msra.mxu0 %v662
  %1493 = vmatpush.bf16.msra.mxu0 %v661
  %1494 = vmatpush.bf16.msra.mxu0 %v660
  %1495 = vmatpush.bf16.msra.mxu0 %v659
  %1496 = vmatmul.bf16.gmra.mxu0 %v1487
  %v1497 = vpop.f32.mrf.mxu0
  %v1498 = vadd.f32 %v625, %v1497
  %v1499 = vpop.f32.mrf.mxu0
  %1500 = vdwg.mxu0
  %v1501 = vmax.f32 %v1498, 0.0
  %v1502 = vpack.c.bf16 %v1465, %v1465
  %v1503 = vld [vmem:[%s9 + $0x200] sm:$0xf]
  %v1504 = vld [vmem:[%s9 + $0x204] sm:$0xf]
  %v1505 = vld [vmem:[%s9 + $0x208] sm:$0xf]
  %v1506 = vld [vmem:[%s9 + $0x20c] sm:$0xf]
  %v1507 = vld [vmem:[%s9 + $0x210] sm:$0xf]
  %v1508 = vld [vmem:[%s9 + $0x214] sm:$0xf]
  %v1509 = vld [vmem:[%s9 + $0x218] sm:$0xf]
  %v1510 = vld [vmem:[%s9 + $0x21c] sm:$0xf]
  %v1511 = vld [vmem:[%s9 + $0x220] sm:$0xf]
  %v1512 = vld [vmem:[%s9 + $0x224] sm:$0xf]
  %v1513 = vld [vmem:[%s9 + $0x228] sm:$0xf]
  %v1514 = vld [vmem:[%s9 + $0x22c] sm:$0xf]
  %v1515 = vld [vmem:[%s9 + $0x230] sm:$0xf]
  %v1516 = vld [vmem:[%s9 + $0x234] sm:$0xf]
  %v1517 = vld [vmem:[%s9 + $0x238] sm:$0xf]
  %v1518 = vld [vmem:[%s9 + $0x23c] sm:$0xf]
  %v1535 = vunpack.c.l.b16 %v1503
  %v1536 = vunpack.c.l.b16 %v1504
  %v1537 = vunpack.c.l.b16 %v1505
  %v1538 = vunpack.c.l.b16 %v1506
  %v1539 = vunpack.c.l.b16 %v1507
  %v1540 = vunpack.c.l.b16 %v1508
  %v1541 = vunpack.c.l.b16 %v1509
  %v1542 = vunpack.c.l.b16 %v1510
  %v1543 = vunpack.c.l.b16 %v1511
  %v1544 = vunpack.c.l.b16 %v1512
  %v1545 = vunpack.c.l.b16 %v1513
  %v1546 = vunpack.c.l.b16 %v1514
  %v1547 = vunpack.c.l.b16 %v1515
  %v1548 = vunpack.c.l.b16 %v1516
  %v1549 = vunpack.c.l.b16 %v1517
  %v1550 = vunpack.c.l.b16 %v1518
  %v1551 = vpack.c.b16 %v1536, %v1535
  %v1552 = vpack.c.b16 %v1538, %v1537
  %v1553 = vpack.c.b16 %v1540, %v1539
  %v1554 = vpack.c.b16 %v1542, %v1541
  %v1555 = vpack.c.b16 %v1544, %v1543
  %v1556 = vpack.c.b16 %v1546, %v1545
  %v1557 = vpack.c.b16 %v1548, %v1547
  %v1558 = vpack.c.b16 %v1550, %v1549
  %1567 = vmatpush.bf16.msra.mxu0 %v1558
  %1568 = vmatpush.bf16.msra.mxu0 %v1557
  %1569 = vmatpush.bf16.msra.mxu0 %v1556
  %1570 = vmatpush.bf16.msra.mxu0 %v1555
  %1571 = vmatpush.bf16.msra.mxu0 %v1554
  %1572 = vmatpush.bf16.msra.mxu0 %v1553
  %1573 = vmatpush.bf16.msra.mxu0 %v1552
  %1574 = vmatpush.bf16.msra.mxu0 %v1551
  %1575 = vmatmul.bf16.gmra.mxu0 %v1502
  %v1576 = vpop.f32.mrf.mxu0
  %v1577 = vadd.f32 0.0, %v1576
  %v1578 = vpop.f32.mrf.mxu0
  %1579 = vdwg.mxu0
  %v1580 = vadd.f32 %v1450, %v1577
  %v1581 = vpack.c.bf16 %v1501, %v1501
  %v1582 = vld [vmem:[%s9 + $0x240] sm:$0xf]
  %v1583 = vld [vmem:[%s9 + $0x244] sm:$0xf]
  %v1584 = vld [vmem:[%s9 + $0x248] sm:$0xf]
  %v1585 = vld [vmem:[%s9 + $0x24c] sm:$0xf]
  %v1586 = vld [vmem:[%s9 + $0x250] sm:$0xf]
  %v1587 = vld [vmem:[%s9 + $0x254] sm:$0xf]
  %v1588 = vld [vmem:[%s9 + $0x258] sm:$0xf]
  %v1589 = vld [vmem:[%s9 + $0x25c] sm:$0xf]
  %v1590 = vld [vmem:[%s9 + $0x260] sm:$0xf]
  %v1591 = vld [vmem:[%s9 + $0x264] sm:$0xf]
  %v1592 = vld [vmem:[%s9 + $0x268] sm:$0xf]
  %v1593 = vld [vmem:[%s9 + $0x26c] sm:$0xf]
  %v1594 = vld [vmem:[%s9 + $0x270] sm:$0xf]
  %v1595 = vld [vmem:[%s9 + $0x274] sm:$0xf]
  %v1596 = vld [vmem:[%s9 + $0x278] sm:$0xf]
  %v1597 = vld [vmem:[%s9 + $0x27c] sm:$0xf]
  %v1614 = vunpack.c.l.b16 %v1582
  %v1615 = vunpack.c.l.b16 %v1583
  %v1616 = vunpack.c.l.b16 %v1584
  %v1617 = vunpack.c.l.b16 %v1585
  %v1618 = vunpack.c.l.b16 %v1586
  %v1619 = vunpack.c.l.b16 %v1587
  %v1620 = vunpack.c.l.b16 %v1588
  %v1621 = vunpack.c.l.b16 %v1589
  %v1622 = vunpack.c.l.b16 %v1590
  %v1623 = vunpack.c.l.b16 %v1591
  %v1624 = vunpack.c.l.b16 %v1592
  %v1625 = vunpack.c.l.b16 %v1593
  %v1626 = vunpack.c.l.b16 %v1594
  %v1627 = vunpack.c.l.b16 %v1595
  %v1628 = vunpack.c.l.b16 %v1596
  %v1629 = vunpack.c.l.b16 %v1597
  %v1630 = vpack.c.b16 %v1615, %v1614
  %v1631 = vpack.c.b16 %v1617, %v1616
  %v1632 = vpack.c.b16 %v1619, %v1618
  %v1633 = vpack.c.b16 %v1621, %v1620
  %v1634 = vpack.c.b16 %v1623, %v1622
  %v1635 = vpack.c.b16 %v1625, %v1624
  %v1636 = vpack.c.b16 %v1627, %v1626
  %v1637 = vpack.c.b16 %v1629, %v1628
  %1646 = vmatpush.bf16.msra.mxu0 %v1637
  %1647 = vmatpush.bf16.msra.mxu0 %v1636
  %1648 = vmatpush.bf16.msra.mxu0 %v1635
  %1649 = vmatpush.bf16.msra.mxu0 %v1634
  %1650 = vmatpush.bf16.msra.mxu0 %v1633
  %1651 = vmatpush.bf16.msra.mxu0 %v1632
  %1652 = vmatpush.bf16.msra.mxu0 %v1631
  %1653 = vmatpush.bf16.msra.mxu0 %v1630
  %1654 = vmatmul.bf16.gmra.mxu0 %v1581
  %v1655 = vpop.f32.mrf.mxu0
  %v1656 = vadd.f32 0.0, %v1655
  %v1657 = vpop.f32.mrf.mxu0
  %1658 = vdwg.mxu0
  %v1659 = vadd.f32 %v1580, %v1656
  %v1660 = vpack.c.bf16 %v499, %v499
  %1661 = vmatpush.bf16.msra.mxu0 %v583
  %1662 = vmatpush.bf16.msra.mxu0 %v582
  %1663 = vmatpush.bf16.msra.mxu0 %v581
  %1664 = vmatpush.bf16.msra.mxu0 %v580
  %1665 = vmatpush.bf16.msra.mxu0 %v579
  %1666 = vmatpush.bf16.msra.mxu0 %v578
  %1667 = vmatpush.bf16.msra.mxu0 %v577
  %1668 = vmatpush.bf16.msra.mxu0 %v576
  %1669 = vmatmul.bf16.gmra.mxu0 %v1660
  %v1670 = vpop.f32.mrf.mxu0
  %v1671 = vadd.f32 %v542, %v1670
  %v1672 = vpop.f32.mrf.mxu0
  %1673 = vdwg.mxu0
  %v1674 = vmax.f32 %v1671, 0.0
  %v1675 = vmul.f32 %v495, %v1466
  %v1676 = vadd.f32 %v1675, 0.0
  %v1677 = vmul.f32 %v496, %v1262
  %v1678 = vadd.f32 %v1676, %v1677
  %v1679 = vmul.f32 %v498, %v860
  %v1680 = vadd.f32 %v1678, %v1679
  %v1681 = vmul.f32 %v499, %v606
  %v1682 = vadd.f32 %v1680, %v1681
  %v1683 = vmul.f32 %v501, %v867
  %v1684 = vadd.f32 %v1682, %v1683
  %v1685 = vmul.f32 %v502, %v612
  %v1686 = vadd.f32 %v1684, %v1685
  %v1687 = vadd.f32 %v1686, %v619
  %v1688 = vmax.f32 %v1687, 0.0
  %v1689 = vpack.c.bf16 %v1688, %v1688
  %1690 = vmatpush.bf16.msra.mxu0 %v666
  %1691 = vmatpush.bf16.msra.mxu0 %v665
  %1692 = vmatpush.bf16.msra.mxu0 %v664
  %1693 = vmatpush.bf16.msra.mxu0 %v663
  %1694 = vmatpush.bf16.msra.mxu0 %v662
  %1695 = vmatpush.bf16.msra.mxu0 %v661
  %1696 = vmatpush.bf16.msra.mxu0 %v660
  %1697 = vmatpush.bf16.msra.mxu0 %v659
  %1698 = vmatmul.bf16.gmra.mxu0 %v1689
  %v1699 = vpop.f32.mrf.mxu0
  %v1700 = vadd.f32 %v625, %v1699
  %v1701 = vpop.f32.mrf.mxu0
  %1702 = vdwg.mxu0
  %v1703 = vmax.f32 %v1700, 0.0
  %v1704 = vpack.c.bf16 %v1674, %v1674
  %v1705 = vld [vmem:[%s9 + $0x280] sm:$0xf]
  %v1706 = vld [vmem:[%s9 + $0x284] sm:$0xf]
  %v1707 = vld [vmem:[%s9 + $0x288] sm:$0xf]
  %v1708 = vld [vmem:[%s9 + $0x28c] sm:$0xf]
  %v1709 = vld [vmem:[%s9 + $0x290] sm:$0xf]
  %v1710 = vld [vmem:[%s9 + $0x294] sm:$0xf]
  %v1711 = vld [vmem:[%s9 + $0x298] sm:$0xf]
  %v1712 = vld [vmem:[%s9 + $0x29c] sm:$0xf]
  %v1713 = vld [vmem:[%s9 + $0x2a0] sm:$0xf]
  %v1714 = vld [vmem:[%s9 + $0x2a4] sm:$0xf]
  %v1715 = vld [vmem:[%s9 + $0x2a8] sm:$0xf]
  %v1716 = vld [vmem:[%s9 + $0x2ac] sm:$0xf]
  %v1717 = vld [vmem:[%s9 + $0x2b0] sm:$0xf]
  %v1718 = vld [vmem:[%s9 + $0x2b4] sm:$0xf]
  %v1719 = vld [vmem:[%s9 + $0x2b8] sm:$0xf]
  %v1720 = vld [vmem:[%s9 + $0x2bc] sm:$0xf]
  %v1737 = vunpack.c.l.b16 %v1705
  %v1738 = vunpack.c.l.b16 %v1706
  %v1739 = vunpack.c.l.b16 %v1707
  %v1740 = vunpack.c.l.b16 %v1708
  %v1741 = vunpack.c.l.b16 %v1709
  %v1742 = vunpack.c.l.b16 %v1710
  %v1743 = vunpack.c.l.b16 %v1711
  %v1744 = vunpack.c.l.b16 %v1712
  %v1745 = vunpack.c.l.b16 %v1713
  %v1746 = vunpack.c.l.b16 %v1714
  %v1747 = vunpack.c.l.b16 %v1715
  %v1748 = vunpack.c.l.b16 %v1716
  %v1749 = vunpack.c.l.b16 %v1717
  %v1750 = vunpack.c.l.b16 %v1718
  %v1751 = vunpack.c.l.b16 %v1719
  %v1752 = vunpack.c.l.b16 %v1720
  %v1753 = vpack.c.b16 %v1738, %v1737
  %v1754 = vpack.c.b16 %v1740, %v1739
  %v1755 = vpack.c.b16 %v1742, %v1741
  %v1756 = vpack.c.b16 %v1744, %v1743
  %v1757 = vpack.c.b16 %v1746, %v1745
  %v1758 = vpack.c.b16 %v1748, %v1747
  %v1759 = vpack.c.b16 %v1750, %v1749
  %v1760 = vpack.c.b16 %v1752, %v1751
  %1769 = vmatpush.bf16.msra.mxu0 %v1760
  %1770 = vmatpush.bf16.msra.mxu0 %v1759
  %1771 = vmatpush.bf16.msra.mxu0 %v1758
  %1772 = vmatpush.bf16.msra.mxu0 %v1757
  %1773 = vmatpush.bf16.msra.mxu0 %v1756
  %1774 = vmatpush.bf16.msra.mxu0 %v1755
  %1775 = vmatpush.bf16.msra.mxu0 %v1754
  %1776 = vmatpush.bf16.msra.mxu0 %v1753
  %1777 = vmatmul.bf16.gmra.mxu0 %v1704
  %v1778 = vpop.f32.mrf.mxu0
  %v1779 = vadd.f32 0.0, %v1778
  %v1780 = vpop.f32.mrf.mxu0
  %1781 = vdwg.mxu0
  %v1782 = vadd.f32 %v1659, %v1779
  %v1783 = vpack.c.bf16 %v1703, %v1703
  %v1784 = vld [vmem:[%s9 + $0x2c0] sm:$0xf]
  %v1785 = vld [vmem:[%s9 + $0x2c4] sm:$0xf]
  %v1786 = vld [vmem:[%s9 + $0x2c8] sm:$0xf]
  %v1787 = vld [vmem:[%s9 + $0x2cc] sm:$0xf]
  %v1788 = vld [vmem:[%s9 + $0x2d0] sm:$0xf]
  %v1789 = vld [vmem:[%s9 + $0x2d4] sm:$0xf]
  %v1790 = vld [vmem:[%s9 + $0x2d8] sm:$0xf]
  %v1791 = vld [vmem:[%s9 + $0x2dc] sm:$0xf]
  %v1792 = vld [vmem:[%s9 + $0x2e0] sm:$0xf]
  %v1793 = vld [vmem:[%s9 + $0x2e4] sm:$0xf]
  %v1794 = vld [vmem:[%s9 + $0x2e8] sm:$0xf]
  %v1795 = vld [vmem:[%s9 + $0x2ec] sm:$0xf]
  %v1796 = vld [vmem:[%s9 + $0x2f0] sm:$0xf]
  %v1797 = vld [vmem:[%s9 + $0x2f4] sm:$0xf]
  %v1798 = vld [vmem:[%s9 + $0x2f8] sm:$0xf]
  %v1799 = vld [vmem:[%s9 + $0x2fc] sm:$0xf]
  %v1816 = vunpack.c.l.b16 %v1784
  %v1817 = vunpack.c.l.b16 %v1785
  %v1818 = vunpack.c.l.b16 %v1786
  %v1819 = vunpack.c.l.b16 %v1787
  %v1820 = vunpack.c.l.b16 %v1788
  %v1821 = vunpack.c.l.b16 %v1789
  %v1822 = vunpack.c.l.b16 %v1790
  %v1823 = vunpack.c.l.b16 %v1791
  %v1824 = vunpack.c.l.b16 %v1792
  %v1825 = vunpack.c.l.b16 %v1793
  %v1826 = vunpack.c.l.b16 %v1794
  %v1827 = vunpack.c.l.b16 %v1795
  %v1828 = vunpack.c.l.b16 %v1796
  %v1829 = vunpack.c.l.b16 %v1797
  %v1830 = vunpack.c.l.b16 %v1798
  %v1831 = vunpack.c.l.b16 %v1799
  %v1832 = vpack.c.b16 %v1817, %v1816
  %v1833 = vpack.c.b16 %v1819, %v1818
  %v1834 = vpack.c.b16 %v1821, %v1820
  %v1835 = vpack.c.b16 %v1823, %v1822
  %v1836 = vpack.c.b16 %v1825, %v1824
  %v1837 = vpack.c.b16 %v1827, %v1826
  %v1838 = vpack.c.b16 %v1829, %v1828
  %v1839 = vpack.c.b16 %v1831, %v1830
  %1848 = vmatpush.bf16.msra.mxu0 %v1839
  %1849 = vmatpush.bf16.msra.mxu0 %v1838
  %1850 = vmatpush.bf16.msra.mxu0 %v1837
  %1851 = vmatpush.bf16.msra.mxu0 %v1836
  %1852 = vmatpush.bf16.msra.mxu0 %v1835
  %1853 = vmatpush.bf16.msra.mxu0 %v1834
  %1854 = vmatpush.bf16.msra.mxu0 %v1833
  %1855 = vmatpush.bf16.msra.mxu0 %v1832
  %1856 = vmatmul.bf16.gmra.mxu0 %v1783
  %v1857 = vpop.f32.mrf.mxu0
  %v1858 = vadd.f32 0.0, %v1857
  %v1859 = vpop.f32.mrf.mxu0
  %1860 = vdwg.mxu0
  %v1861 = vadd.f32 %v1782, %v1858
  %v1862 = vpack.c.bf16 %v500, %v500
  %1863 = vmatpush.bf16.msra.mxu0 %v583
  %1864 = vmatpush.bf16.msra.mxu0 %v582
  %1865 = vmatpush.bf16.msra.mxu0 %v581
  %1866 = vmatpush.bf16.msra.mxu0 %v580
  %1867 = vmatpush.bf16.msra.mxu0 %v579
  %1868 = vmatpush.bf16.msra.mxu0 %v578
  %1869 = vmatpush.bf16.msra.mxu0 %v577
  %1870 = vmatpush.bf16.msra.mxu0 %v576
  %1871 = vmatmul.bf16.gmra.mxu0 %v1862
  %v1872 = vpop.f32.mrf.mxu0
  %v1873 = vadd.f32 %v542, %v1872
  %v1874 = vpop.f32.mrf.mxu0
  %1875 = vdwg.mxu0
  %v1876 = vmax.f32 %v1873, 0.0
  %v1877 = vmul.f32 %v497, %v1262
  %v1878 = vadd.f32 %v1877, 0.0
  %v1879 = vmul.f32 %v498, %v1265
  %v1880 = vadd.f32 %v1878, %v1879
  %v1881 = vmul.f32 %v500, %v606
  %v1882 = vadd.f32 %v1880, %v1881
  %v1883 = vmul.f32 %v501, %v609
  %v1884 = vadd.f32 %v1882, %v1883
  %v1885 = vadd.f32 %v1884, %v619
  %v1886 = vmax.f32 %v1885, 0.0
  %v1887 = vpack.c.bf16 %v1886, %v1886
  %1888 = vmatpush.bf16.msra.mxu0 %v666
  %1889 = vmatpush.bf16.msra.mxu0 %v665
  %1890 = vmatpush.bf16.msra.mxu0 %v664
  %1891 = vmatpush.bf16.msra.mxu0 %v663
  %1892 = vmatpush.bf16.msra.mxu0 %v662
  %1893 = vmatpush.bf16.msra.mxu0 %v661
  %1894 = vmatpush.bf16.msra.mxu0 %v660
  %1895 = vmatpush.bf16.msra.mxu0 %v659
  %1896 = vmatmul.bf16.gmra.mxu0 %v1887
  %v1897 = vpop.f32.mrf.mxu0
  %v1898 = vadd.f32 %v625, %v1897
  %v1899 = vpop.f32.mrf.mxu0
  %1900 = vdwg.mxu0
  %v1901 = vmax.f32 %v1898, 0.0
  %v1902 = vpack.c.bf16 %v1876, %v1876
  %v1903 = vld [vmem:[%s9 + $0x300] sm:$0xf]
  %v1904 = vld [vmem:[%s9 + $0x304] sm:$0xf]
  %v1905 = vld [vmem:[%s9 + $0x308] sm:$0xf]
  %v1906 = vld [vmem:[%s9 + $0x30c] sm:$0xf]
  %v1907 = vld [vmem:[%s9 + $0x310] sm:$0xf]
  %v1908 = vld [vmem:[%s9 + $0x314] sm:$0xf]
  %v1909 = vld [vmem:[%s9 + $0x318] sm:$0xf]
  %v1910 = vld [vmem:[%s9 + $0x31c] sm:$0xf]
  %v1911 = vld [vmem:[%s9 + $0x320] sm:$0xf]
  %v1912 = vld [vmem:[%s9 + $0x324] sm:$0xf]
  %v1913 = vld [vmem:[%s9 + $0x328] sm:$0xf]
  %v1914 = vld [vmem:[%s9 + $0x32c] sm:$0xf]
  %v1915 = vld [vmem:[%s9 + $0x330] sm:$0xf]
  %v1916 = vld [vmem:[%s9 + $0x334] sm:$0xf]
  %v1917 = vld [vmem:[%s9 + $0x338] sm:$0xf]
  %v1918 = vld [vmem:[%s9 + $0x33c] sm:$0xf]
  %v1935 = vunpack.c.l.b16 %v1903
  %v1936 = vunpack.c.l.b16 %v1904
  %v1937 = vunpack.c.l.b16 %v1905
  %v1938 = vunpack.c.l.b16 %v1906
  %v1939 = vunpack.c.l.b16 %v1907
  %v1940 = vunpack.c.l.b16 %v1908
  %v1941 = vunpack.c.l.b16 %v1909
  %v1942 = vunpack.c.l.b16 %v1910
  %v1943 = vunpack.c.l.b16 %v1911
  %v1944 = vunpack.c.l.b16 %v1912
  %v1945 = vunpack.c.l.b16 %v1913
  %v1946 = vunpack.c.l.b16 %v1914
  %v1947 = vunpack.c.l.b16 %v1915
  %v1948 = vunpack.c.l.b16 %v1916
  %v1949 = vunpack.c.l.b16 %v1917
  %v1950 = vunpack.c.l.b16 %v1918
  %v1951 = vpack.c.b16 %v1936, %v1935
  %v1952 = vpack.c.b16 %v1938, %v1937
  %v1953 = vpack.c.b16 %v1940, %v1939
  %v1954 = vpack.c.b16 %v1942, %v1941
  %v1955 = vpack.c.b16 %v1944, %v1943
  %v1956 = vpack.c.b16 %v1946, %v1945
  %v1957 = vpack.c.b16 %v1948, %v1947
  %v1958 = vpack.c.b16 %v1950, %v1949
  %1967 = vmatpush.bf16.msra.mxu0 %v1958
  %1968 = vmatpush.bf16.msra.mxu0 %v1957
  %1969 = vmatpush.bf16.msra.mxu0 %v1956
  %1970 = vmatpush.bf16.msra.mxu0 %v1955
  %1971 = vmatpush.bf16.msra.mxu0 %v1954
  %1972 = vmatpush.bf16.msra.mxu0 %v1953
  %1973 = vmatpush.bf16.msra.mxu0 %v1952
  %1974 = vmatpush.bf16.msra.mxu0 %v1951
  %1975 = vmatmul.bf16.gmra.mxu0 %v1902
  %v1976 = vpop.f32.mrf.mxu0
  %v1977 = vadd.f32 0.0, %v1976
  %v1978 = vpop.f32.mrf.mxu0
  %1979 = vdwg.mxu0
  %v1980 = vadd.f32 %v1861, %v1977
  %v1981 = vpack.c.bf16 %v1901, %v1901
  %v1982 = vld [vmem:[%s9 + $0x340] sm:$0xf]
  %v1983 = vld [vmem:[%s9 + $0x344] sm:$0xf]
  %v1984 = vld [vmem:[%s9 + $0x348] sm:$0xf]
  %v1985 = vld [vmem:[%s9 + $0x34c] sm:$0xf]
  %v1986 = vld [vmem:[%s9 + $0x350] sm:$0xf]
  %v1987 = vld [vmem:[%s9 + $0x354] sm:$0xf]
  %v1988 = vld [vmem:[%s9 + $0x358] sm:$0xf]
  %v1989 = vld [vmem:[%s9 + $0x35c] sm:$0xf]
  %v1990 = vld [vmem:[%s9 + $0x360] sm:$0xf]
  %v1991 = vld [vmem:[%s9 + $0x364] sm:$0xf]
  %v1992 = vld [vmem:[%s9 + $0x368] sm:$0xf]
  %v1993 = vld [vmem:[%s9 + $0x36c] sm:$0xf]
  %v1994 = vld [vmem:[%s9 + $0x370] sm:$0xf]
  %v1995 = vld [vmem:[%s9 + $0x374] sm:$0xf]
  %v1996 = vld [vmem:[%s9 + $0x378] sm:$0xf]
  %v1997 = vld [vmem:[%s9 + $0x37c] sm:$0xf]
  %v2014 = vunpack.c.l.b16 %v1982
  %v2015 = vunpack.c.l.b16 %v1983
  %v2016 = vunpack.c.l.b16 %v1984
  %v2017 = vunpack.c.l.b16 %v1985
  %v2018 = vunpack.c.l.b16 %v1986
  %v2019 = vunpack.c.l.b16 %v1987
  %v2020 = vunpack.c.l.b16 %v1988
  %v2021 = vunpack.c.l.b16 %v1989
  %v2022 = vunpack.c.l.b16 %v1990
  %v2023 = vunpack.c.l.b16 %v1991
  %v2024 = vunpack.c.l.b16 %v1992
  %v2025 = vunpack.c.l.b16 %v1993
  %v2026 = vunpack.c.l.b16 %v1994
  %v2027 = vunpack.c.l.b16 %v1995
  %v2028 = vunpack.c.l.b16 %v1996
  %v2029 = vunpack.c.l.b16 %v1997
  %v2030 = vpack.c.b16 %v2015, %v2014
  %v2031 = vpack.c.b16 %v2017, %v2016
  %v2032 = vpack.c.b16 %v2019, %v2018
  %v2033 = vpack.c.b16 %v2021, %v2020
  %v2034 = vpack.c.b16 %v2023, %v2022
  %v2035 = vpack.c.b16 %v2025, %v2024
  %v2036 = vpack.c.b16 %v2027, %v2026
  %v2037 = vpack.c.b16 %v2029, %v2028
  %2046 = vmatpush.bf16.msra.mxu0 %v2037
  %2047 = vmatpush.bf16.msra.mxu0 %v2036
  %2048 = vmatpush.bf16.msra.mxu0 %v2035
  %2049 = vmatpush.bf16.msra.mxu0 %v2034
  %2050 = vmatpush.bf16.msra.mxu0 %v2033
  %2051 = vmatpush.bf16.msra.mxu0 %v2032
  %2052 = vmatpush.bf16.msra.mxu0 %v2031
  %2053 = vmatpush.bf16.msra.mxu0 %v2030
  %2054 = vmatmul.bf16.gmra.mxu0 %v1981
  %v2055 = vpop.f32.mrf.mxu0
  %v2056 = vadd.f32 0.0, %v2055
  %v2057 = vpop.f32.mrf.mxu0
  %2058 = vdwg.mxu0
  %v2059 = vadd.f32 %v1980, %v2056
  %v2060 = vpack.c.bf16 %v501, %v501
  %2061 = vmatpush.bf16.msra.mxu0 %v583
  %2062 = vmatpush.bf16.msra.mxu0 %v582
  %2063 = vmatpush.bf16.msra.mxu0 %v581
  %2064 = vmatpush.bf16.msra.mxu0 %v580
  %2065 = vmatpush.bf16.msra.mxu0 %v579
  %2066 = vmatpush.bf16.msra.mxu0 %v578
  %2067 = vmatpush.bf16.msra.mxu0 %v577
  %2068 = vmatpush.bf16.msra.mxu0 %v576
  %2069 = vmatmul.bf16.gmra.mxu0 %v2060
  %v2070 = vpop.f32.mrf.mxu0
  %v2071 = vadd.f32 %v542, %v2070
  %v2072 = vpop.f32.mrf.mxu0
  %2073 = vdwg.mxu0
  %v2074 = vmax.f32 %v2071, 0.0
  %v2075 = vmul.f32 %v497, %v1466
  %v2076 = vadd.f32 %v2075, 0.0
  %v2077 = vmul.f32 %v498, %v1262
  %v2078 = vadd.f32 %v2076, %v2077
  %v2079 = vmul.f32 %v499, %v1265
  %v2080 = vadd.f32 %v2078, %v2079
  %v2081 = vmul.f32 %v500, %v860
  %v2082 = vadd.f32 %v2080, %v2081
  %v2083 = vmul.f32 %v501, %v606
  %v2084 = vadd.f32 %v2082, %v2083
  %v2085 = vmul.f32 %v502, %v609
  %v2086 = vadd.f32 %v2084, %v2085
  %v2087 = vadd.f32 %v2086, %v619
  %v2088 = vmax.f32 %v2087, 0.0
  %v2089 = vpack.c.bf16 %v2088, %v2088
  %2090 = vmatpush.bf16.msra.mxu0 %v666
  %2091 = vmatpush.bf16.msra.mxu0 %v665
  %2092 = vmatpush.bf16.msra.mxu0 %v664
  %2093 = vmatpush.bf16.msra.mxu0 %v663
  %2094 = vmatpush.bf16.msra.mxu0 %v662
  %2095 = vmatpush.bf16.msra.mxu0 %v661
  %2096 = vmatpush.bf16.msra.mxu0 %v660
  %2097 = vmatpush.bf16.msra.mxu0 %v659
  %2098 = vmatmul.bf16.gmra.mxu0 %v2089
  %v2099 = vpop.f32.mrf.mxu0
  %v2100 = vadd.f32 %v625, %v2099
  %v2101 = vpop.f32.mrf.mxu0
  %2102 = vdwg.mxu0
  %v2103 = vmax.f32 %v2100, 0.0
  %v2104 = vpack.c.bf16 %v2074, %v2074
  %v2105 = vld [vmem:[%s9 + $0x380] sm:$0xf]
  %v2106 = vld [vmem:[%s9 + $0x384] sm:$0xf]
  %v2107 = vld [vmem:[%s9 + $0x388] sm:$0xf]
  %v2108 = vld [vmem:[%s9 + $0x38c] sm:$0xf]
  %v2109 = vld [vmem:[%s9 + $0x390] sm:$0xf]
  %v2110 = vld [vmem:[%s9 + $0x394] sm:$0xf]
  %v2111 = vld [vmem:[%s9 + $0x398] sm:$0xf]
  %v2112 = vld [vmem:[%s9 + $0x39c] sm:$0xf]
  %v2113 = vld [vmem:[%s9 + $0x3a0] sm:$0xf]
  %v2114 = vld [vmem:[%s9 + $0x3a4] sm:$0xf]
  %v2115 = vld [vmem:[%s9 + $0x3a8] sm:$0xf]
  %v2116 = vld [vmem:[%s9 + $0x3ac] sm:$0xf]
  %v2117 = vld [vmem:[%s9 + $0x3b0] sm:$0xf]
  %v2118 = vld [vmem:[%s9 + $0x3b4] sm:$0xf]
  %v2119 = vld [vmem:[%s9 + $0x3b8] sm:$0xf]
  %v2120 = vld [vmem:[%s9 + $0x3bc] sm:$0xf]
  %v2137 = vunpack.c.l.b16 %v2105
  %v2138 = vunpack.c.l.b16 %v2106
  %v2139 = vunpack.c.l.b16 %v2107
  %v2140 = vunpack.c.l.b16 %v2108
  %v2141 = vunpack.c.l.b16 %v2109
  %v2142 = vunpack.c.l.b16 %v2110
  %v2143 = vunpack.c.l.b16 %v2111
  %v2144 = vunpack.c.l.b16 %v2112
  %v2145 = vunpack.c.l.b16 %v2113
  %v2146 = vunpack.c.l.b16 %v2114
  %v2147 = vunpack.c.l.b16 %v2115
  %v2148 = vunpack.c.l.b16 %v2116
  %v2149 = vunpack.c.l.b16 %v2117
  %v2150 = vunpack.c.l.b16 %v2118
  %v2151 = vunpack.c.l.b16 %v2119
  %v2152 = vunpack.c.l.b16 %v2120
  %v2153 = vpack.c.b16 %v2138, %v2137
  %v2154 = vpack.c.b16 %v2140, %v2139
  %v2155 = vpack.c.b16 %v2142, %v2141
  %v2156 = vpack.c.b16 %v2144, %v2143
  %v2157 = vpack.c.b16 %v2146, %v2145
  %v2158 = vpack.c.b16 %v2148, %v2147
  %v2159 = vpack.c.b16 %v2150, %v2149
  %v2160 = vpack.c.b16 %v2152, %v2151
  %2169 = vmatpush.bf16.msra.mxu0 %v2160
  %2170 = vmatpush.bf16.msra.mxu0 %v2159
  %2171 = vmatpush.bf16.msra.mxu0 %v2158
  %2172 = vmatpush.bf16.msra.mxu0 %v2157
  %2173 = vmatpush.bf16.msra.mxu0 %v2156
  %2174 = vmatpush.bf16.msra.mxu0 %v2155
  %2175 = vmatpush.bf16.msra.mxu0 %v2154
  %2176 = vmatpush.bf16.msra.mxu0 %v2153
  %2177 = vmatmul.bf16.gmra.mxu0 %v2104
  %v2178 = vpop.f32.mrf.mxu0
  %v2179 = vadd.f32 0.0, %v2178
  %v2180 = vpop.f32.mrf.mxu0
  %2181 = vdwg.mxu0
  %v2182 = vadd.f32 %v2059, %v2179
  %v2183 = vpack.c.bf16 %v2103, %v2103
  %v2184 = vld [vmem:[%s9 + $0x3c0] sm:$0xf]
  %v2185 = vld [vmem:[%s9 + $0x3c4] sm:$0xf]
  %v2186 = vld [vmem:[%s9 + $0x3c8] sm:$0xf]
  %v2187 = vld [vmem:[%s9 + $0x3cc] sm:$0xf]
  %v2188 = vld [vmem:[%s9 + $0x3d0] sm:$0xf]
  %v2189 = vld [vmem:[%s9 + $0x3d4] sm:$0xf]
  %v2190 = vld [vmem:[%s9 + $0x3d8] sm:$0xf]
  %v2191 = vld [vmem:[%s9 + $0x3dc] sm:$0xf]
  %v2192 = vld [vmem:[%s9 + $0x3e0] sm:$0xf]
  %v2193 = vld [vmem:[%s9 + $0x3e4] sm:$0xf]
  %v2194 = vld [vmem:[%s9 + $0x3e8] sm:$0xf]
  %v2195 = vld [vmem:[%s9 + $0x3ec] sm:$0xf]
  %v2196 = vld [vmem:[%s9 + $0x3f0] sm:$0xf]
  %v2197 = vld [vmem:[%s9 + $0x3f4] sm:$0xf]
  %v2198 = vld [vmem:[%s9 + $0x3f8] sm:$0xf]
  %v2199 = vld [vmem:[%s9 + $0x3fc] sm:$0xf]
  %v2216 = vunpack.c.l.b16 %v2184
  %v2217 = vunpack.c.l.b16 %v2185
  %v2218 = vunpack.c.l.b16 %v2186
  %v2219 = vunpack.c.l.b16 %v2187
  %v2220 = vunpack.c.l.b16 %v2188
  %v2221 = vunpack.c.l.b16 %v2189
  %v2222 = vunpack.c.l.b16 %v2190
  %v2223 = vunpack.c.l.b16 %v2191
  %v2224 = vunpack.c.l.b16 %v2192
  %v2225 = vunpack.c.l.b16 %v2193
  %v2226 = vunpack.c.l.b16 %v2194
  %v2227 = vunpack.c.l.b16 %v2195
  %v2228 = vunpack.c.l.b16 %v2196
  %v2229 = vunpack.c.l.b16 %v2197
  %v2230 = vunpack.c.l.b16 %v2198
  %v2231 = vunpack.c.l.b16 %v2199
  %v2232 = vpack.c.b16 %v2217, %v2216
  %v2233 = vpack.c.b16 %v2219, %v2218
  %v2234 = vpack.c.b16 %v2221, %v2220
  %v2235 = vpack.c.b16 %v2223, %v2222
  %v2236 = vpack.c.b16 %v2225, %v2224
  %v2237 = vpack.c.b16 %v2227, %v2226
  %v2238 = vpack.c.b16 %v2229, %v2228
  %v2239 = vpack.c.b16 %v2231, %v2230
  %2248 = vmatpush.bf16.msra.mxu0 %v2239
  %2249 = vmatpush.bf16.msra.mxu0 %v2238
  %2250 = vmatpush.bf16.msra.mxu0 %v2237
  %2251 = vmatpush.bf16.msra.mxu0 %v2236
  %2252 = vmatpush.bf16.msra.mxu0 %v2235
  %2253 = vmatpush.bf16.msra.mxu0 %v2234
  %2254 = vmatpush.bf16.msra.mxu0 %v2233
  %2255 = vmatpush.bf16.msra.mxu0 %v2232
  %2256 = vmatmul.bf16.gmra.mxu0 %v2183
  %v2257 = vpop.f32.mrf.mxu0
  %v2258 = vadd.f32 0.0, %v2257
  %v2259 = vpop.f32.mrf.mxu0
  %2260 = vdwg.mxu0
  %v2261 = vadd.f32 %v2182, %v2258
  %v2262 = vpack.c.bf16 %v502, %v502
  %2263 = vmatpush.bf16.msra.mxu0 %v583
  %2264 = vmatpush.bf16.msra.mxu0 %v582
  %2265 = vmatpush.bf16.msra.mxu0 %v581
  %2266 = vmatpush.bf16.msra.mxu0 %v580
  %2267 = vmatpush.bf16.msra.mxu0 %v579
  %2268 = vmatpush.bf16.msra.mxu0 %v578
  %2269 = vmatpush.bf16.msra.mxu0 %v577
  %2270 = vmatpush.bf16.msra.mxu0 %v576
  %2271 = vmatmul.bf16.gmra.mxu0 %v2262
  %v2272 = vpop.f32.mrf.mxu0
  %v2273 = vadd.f32 %v542, %v2272
  %v2274 = vpop.f32.mrf.mxu0
  %2275 = vdwg.mxu0
  %v2276 = vmax.f32 %v2273, 0.0
  %v2277 = vmul.f32 %v498, %v1466
  %v2278 = vadd.f32 %v2277, 0.0
  %v2279 = vmul.f32 %v499, %v1262
  %v2280 = vadd.f32 %v2278, %v2279
  %v2281 = vmul.f32 %v501, %v860
  %v2282 = vadd.f32 %v2280, %v2281
  %v2283 = vmul.f32 %v502, %v606
  %v2284 = vadd.f32 %v2282, %v2283
  %v2285 = vadd.f32 %v2284, %v619
  %v2286 = vmax.f32 %v2285, 0.0
  %v2287 = vpack.c.bf16 %v2286, %v2286
  %2288 = vmatpush.bf16.msra.mxu0 %v666
  %2289 = vmatpush.bf16.msra.mxu0 %v665
  %2290 = vmatpush.bf16.msra.mxu0 %v664
  %2291 = vmatpush.bf16.msra.mxu0 %v663
  %2292 = vmatpush.bf16.msra.mxu0 %v662
  %2293 = vmatpush.bf16.msra.mxu0 %v661
  %2294 = vmatpush.bf16.msra.mxu0 %v660
  %2295 = vmatpush.bf16.msra.mxu0 %v659
  %2296 = vmatmul.bf16.gmra.mxu0 %v2287
  %v2297 = vpop.f32.mrf.mxu0
  %v2298 = vadd.f32 %v625, %v2297
  %v2299 = vpop.f32.mrf.mxu0
  %2300 = vdwg.mxu0
  %v2301 = vmax.f32 %v2298, 0.0
  %v2302 = vpack.c.bf16 %v2276, %v2276
  %v2303 = vld [vmem:[%s9 + $0x400] sm:$0xf]
  %v2304 = vld [vmem:[%s9 + $0x404] sm:$0xf]
  %v2305 = vld [vmem:[%s9 + $0x408] sm:$0xf]
  %v2306 = vld [vmem:[%s9 + $0x40c] sm:$0xf]
  %v2307 = vld [vmem:[%s9 + $0x410] sm:$0xf]
  %v2308 = vld [vmem:[%s9 + $0x414] sm:$0xf]
  %v2309 = vld [vmem:[%s9 + $0x418] sm:$0xf]
  %v2310 = vld [vmem:[%s9 + $0x41c] sm:$0xf]
  %v2311 = vld [vmem:[%s9 + $0x420] sm:$0xf]
  %v2312 = vld [vmem:[%s9 + $0x424] sm:$0xf]
  %v2313 = vld [vmem:[%s9 + $0x428] sm:$0xf]
  %v2314 = vld [vmem:[%s9 + $0x42c] sm:$0xf]
  %v2315 = vld [vmem:[%s9 + $0x430] sm:$0xf]
  %v2316 = vld [vmem:[%s9 + $0x434] sm:$0xf]
  %v2317 = vld [vmem:[%s9 + $0x438] sm:$0xf]
  %v2318 = vld [vmem:[%s9 + $0x43c] sm:$0xf]
  %v2335 = vunpack.c.l.b16 %v2303
  %v2336 = vunpack.c.l.b16 %v2304
  %v2337 = vunpack.c.l.b16 %v2305
  %v2338 = vunpack.c.l.b16 %v2306
  %v2339 = vunpack.c.l.b16 %v2307
  %v2340 = vunpack.c.l.b16 %v2308
  %v2341 = vunpack.c.l.b16 %v2309
  %v2342 = vunpack.c.l.b16 %v2310
  %v2343 = vunpack.c.l.b16 %v2311
  %v2344 = vunpack.c.l.b16 %v2312
  %v2345 = vunpack.c.l.b16 %v2313
  %v2346 = vunpack.c.l.b16 %v2314
  %v2347 = vunpack.c.l.b16 %v2315
  %v2348 = vunpack.c.l.b16 %v2316
  %v2349 = vunpack.c.l.b16 %v2317
  %v2350 = vunpack.c.l.b16 %v2318
  %v2351 = vpack.c.b16 %v2336, %v2335
  %v2352 = vpack.c.b16 %v2338, %v2337
  %v2353 = vpack.c.b16 %v2340, %v2339
  %v2354 = vpack.c.b16 %v2342, %v2341
  %v2355 = vpack.c.b16 %v2344, %v2343
  %v2356 = vpack.c.b16 %v2346, %v2345
  %v2357 = vpack.c.b16 %v2348, %v2347
  %v2358 = vpack.c.b16 %v2350, %v2349
  %2367 = vmatpush.bf16.msra.mxu0 %v2358
  %2368 = vmatpush.bf16.msra.mxu0 %v2357
  %2369 = vmatpush.bf16.msra.mxu0 %v2356
  %2370 = vmatpush.bf16.msra.mxu0 %v2355
  %2371 = vmatpush.bf16.msra.mxu0 %v2354
  %2372 = vmatpush.bf16.msra.mxu0 %v2353
  %2373 = vmatpush.bf16.msra.mxu0 %v2352
  %2374 = vmatpush.bf16.msra.mxu0 %v2351
  %2375 = vmatmul.bf16.gmra.mxu0 %v2302
  %v2376 = vpop.f32.mrf.mxu0
  %v2377 = vadd.f32 0.0, %v2376
  %v2378 = vpop.f32.mrf.mxu0
  %2379 = vdwg.mxu0
  %v2380 = vadd.f32 %v2261, %v2377
  %v2381 = vpack.c.bf16 %v2301, %v2301
  %v2382 = vld [vmem:[%s9 + $0x440] sm:$0xf]
  %v2383 = vld [vmem:[%s9 + $0x444] sm:$0xf]
  %v2384 = vld [vmem:[%s9 + $0x448] sm:$0xf]
  %v2385 = vld [vmem:[%s9 + $0x44c] sm:$0xf]
  %v2386 = vld [vmem:[%s9 + $0x450] sm:$0xf]
  %v2387 = vld [vmem:[%s9 + $0x454] sm:$0xf]
  %v2388 = vld [vmem:[%s9 + $0x458] sm:$0xf]
  %v2389 = vld [vmem:[%s9 + $0x45c] sm:$0xf]
  %v2390 = vld [vmem:[%s9 + $0x460] sm:$0xf]
  %v2391 = vld [vmem:[%s9 + $0x464] sm:$0xf]
  %v2392 = vld [vmem:[%s9 + $0x468] sm:$0xf]
  %v2393 = vld [vmem:[%s9 + $0x46c] sm:$0xf]
  %v2394 = vld [vmem:[%s9 + $0x470] sm:$0xf]
  %v2395 = vld [vmem:[%s9 + $0x474] sm:$0xf]
  %v2396 = vld [vmem:[%s9 + $0x478] sm:$0xf]
  %v2397 = vld [vmem:[%s9 + $0x47c] sm:$0xf]
  %v2414 = vunpack.c.l.b16 %v2382
  %v2415 = vunpack.c.l.b16 %v2383
  %v2416 = vunpack.c.l.b16 %v2384
  %v2417 = vunpack.c.l.b16 %v2385
  %v2418 = vunpack.c.l.b16 %v2386
  %v2419 = vunpack.c.l.b16 %v2387
  %v2420 = vunpack.c.l.b16 %v2388
  %v2421 = vunpack.c.l.b16 %v2389
  %v2422 = vunpack.c.l.b16 %v2390
  %v2423 = vunpack.c.l.b16 %v2391
  %v2424 = vunpack.c.l.b16 %v2392
  %v2425 = vunpack.c.l.b16 %v2393
  %v2426 = vunpack.c.l.b16 %v2394
  %v2427 = vunpack.c.l.b16 %v2395
  %v2428 = vunpack.c.l.b16 %v2396
  %v2429 = vunpack.c.l.b16 %v2397
  %v2430 = vpack.c.b16 %v2415, %v2414
  %v2431 = vpack.c.b16 %v2417, %v2416
  %v2432 = vpack.c.b16 %v2419, %v2418
  %v2433 = vpack.c.b16 %v2421, %v2420
  %v2434 = vpack.c.b16 %v2423, %v2422
  %v2435 = vpack.c.b16 %v2425, %v2424
  %v2436 = vpack.c.b16 %v2427, %v2426
  %v2437 = vpack.c.b16 %v2429, %v2428
  %2446 = vmatpush.bf16.msra.mxu0 %v2437
  %2447 = vmatpush.bf16.msra.mxu0 %v2436
  %2448 = vmatpush.bf16.msra.mxu0 %v2435
  %2449 = vmatpush.bf16.msra.mxu0 %v2434
  %2450 = vmatpush.bf16.msra.mxu0 %v2433
  %2451 = vmatpush.bf16.msra.mxu0 %v2432
  %2452 = vmatpush.bf16.msra.mxu0 %v2431
  %2453 = vmatpush.bf16.msra.mxu0 %v2430
  %2454 = vmatmul.bf16.gmra.mxu0 %v2381
  %v2455 = vpop.f32.mrf.mxu0
  %v2456 = vadd.f32 0.0, %v2455
  %v2457 = vpop.f32.mrf.mxu0
  %2458 = vdwg.mxu0
  %v2459 = vadd.f32 %v2380, %v2456
  %v2460 = vld [vmem:[%s10] sm:$0x1]
  %v2462 = vperm.slane %v2460, 0
  %v2464 = vadd.f32 %v2459, %v2462
  %2465 = vst [vmem:[%s14] sm:$0xff] %v2464
  %v2466 = vmax.f32 %v2464, 0.0
  %v2467 = vpack.c.bf16 %v2466, %v2466
  %v2468 = vld [vmem:[%s11] sm:$0xf]
  %v2469 = vld [vmem:[%s11 + $0x4] sm:$0xf]
  %v2470 = vld [vmem:[%s11 + $0x8] sm:$0xf]
  %v2471 = vld [vmem:[%s11 + $0xc] sm:$0xf]
  %v2472 = vld [vmem:[%s11 + $0x10] sm:$0xf]
  %v2473 = vld [vmem:[%s11 + $0x14] sm:$0xf]
  %v2474 = vld [vmem:[%s11 + $0x18] sm:$0xf]
  %v2475 = vld [vmem:[%s11 + $0x1c] sm:$0xf]
  %v2476 = vld [vmem:[%s11 + $0x20] sm:$0xf]
  %v2477 = vld [vmem:[%s11 + $0x24] sm:$0xf]
  %v2478 = vld [vmem:[%s11 + $0x28] sm:$0xf]
  %v2479 = vld [vmem:[%s11 + $0x2c] sm:$0xf]
  %v2480 = vld [vmem:[%s11 + $0x30] sm:$0xf]
  %v2481 = vld [vmem:[%s11 + $0x34] sm:$0xf]
  %v2482 = vld [vmem:[%s11 + $0x38] sm:$0xf]
  %v2483 = vld [vmem:[%s11 + $0x3c] sm:$0xf]
  %v2484 = vld [vmem:[%s12] sm:$0x1]
  %v2486 = vperm.slane %v2484, 0
  %v2504 = vunpack.c.l.b16 %v2468
  %v2505 = vunpack.c.l.b16 %v2469
  %v2506 = vunpack.c.l.b16 %v2470
  %v2507 = vunpack.c.l.b16 %v2471
  %v2508 = vunpack.c.l.b16 %v2472
  %v2509 = vunpack.c.l.b16 %v2473
  %v2510 = vunpack.c.l.b16 %v2474
  %v2511 = vunpack.c.l.b16 %v2475
  %v2512 = vunpack.c.l.b16 %v2476
  %v2513 = vunpack.c.l.b16 %v2477
  %v2514 = vunpack.c.l.b16 %v2478
  %v2515 = vunpack.c.l.b16 %v2479
  %v2516 = vunpack.c.l.b16 %v2480
  %v2517 = vunpack.c.l.b16 %v2481
  %v2518 = vunpack.c.l.b16 %v2482
  %v2519 = vunpack.c.l.b16 %v2483
  %v2520 = vpack.c.b16 %v2505, %v2504
  %v2521 = vpack.c.b16 %v2507, %v2506
  %v2522 = vpack.c.b16 %v2509, %v2508
  %v2523 = vpack.c.b16 %v2511, %v2510
  %v2524 = vpack.c.b16 %v2513, %v2512
  %v2525 = vpack.c.b16 %v2515, %v2514
  %v2526 = vpack.c.b16 %v2517, %v2516
  %v2527 = vpack.c.b16 %v2519, %v2518
  %2536 = vmatpush.bf16.msra.mxu0 %v2527
  %2537 = vmatpush.bf16.msra.mxu0 %v2526
  %2538 = vmatpush.bf16.msra.mxu0 %v2525
  %2539 = vmatpush.bf16.msra.mxu0 %v2524
  %2540 = vmatpush.bf16.msra.mxu0 %v2523
  %2541 = vmatpush.bf16.msra.mxu0 %v2522
  %2542 = vmatpush.bf16.msra.mxu0 %v2521
  %2543 = vmatpush.bf16.msra.mxu0 %v2520
  %2544 = vmatmul.bf16.gmra.mxu0 %v2467
  %v2545 = vpop.f32.mrf.mxu0
  %v2546 = vadd.f32 %v2486, %v2545
  %v2547 = vpop.f32.mrf.mxu0
  %2548 = vdwg.mxu0
  %2549 = vst [vmem:[%s13] sm:$0xff] %v2546
  // Predicated region
  $region54: #{vgg_forward.1} parent=0 // pred_check
    _
  $region55: #{vgg_forward.1} parent=0 // pred_check_branch
    %2551 = sbr.rel (0) target = $region57
  $region56: #{vgg_forward.1} parent=0 // pred_region
    _
  $region57: #{vgg_forward.1} parent=0 // pred_fallthru
    _
  // Predicated region
  $region58: #{vgg_forward.1} parent=0 // pred_check
    _
  $region59: #{vgg_forward.1} parent=0 // pred_check_branch
    %2553 = sbr.rel (0) target = $region61
  $region60: #{vgg_forward.1} parent=0 // pred_region
    _
  $region61: #{vgg_forward.1} parent=0 // pred_fallthru
    _
  // Predicated region
  $region62: #{vgg_forward.1} parent=0 // pred_check
    _
  $region63: #{vgg_forward.1} parent=0 // pred_check_branch
    %2555 = sbr.rel (0) target = $region65
  $region64: #{vgg_forward.1} parent=0 // pred_region
    _
  $region65: #{vgg_forward.1} parent=0 // pred_fallthru
    _
  // Predicated region
  $region66: #{vgg_forward.1} parent=0 // pred_check
    _
  $region67: #{vgg_forward.1} parent=0 // pred_check_branch
    %2557 = sbr.rel (0) target = $region69
  $region68: #{vgg_forward.1} parent=0 // pred_region
    _
  $region69: #{vgg_forward.1} parent=0 // pred_fallthru
    _

</llo_original>
